<compile_context>
chip_gen: v7x
topology: tpu7x:2x2x1
jax: 0.10.0
libtpu: 0.0.40
codegen_flags: <defaults>
</compile_context>

<pallas_src>
import functools
import math

import jax
import jax.numpy as jnp
from jax.experimental import pallas as pl
from jax.experimental.pallas import tpu as pltpu


# MXU inputs + inter-kernel activations in bf16; accumulators / stats in f32.
MXU_INPUT_DTYPE = jnp.bfloat16
ACT_DTYPE = jnp.bfloat16
PARAM_DTYPE = jnp.bfloat16

_SUBLANE_TILES = (512, 256, 128, 64, 32, 16, 8)   # second-to-last dim candidates
_LANE_TILES = (512, 256, 128)                      # last dim candidates


def _pick_tile(dim, candidates):
    """Largest candidate evenly dividing `dim`; otherwise the full dim (always legal)."""
    for c in candidates:
        if dim % c == 0:
            return c
    return dim


@functools.lru_cache(maxsize=None)
def _vmem_limit_bytes():
    """Generation-aware VMEM budget: ~75% of physical (≈96 MiB v5e/v6e, ≈48 MiB v7x)."""
    try:
        cap = int(getattr(pltpu.get_tpu_info(), "vmem_capacity_bytes", 0)) or (64 << 20)
    except Exception:
        cap = 64 << 20
    return min((cap * 3) // 4, 100 << 20)


def _cparams(*sem):
    return pltpu.CompilerParams(dimension_semantics=sem,
                                vmem_limit_bytes=_vmem_limit_bytes())


# ----------------------------- Pallas kernels -------------------------------

def _linear_kernel(x_ref, w_ref, b_ref, o_ref, acc_ref, *, activation):
    """Tiled matmul with K-axis f32 accumulation; bias (+ optional ReLU) fused in epilogue."""
    @pl.when(pl.program_id(2) == 0)
    def _():
        acc_ref[...] = jnp.zeros_like(acc_ref)

    acc_ref[...] += jnp.dot(x_ref[...].astype(MXU_INPUT_DTYPE),
                            w_ref[...].astype(MXU_INPUT_DTYPE),
                            preferred_element_type=jnp.float32)

    @pl.when(pl.program_id(2) == pl.num_programs(2) - 1)
    def _():
        y = acc_ref[...] + b_ref[...]
        if activation == "relu":
            y = jnp.maximum(y, 0.0)
        o_ref[...] = y.astype(o_ref.dtype)


def linear(x2d, w, b, activation="none", out_dtype=None):
    """x2d: (M, K) @ w: (K, N) + b: (1, N) -> (M, N), optional fused ReLU."""
    out_dtype = out_dtype or ACT_DTYPE
    M, K = x2d.shape
    N = w.shape[1]
    tm = _pick_tile(M, _SUBLANE_TILES)
    tk = _pick_tile(K, _LANE_TILES)
    tn = _pick_tile(N, _LANE_TILES)
    kern = functools.partial(_linear_kernel, activation=activation)
    return pl.pallas_call(
        kern,
        out_shape=jax.ShapeDtypeStruct((M, N), out_dtype),
        grid=(M // tm, N // tn, K // tk),
        in_specs=[
            pl.BlockSpec((tm, tk), lambda i, j, k: (i, k)),
            pl.BlockSpec((tk, tn), lambda i, j, k: (k, j)),
            pl.BlockSpec((1, tn), lambda i, j, k: (0, j)),
        ],
        out_specs=pl.BlockSpec((tm, tn), lambda i, j, k: (i, j)),
        scratch_shapes=[pltpu.VMEM((tm, tn), jnp.float32)],
        compiler_params=_cparams("parallel", "parallel", "arbitrary"),
    )(x2d, w, b)


def _linear_res_ln_kernel(x_ref, w_ref, b_ref, res_ref, g_ref, be_ref, o_ref, acc_ref, *, eps):
    """Tiled matmul (K-accumulated) with bias + residual-add + LayerNorm fused in epilogue."""
    k = pl.program_id(1)

    @pl.when(k == 0)
    def _():
        acc_ref[...] = jnp.zeros_like(acc_ref)

    acc_ref[...] += jnp.dot(x_ref[...].astype(MXU_INPUT_DTYPE),
                            w_ref[...].astype(MXU_INPUT_DTYPE),
                            preferred_element_type=jnp.float32)

    @pl.when(k == pl.num_programs(1) - 1)
    def _():
        y = acc_ref[...] + b_ref[...] + res_ref[...].astype(jnp.float32)
        mu = jnp.mean(y, axis=-1, keepdims=True)
        var = jnp.mean(jnp.square(y - mu), axis=-1, keepdims=True)
        out = (y - mu) * jax.lax.rsqrt(var + eps) * g_ref[...] + be_ref[...]
        o_ref[...] = out.astype(o_ref.dtype)


def linear_residual_ln(x2d, w, b, res2d, gamma, beta, eps=1e-5):
    """LayerNorm(res + x2d @ w + b).  N is kept whole per tile (needed for LN stats)."""
    M, K = x2d.shape
    N = w.shape[1]
    tm = _pick_tile(M, _SUBLANE_TILES)
    tk = _pick_tile(K, _LANE_TILES)
    kern = functools.partial(_linear_res_ln_kernel, eps=eps)
    # TODO(synk): mark constant-index weight/gamma/beta specs pipeline_mode=pl.Buffered(1)
    #             once verified on-target to avoid double-buffering invariant blocks (v7x VMEM).
    return pl.pallas_call(
        kern,
        out_shape=jax.ShapeDtypeStruct((M, N), ACT_DTYPE),
        grid=(M // tm, K // tk),
        in_specs=[
            pl.BlockSpec((tm, tk), lambda i, k: (i, k)),
            pl.BlockSpec((tk, N), lambda i, k: (k, 0)),
            pl.BlockSpec((1, N), lambda i, k: (0, 0)),
            pl.BlockSpec((tm, N), lambda i, k: (i, 0)),
            pl.BlockSpec((1, N), lambda i, k: (0, 0)),
            pl.BlockSpec((1, N), lambda i, k: (0, 0)),
        ],
        out_specs=pl.BlockSpec((tm, N), lambda i, k: (i, 0)),
        scratch_shapes=[pltpu.VMEM((tm, N), jnp.float32)],
        compiler_params=_cparams("parallel", "arbitrary"),
    )(x2d, w, b, res2d, gamma, beta)


def _ffn_ln_kernel(x_ref, w1_ref, b1_ref, w2_ref, b2_ref, g_ref, be_ref, o_ref, acc_ref, *, eps):
    """LayerNorm(x + relu(x @ w1 + b1) @ w2 + b2), hidden (F) axis tiled and accumulated."""
    f = pl.program_id(1)

    @pl.when(f == 0)
    def _():
        acc_ref[...] = jnp.zeros_like(acc_ref)

    x = x_ref[...]                                     # (tm, D) bf16
    h = jnp.dot(x.astype(MXU_INPUT_DTYPE), w1_ref[...].astype(MXU_INPUT_DTYPE),
                preferred_element_type=jnp.float32) + b1_ref[...]
    h = jnp.maximum(h, 0.0)
    acc_ref[...] += jnp.dot(h.astype(MXU_INPUT_DTYPE), w2_ref[...].astype(MXU_INPUT_DTYPE),
                            preferred_element_type=jnp.float32)

    @pl.when(f == pl.num_programs(1) - 1)
    def _():
        y = acc_ref[...] + b2_ref[...] + x.astype(jnp.float32)
        mu = jnp.mean(y, axis=-1, keepdims=True)
        var = jnp.mean(jnp.square(y - mu), axis=-1, keepdims=True)
        o_ref[...] = ((y - mu) * jax.lax.rsqrt(var + eps) * g_ref[...] + be_ref[...]
                      ).astype(o_ref.dtype)


def ffn_residual_ln(x2d, w1, b1, w2, b2, gamma, beta, eps=1e-5):
    """Fused FFN + residual + LayerNorm; hidden axis tiled so nothing (tm,F)-sized lives in VMEM."""
    M, D = x2d.shape
    F = w1.shape[1]
    tm = _pick_tile(M, _SUBLANE_TILES)
    tf = _pick_tile(F, _LANE_TILES)
    kern = functools.partial(_ffn_ln_kernel, eps=eps)
    return pl.pallas_call(
        kern,
        out_shape=jax.ShapeDtypeStruct((M, D), ACT_DTYPE),
        grid=(M // tm, F // tf),
        in_specs=[
            pl.BlockSpec((tm, D), lambda i, f: (i, 0)),
            pl.BlockSpec((D, tf), lambda i, f: (0, f)),
            pl.BlockSpec((1, tf), lambda i, f: (0, f)),
            pl.BlockSpec((tf, D), lambda i, f: (f, 0)),
            pl.BlockSpec((1, D), lambda i, f: (0, 0)),
            pl.BlockSpec((1, D), lambda i, f: (0, 0)),
            pl.BlockSpec((1, D), lambda i, f: (0, 0)),
        ],
        out_specs=pl.BlockSpec((tm, D), lambda i, f: (i, 0)),
        scratch_shapes=[pltpu.VMEM((tm, D), jnp.float32)],
        compiler_params=_cparams("parallel", "arbitrary"),
    )(x2d, w1, b1, w2, b2, gamma, beta)


def _flash_mha_kernel(q_ref, k_ref, v_ref, o_ref, m_sc, l_sc, acc_sc,
                      *, n_head, scale, causal):
    """Flash-style MHA; one (batch, q_tile) slab streaming over kv tiles.

    q_ref: (1, tq, D), k_ref/v_ref: (1, tk, D), o_ref: (1, tq, D)
    scratch: m/l (H, tq, 1) f32, acc (tq, D) f32 (lane-dense, one full-width store).
    """
    ki = pl.program_id(2)
    tq, D = q_ref.shape[1], q_ref.shape[2]
    tk = k_ref.shape[1]
    dh = D // n_head

    @pl.when(ki == 0)
    def _():
        m_sc[...] = jnp.full_like(m_sc, -1e30)
        l_sc[...] = jnp.zeros_like(l_sc)
        acc_sc[...] = jnp.zeros_like(acc_sc)

    # Cast once per tile; fold softmax scale into q (hoisted out of the head loop).
    q = (q_ref[0] * jnp.float32(scale)).astype(MXU_INPUT_DTYPE)
    k = k_ref[0].astype(MXU_INPUT_DTYPE)
    v = v_ref[0].astype(MXU_INPUT_DTYPE)

    def process(bias):
        for h in range(n_head):                       # static unroll; per-head online softmax
            sl = slice(h * dh, (h + 1) * dh)
            # QK^T without an explicit in-kernel transpose (contract last dims).
            s = jax.lax.dot_general(q[:, sl], k[:, sl],
                                    dimension_numbers=(((1,), (1,)), ((), ())),
                                    preferred_element_type=jnp.float32)
            if bias is not None:
                s = s + bias
            m_prev = m_sc[h]                          # (tq, 1)
            m_new = jnp.maximum(m_prev, jnp.max(s, axis=-1, keepdims=True))
            alpha = jnp.exp(m_prev - m_new)
            p = jnp.exp(s - m_new)
            l_sc[h] = alpha * l_sc[h] + jnp.sum(p, axis=-1, keepdims=True)
            acc_sc[:, sl] = alpha * acc_sc[:, sl] + jnp.dot(
                p.astype(MXU_INPUT_DTYPE), v[:, sl], preferred_element_type=jnp.float32)
            m_sc[h] = m_new

    if causal:
        q0 = pl.program_id(1) * tq
        k0 = ki * tk
        fully_visible = (k0 + tk - 1) <= q0           # whole tile below/on the diagonal
        not_fully_masked = k0 <= (q0 + tq - 1)        # skip tiles entirely above the diagonal

        @pl.when(fully_visible)
        def _():
            process(None)                             # no mask needed

        @pl.when(jnp.logical_and(not_fully_masked, jnp.logical_not(fully_visible)))
        def _():                                      # diagonal tile: build mask here only
            rows = q0 + jax.lax.broadcasted_iota(jnp.int32, (tq, tk), 0)
            cols = k0 + jax.lax.broadcasted_iota(jnp.int32, (tq, tk), 1)
            process(jnp.where(rows >= cols, 0.0, -1e30).astype(jnp.float32))
    else:
        process(None)

    @pl.when(ki == pl.num_programs(2) - 1)
    def _():
        # Per-head 1/l broadcast to a lane-dense (tq, D) factor -> single full-width store.
        inv_cols = [jnp.broadcast_to(pl.reciprocal(l_sc[h], approx=True), (tq, dh))
                    for h in range(n_head)]
        inv = jnp.concatenate(inv_cols, axis=-1)
        o_ref[0] = (acc_sc[...] * inv).astype(o_ref.dtype)


def flash_attention(q, k, v, n_head, causal):
    """q: (B, Sq, D), k/v: (B, Sk, D) -> (B, Sq, D). Head split/merge done in-kernel."""
    B, Sq, D = q.shape
    Sk = k.shape[1]
    dh = D // n_head
    scale = 1.0 / math.sqrt(dh)
    tq = _pick_tile(Sq, _LANE_TILES)
    tk = _pick_tile(Sk, _LANE_TILES)
    kern = functools.partial(_flash_mha_kernel, n_head=n_head, scale=scale, causal=causal)
    # TODO(synk): consider pipeline_mode=pl.Buffered(3) on k/v specs once validated on-target.
    return pl.pallas_call(
        kern,
        out_shape=jax.ShapeDtypeStruct((B, Sq, D), ACT_DTYPE),
        grid=(B, Sq // tq, Sk // tk),
        in_specs=[
            pl.BlockSpec((1, tq, D), lambda b, qi, ki: (b, qi, 0)),
            pl.BlockSpec((1, tk, D), lambda b, qi, ki: (b, ki, 0)),
            pl.BlockSpec((1, tk, D), lambda b, qi, ki: (b, ki, 0)),
        ],
        out_specs=pl.BlockSpec((1, tq, D), lambda b, qi, ki: (b, qi, 0)),
        scratch_shapes=[
            pltpu.VMEM((n_head, tq, 1), jnp.float32),
            pltpu.VMEM((n_head, tq, 1), jnp.float32),
            pltpu.VMEM((tq, D), jnp.float32),
        ],
        compiler_params=_cparams("parallel", "parallel", "arbitrary"),
    )(q, k, v)


# ------------------------------ model glue ----------------------------------

def sinusoidal_pos_encoding(seq_len, d_model):
    pos = jnp.arange(seq_len, dtype=jnp.float32)[:, None]
    i = jnp.arange(d_model)[None, :]
    angle = pos / jnp.power(10000.0, (2 * (i // 2)).astype(jnp.float32) / d_model)
    return jnp.where(i % 2 == 0, jnp.sin(angle), jnp.cos(angle))  # (seq, d_model)


def _init_linear(key, fan_in, fan_out):
    w = (jax.random.normal(key, (fan_in, fan_out), jnp.float32) * 0.02).astype(PARAM_DTYPE)
    b = jnp.zeros((1, fan_out), jnp.float32)
    return w, b


def init_ln_params(d):
    return {"g": jnp.ones((1, d), jnp.float32), "b": jnp.zeros((1, d), jnp.float32)}


def init_self_attn_params(key, d):
    kq, kk, kv, ko = jax.random.split(key, 4)
    wq, bq = _init_linear(kq, d, d)
    wk, bk = _init_linear(kk, d, d)
    wv, bv = _init_linear(kv, d, d)
    wo, bo = _init_linear(ko, d, d)
    # Fused QKV weights pre-concatenated at init (no per-step concat in the jitted graph).
    return {"w_qkv": jnp.concatenate([wq, wk, wv], axis=1),
            "b_qkv": jnp.concatenate([bq, bk, bv], axis=1),
            "wo": wo, "bo": bo}


def init_cross_attn_params(key, d):
    kq, kk, kv, ko = jax.random.split(key, 4)
    wq, bq = _init_linear(kq, d, d)
    wk, bk = _init_linear(kk, d, d)
    wv, bv = _init_linear(kv, d, d)
    wo, bo = _init_linear(ko, d, d)
    return {"wq": wq, "bq": bq,
            "w_kv": jnp.concatenate([wk, wv], axis=1),
            "b_kv": jnp.concatenate([bk, bv], axis=1),
            "wo": wo, "bo": bo}


def init_encoder_layer(key, d, ff):
    k1, k2, k3 = jax.random.split(key, 3)
    w1, b1 = _init_linear(k2, d, ff)
    w2, b2 = _init_linear(k3, ff, d)
    return {"self_attn": init_self_attn_params(k1, d), "ln1": init_ln_params(d),
            "w1": w1, "b1": b1, "w2": w2, "b2": b2, "ln2": init_ln_params(d)}


def init_decoder_layer(key, d, ff):
    k1, k2, k3, k4 = jax.random.split(key, 4)
    w1, b1 = _init_linear(k3, d, ff)
    w2, b2 = _init_linear(k4, ff, d)
    return {"self_attn": init_self_attn_params(k1, d), "ln1": init_ln_params(d),
            "cross_attn": init_cross_attn_params(k2, d), "ln2": init_ln_params(d),
            "w1": w1, "b1": b1, "w2": w2, "b2": b2, "ln3": init_ln_params(d)}


def init_transformer_params(key, cfg):
    d, ff = cfg["model_size"], cfg["ff_size"]
    k_e_emb, k_d_emb, k_enc, k_dec, k_out = jax.random.split(key, 5)
    enc_keys = jax.random.split(k_enc, cfg["n_layers"])
    dec_keys = jax.random.split(k_dec, cfg["n_layers"])

    # Vocab projection pre-padded once to a lane-dense multiple of 256 (v6e/v7x MXU width).
    V = cfg["tgt_vocab_size"]
    Vp = ((V + 255) // 256) * 256
    w_out = jax.random.normal(k_out, (d, V), jnp.float32) * 0.02
    b_out = jnp.zeros((V,), jnp.float32)
    w_out = jnp.pad(w_out, ((0, 0), (0, Vp - V))).astype(PARAM_DTYPE)
    b_out = jnp.pad(b_out, (0, Vp - V)).reshape(1, Vp)

    return {
        "encoder": {
            "emb": jax.random.normal(k_e_emb, (cfg["src_vocab_size"], d), jnp.float32) * 0.02,
            "layers": [init_encoder_layer(k, d, ff) for k in enc_keys],
        },
        "decoder": {
            "emb": jax.random.normal(k_d_emb, (cfg["tgt_vocab_size"], d), jnp.float32) * 0.02,
            "layers": [init_decoder_layer(k, d, ff) for k in dec_keys],
        },
        "linear_out": {"w": w_out, "b": b_out},
    }


def self_attention_block(p, ln, x, n_head, causal):
    """Fused-QKV projection -> flash attention -> fused (wo + residual + LayerNorm)."""
    B, S, D = x.shape
    x2 = x.reshape(B * S, D)
    qkv = linear(x2, p["w_qkv"], p["b_qkv"]).reshape(B, S, 3 * D)
    q, k, v = qkv[..., :D], qkv[..., D:2 * D], qkv[..., 2 * D:]
    a = flash_attention(q, k, v, n_head, causal).reshape(B * S, D)
    out = linear_residual_ln(a, p["wo"], p["bo"], x2, ln["g"], ln["b"])
    return out.reshape(B, S, D)


def cross_attention_block(p, ln, x_q, x_kv, n_head):
    """Q projection + fused K|V projection -> flash attention -> fused (wo + residual + LN)."""
    B, Sq, D = x_q.shape
    Sk = x_kv.shape[1]
    xq2 = x_q.reshape(B * Sq, D)
    q = linear(xq2, p["wq"], p["bq"]).reshape(B, Sq, D)
    kv = linear(x_kv.reshape(B * Sk, D), p["w_kv"], p["b_kv"]).reshape(B, Sk, 2 * D)
    k, v = kv[..., :D], kv[..., D:]
    a = flash_attention(q, k, v, n_head, causal=False).reshape(B * Sq, D)
    out = linear_residual_ln(a, p["wo"], p["bo"], xq2, ln["g"], ln["b"])
    return out.reshape(B, Sq, D)


def ffn_block(x, lp, ln):
    B, S, D = x.shape
    out = ffn_residual_ln(x.reshape(B * S, D), lp["w1"], lp["b1"],
                          lp["w2"], lp["b2"], ln["g"], ln["b"])
    return out.reshape(B, S, D)


def embed(emb, ids, S, D):
    # TODO(synk): embedding gather + pos-enc add stay in XLA (gather has no clean tiled Pallas form).
    x = jnp.take(emb, ids, axis=0) * math.sqrt(D)
    x = x + sinusoidal_pos_encoding(S, D)[None, :, :]
    return x.astype(ACT_DTYPE)


def encoder_forward(p, x_ids, cfg):
    _, S = x_ids.shape
    D, H = cfg["model_size"], cfg["n_head"]
    x = embed(p["emb"], x_ids, S, D)
    for lp in p["layers"]:
        x = self_attention_block(lp["self_attn"], lp["ln1"], x, H, causal=False)
        x = ffn_block(x, lp, lp["ln2"])
    return x


def decoder_forward(p, y_ids, enc_out, cfg):
    _, S = y_ids.shape
    D, H = cfg["model_size"], cfg["n_head"]
    y = embed(p["emb"], y_ids, S, D)
    for lp in p["layers"]:
        y = self_attention_block(lp["self_attn"], lp["ln1"], y, H, causal=True)
        y = cross_attention_block(lp["cross_attn"], lp["ln2"], y, enc_out, H)
        y = ffn_block(y, lp, lp["ln3"])
    return y


def transformer_forward(params, x, y, cfg):
    # convert(): prepend <bos>, drop last target token -> teacher forcing shift
    B = y.shape[0]
    start = jnp.full((B, 1), cfg["bos"], dtype=y.dtype)
    y_s = jnp.concatenate([start, y], axis=1)[:, :-1]

    enc_out = encoder_forward(params["encoder"], x, cfg)
    dec_out = decoder_forward(params["decoder"], y_s, enc_out, cfg)

    B, S, D = dec_out.shape
    logits = linear(dec_out.reshape(B * S, D),
                    params["linear_out"]["w"], params["linear_out"]["b"],
                    out_dtype=jnp.float32)                    # (B*S, Vp), lane-dense stores
    V = cfg["tgt_vocab_size"]
    return logits.reshape(B, S, -1)[..., :V]


# ---------------------------------- main -------------------------------------

if __name__ == "__main__":
    cfg = dict(
        src_vocab_size=13,
        tgt_vocab_size=11,
        model_size=32,
        ff_size=64,
        n_head=4,
        n_layers=2,
        s_len=8,
        bos=1,
    )
    batch = 2

    key = jax.random.PRNGKey(0)
    k_param, k_x, k_y = jax.random.split(key, 3)
    params = init_transformer_params(k_param, cfg)

    x = jax.random.randint(k_x, (batch, cfg["s_len"]), 0, cfg["src_vocab_size"], dtype=jnp.int32)
    y = jax.random.randint(k_y, (batch, cfg["s_len"]), 0, cfg["tgt_vocab_size"], dtype=jnp.int32)

    fwd = jax.jit(lambda p, xx, yy: transformer_forward(p, xx, yy, cfg))
    out = fwd(params, x, y)
    out = jax.block_until_ready(out)

    assert out.shape == (batch, cfg["s_len"], cfg["tgt_vocab_size"])
    assert jnp.all(jnp.isfinite(out))
    print("KERNEL_OK")
</pallas_src>

<mosaic_0001>
module attributes {stable_mosaic.version = 11 : i64} {
  func.func @_linear_res_ln_kernel(%arg0: i32, %arg1: i32, %arg2: memref<16x32xbf16, #tpu.memory_space<vmem>>, %arg3: memref<32x32xbf16, #tpu.memory_space<vmem>>, %arg4: memref<1x32xf32, #tpu.memory_space<vmem>>, %arg5: memref<16x32xbf16, #tpu.memory_space<vmem>>, %arg6: memref<1x32xf32, #tpu.memory_space<vmem>>, %arg7: memref<1x32xf32, #tpu.memory_space<vmem>>, %arg8: memref<16x32xbf16, #tpu.memory_space<vmem>>, %arg9: memref<16x32xf32, #tpu.memory_space<vmem>>) attributes {dimension_semantics = [#tpu.dimension_semantics<parallel>, #tpu.dimension_semantics<arbitrary>], iteration_bounds = array<i64: 1, 1>, scalar_prefetch = 0 : i64, scratch_operands = 1 : i64, tpu.core_type = #tpu.core_type<tc>, window_params = [{transform_indices = @transform_0, window_bounds = array<i64: 16, 32>}, {transform_indices = @transform_1, window_bounds = array<i64: 32, 32>}, {pipeline_mode = #tpu.pipeline_mode<synchronous>, transform_indices = @transform_2, window_bounds = array<i64: 1, 32>}, {transform_indices = @transform_3, window_bounds = array<i64: 16, 32>}, {pipeline_mode = #tpu.pipeline_mode<synchronous>, transform_indices = @transform_4, window_bounds = array<i64: 1, 32>}, {pipeline_mode = #tpu.pipeline_mode<synchronous>, transform_indices = @transform_5, window_bounds = array<i64: 1, 32>}, {transform_indices = @transform_6, window_bounds = array<i64: 16, 32>}]} {
    %c0_i32 = arith.constant 0 : i32
    %0 = arith.cmpi eq, %arg1, %c0_i32 : i32
    %1 = arith.extui %0 : i1 to i32
    %c0_i32_0 = arith.constant 0 : i32
    %2 = arith.cmpi ne, %1, %c0_i32_0 : i32
    scf.if %2 {
      %cst_10 = arith.constant 0.000000e+00 : f32
      %12 = vector.broadcast %cst_10 : f32 to vector<16x32xf32>
      %c0_11 = arith.constant 0 : index
      %c0_12 = arith.constant 0 : index
      %13 = vector.load %arg9[%c0_11, %c0_12] : memref<16x32xf32, #tpu.memory_space<vmem>>, vector<16x32xf32>
      tpu.vector_store %arg9[%c0_11, %c0_12], %12 {strides = array<i32>} : memref<16x32xf32, #tpu.memory_space<vmem>>, vector<16x32xf32>,
    } else {
    }
    %c0 = arith.constant 0 : index
    %c0_1 = arith.constant 0 : index
    %3 = vector.load %arg9[%c0, %c0_1] : memref<16x32xf32, #tpu.memory_space<vmem>>, vector<16x32xf32>
    %c0_2 = arith.constant 0 : index
    %c0_3 = arith.constant 0 : index
    %4 = vector.load %arg2[%c0_2, %c0_3] : memref<16x32xbf16, #tpu.memory_space<vmem>>, vector<16x32xbf16>
    %c0_4 = arith.constant 0 : index
    %c0_5 = arith.constant 0 : index
    %5 = vector.load %arg3[%c0_4, %c0_5] : memref<32x32xbf16, #tpu.memory_space<vmem>>, vector<32x32xbf16>
    %cst = arith.constant dense<0.000000e+00> : vector<16x32xf32>
    %6 = tpu.matmul %4, %5, %cst {dimension_numbers = #tpu.dot_dimension_numbers<[1], [0], [0], [1], [0, 0, 1, 1], [], []>} : vector<16x32xbf16>, vector<32x32xbf16>, vector<16x32xf32> -> vector<16x32xf32>
    %7 = arith.addf %3, %6 : vector<16x32xf32>
    %c0_6 = arith.constant 0 : index
    %c0_7 = arith.constant 0 : index
    %8 = vector.load %arg9[%c0_6, %c0_7] : memref<16x32xf32, #tpu.memory_space<vmem>>, vector<16x32xf32>
    tpu.vector_store %arg9[%c0_6, %c0_7], %7 {strides = array<i32>} : memref<16x32xf32, #tpu.memory_space<vmem>>, vector<16x32xf32>,
    %c0_i32_8 = arith.constant 0 : i32
    %9 = arith.cmpi eq, %arg1, %c0_i32_8 : i32
    %10 = arith.extui %9 : i1 to i32
    %c0_i32_9 = arith.constant 0 : i32
    %11 = arith.cmpi ne, %10, %c0_i32_9 : i32
    scf.if %11 {
      %c0_10 = arith.constant 0 : index
      %c0_11 = arith.constant 0 : index
      %12 = vector.load %arg9[%c0_10, %c0_11] : memref<16x32xf32, #tpu.memory_space<vmem>>, vector<16x32xf32>
      %c0_12 = arith.constant 0 : index
      %c0_13 = arith.constant 0 : index
      %13 = vector.load %arg4[%c0_12, %c0_13] : memref<1x32xf32, #tpu.memory_space<vmem>>, vector<1x32xf32>
      %14 = vector.broadcast %13 : vector<1x32xf32> to vector<16x32xf32>
      %15 = arith.addf %12, %14 : vector<16x32xf32>
      %c0_14 = arith.constant 0 : index
      %c0_15 = arith.constant 0 : index
      %16 = vector.load %arg5[%c0_14, %c0_15] : memref<16x32xbf16, #tpu.memory_space<vmem>>, vector<16x32xbf16>
      %17 = arith.extf %16 : vector<16x32xbf16> to vector<16x32xf32>
      %18 = arith.addf %15, %17 : vector<16x32xf32>
      %cst_16 = arith.constant dense<0.000000e+00> : vector<16xf32>
      %19 = vector.multi_reduction <add>, %18, %cst_16 [1] : vector<16x32xf32> to vector<16xf32>
      %20 = vector.shape_cast %19 : vector<16xf32> to vector<16x1xf32>
      %cst_17 = arith.constant 3.200000e+01 : f32
      %21 = vector.broadcast %cst_17 : f32 to vector<16x1xf32>
      %22 = arith.divf %20, %21 : vector<16x1xf32>
      %23 = vector.broadcast %22 : vector<16x1xf32> to vector<16x32xf32>
      %24 = arith.subf %18, %23 : vector<16x32xf32>
      %25 = arith.mulf %24, %24 : vector<16x32xf32>
      %cst_18 = arith.constant dense<0.000000e+00> : vector<16xf32>
      %26 = vector.multi_reduction <add>, %25, %cst_18 [1] : vector<16x32xf32> to vector<16xf32>
      %27 = vector.shape_cast %26 : vector<16xf32> to vector<16x1xf32>
      %cst_19 = arith.constant 3.200000e+01 : f32
      %28 = vector.broadcast %cst_19 : f32 to vector<16x1xf32>
      %29 = arith.divf %27, %28 : vector<16x1xf32>
      %30 = vector.broadcast %22 : vector<16x1xf32> to vector<16x32xf32>
      %31 = arith.subf %18, %30 : vector<16x32xf32>
      %cst_20 = arith.constant 9.99999974E-6 : f32
      %32 = vector.broadcast %cst_20 : f32 to vector<16x1xf32>
      %33 = arith.addf %29, %32 : vector<16x1xf32>
      %34 = math.rsqrt %33 : vector<16x1xf32>
      %35 = vector.broadcast %34 : vector<16x1xf32> to vector<16x32xf32>
      %36 = arith.mulf %31, %35 : vector<16x32xf32>
      %c0_21 = arith.constant 0 : index
      %c0_22 = arith.constant 0 : index
      %37 = vector.load %arg6[%c0_21, %c0_22] : memref<1x32xf32, #tpu.memory_space<vmem>>, vector<1x32xf32>
      %38 = vector.broadcast %37 : vector<1x32xf32> to vector<16x32xf32>
      %39 = arith.mulf %36, %38 : vector<16x32xf32>
      %c0_23 = arith.constant 0 : index
      %c0_24 = arith.constant 0 : index
      %40 = vector.load %arg7[%c0_23, %c0_24] : memref<1x32xf32, #tpu.memory_space<vmem>>, vector<1x32xf32>
      %41 = vector.broadcast %40 : vector<1x32xf32> to vector<16x32xf32>
      %42 = arith.addf %39, %41 : vector<16x32xf32>
      %43 = arith.truncf %42 : vector<16x32xf32> to vector<16x32xbf16>
      %c0_25 = arith.constant 0 : index
      %c0_26 = arith.constant 0 : index
      %44 = vector.load %arg8[%c0_25, %c0_26] : memref<16x32xbf16, #tpu.memory_space<vmem>>, vector<16x32xbf16>
      tpu.vector_store %arg8[%c0_25, %c0_26], %43 {strides = array<i32>} : memref<16x32xbf16, #tpu.memory_space<vmem>>, vector<16x32xbf16>,
    } else {
    }
    return
  }
  func.func @transform_0(%arg0: i32, %arg1: i32) -> (i32, i32) {
    %c0_i32 = arith.constant 0 : i32
    return %arg0, %arg1 : i32, i32
  }
  func.func @transform_1(%arg0: i32, %arg1: i32) -> (i32, i32) {
    %c0_i32 = arith.constant 0 : i32
    %c0_i32_0 = arith.constant 0 : i32
    return %arg1, %c0_i32 : i32, i32
  }
  func.func @transform_2(%arg0: i32, %arg1: i32) -> (i32, i32) {
    %c0_i32 = arith.constant 0 : i32
    %c0_i32_0 = arith.constant 0 : i32
    %c0_i32_1 = arith.constant 0 : i32
    return %c0_i32, %c0_i32_0 : i32, i32
  }
  func.func @transform_3(%arg0: i32, %arg1: i32) -> (i32, i32) {
    %c0_i32 = arith.constant 0 : i32
    %c0_i32_0 = arith.constant 0 : i32
    return %arg0, %c0_i32 : i32, i32
  }
  func.func @transform_4(%arg0: i32, %arg1: i32) -> (i32, i32) {
    %c0_i32 = arith.constant 0 : i32
    %c0_i32_0 = arith.constant 0 : i32
    %c0_i32_1 = arith.constant 0 : i32
    return %c0_i32, %c0_i32_0 : i32, i32
  }
  func.func @transform_5(%arg0: i32, %arg1: i32) -> (i32, i32) {
    %c0_i32 = arith.constant 0 : i32
    %c0_i32_0 = arith.constant 0 : i32
    %c0_i32_1 = arith.constant 0 : i32
    return %c0_i32, %c0_i32_0 : i32, i32
  }
  func.func @transform_6(%arg0: i32, %arg1: i32) -> (i32, i32) {
    %c0_i32 = arith.constant 0 : i32
    %c0_i32_0 = arith.constant 0 : i32
    return %arg0, %c0_i32 : i32, i32
  }
}

module attributes {stable_mosaic.version = 11 : i64} {
  func.func @_linear_kernel(%arg0: i32, %arg1: i32, %arg2: i32, %arg3: memref<16x32xbf16, #tpu.memory_space<vmem>>, %arg4: memref<32x96xbf16, #tpu.memory_space<vmem>>, %arg5: memref<1x96xf32, #tpu.memory_space<vmem>>, %arg6: memref<16x96xbf16, #tpu.memory_space<vmem>>, %arg7: memref<16x96xf32, #tpu.memory_space<vmem>>) attributes {dimension_semantics = [#tpu.dimension_semantics<parallel>, #tpu.dimension_semantics<parallel>, #tpu.dimension_semantics<arbitrary>], iteration_bounds = array<i64: 1, 1, 1>, scalar_prefetch = 0 : i64, scratch_operands = 1 : i64, tpu.core_type = #tpu.core_type<tc>, window_params = [{transform_indices = @transform_0, window_bounds = array<i64: 16, 32>}, {transform_indices = @transform_1, window_bounds = array<i64: 32, 96>}, {transform_indices = @transform_2, window_bounds = array<i64: 1, 96>}, {transform_indices = @transform_3, window_bounds = array<i64: 16, 96>}]} {
    %c0_i32 = arith.constant 0 : i32
    %0 = arith.cmpi eq, %arg2, %c0_i32 : i32
    %1 = arith.extui %0 : i1 to i32
    %c0_i32_0 = arith.constant 0 : i32
    %2 = arith.cmpi ne, %1, %c0_i32_0 : i32
    scf.if %2 {
      %cst_10 = arith.constant 0.000000e+00 : f32
      %12 = vector.broadcast %cst_10 : f32 to vector<16x96xf32>
      %c0_11 = arith.constant 0 : index
      %c0_12 = arith.constant 0 : index
      %13 = vector.load %arg7[%c0_11, %c0_12] : memref<16x96xf32, #tpu.memory_space<vmem>>, vector<16x96xf32>
      tpu.vector_store %arg7[%c0_11, %c0_12], %12 {strides = array<i32>} : memref<16x96xf32, #tpu.memory_space<vmem>>, vector<16x96xf32>,
    } else {
    }
    %c0 = arith.constant 0 : index
    %c0_1 = arith.constant 0 : index
    %3 = vector.load %arg7[%c0, %c0_1] : memref<16x96xf32, #tpu.memory_space<vmem>>, vector<16x96xf32>
    %c0_2 = arith.constant 0 : index
    %c0_3 = arith.constant 0 : index
    %4 = vector.load %arg3[%c0_2, %c0_3] : memref<16x32xbf16, #tpu.memory_space<vmem>>, vector<16x32xbf16>
    %c0_4 = arith.constant 0 : index
    %c0_5 = arith.constant 0 : index
    %5 = vector.load %arg4[%c0_4, %c0_5] : memref<32x96xbf16, #tpu.memory_space<vmem>>, vector<32x96xbf16>
    %cst = arith.constant dense<0.000000e+00> : vector<16x96xf32>
    %6 = tpu.matmul %4, %5, %cst {dimension_numbers = #tpu.dot_dimension_numbers<[1], [0], [0], [1], [0, 0, 1, 1], [], []>} : vector<16x32xbf16>, vector<32x96xbf16>, vector<16x96xf32> -> vector<16x96xf32>
    %7 = arith.addf %3, %6 : vector<16x96xf32>
    %c0_6 = arith.constant 0 : index
    %c0_7 = arith.constant 0 : index
    %8 = vector.load %arg7[%c0_6, %c0_7] : memref<16x96xf32, #tpu.memory_space<vmem>>, vector<16x96xf32>
    tpu.vector_store %arg7[%c0_6, %c0_7], %7 {strides = array<i32>} : memref<16x96xf32, #tpu.memory_space<vmem>>, vector<16x96xf32>,
    %c0_i32_8 = arith.constant 0 : i32
    %9 = arith.cmpi eq, %arg2, %c0_i32_8 : i32
    %10 = arith.extui %9 : i1 to i32
    %c0_i32_9 = arith.constant 0 : i32
    %11 = arith.cmpi ne, %10, %c0_i32_9 : i32
    scf.if %11 {
      %c0_10 = arith.constant 0 : index
      %c0_11 = arith.constant 0 : index
      %12 = vector.load %arg7[%c0_10, %c0_11] : memref<16x96xf32, #tpu.memory_space<vmem>>, vector<16x96xf32>
      %c0_12 = arith.constant 0 : index
      %c0_13 = arith.constant 0 : index
      %13 = vector.load %arg5[%c0_12, %c0_13] : memref<1x96xf32, #tpu.memory_space<vmem>>, vector<1x96xf32>
      %14 = vector.broadcast %13 : vector<1x96xf32> to vector<16x96xf32>
      %15 = arith.addf %12, %14 : vector<16x96xf32>
      %16 = arith.truncf %15 : vector<16x96xf32> to vector<16x96xbf16>
      %c0_14 = arith.constant 0 : index
      %c0_15 = arith.constant 0 : index
      %17 = vector.load %arg6[%c0_14, %c0_15] : memref<16x96xbf16, #tpu.memory_space<vmem>>, vector<16x96xbf16>
      tpu.vector_store %arg6[%c0_14, %c0_15], %16 {strides = array<i32>} : memref<16x96xbf16, #tpu.memory_space<vmem>>, vector<16x96xbf16>,
    } else {
    }
    return
  }
  func.func @transform_0(%arg0: i32, %arg1: i32, %arg2: i32) -> (i32, i32) {
    %c0_i32 = arith.constant 0 : i32
    return %arg0, %arg2 : i32, i32
  }
  func.func @transform_1(%arg0: i32, %arg1: i32, %arg2: i32) -> (i32, i32) {
    %c0_i32 = arith.constant 0 : i32
    return %arg2, %arg1 : i32, i32
  }
  func.func @transform_2(%arg0: i32, %arg1: i32, %arg2: i32) -> (i32, i32) {
    %c0_i32 = arith.constant 0 : i32
    %c0_i32_0 = arith.constant 0 : i32
    return %c0_i32, %arg1 : i32, i32
  }
  func.func @transform_3(%arg0: i32, %arg1: i32, %arg2: i32) -> (i32, i32) {
    %c0_i32 = arith.constant 0 : i32
    return %arg0, %arg1 : i32, i32
  }
}

module attributes {stable_mosaic.version = 11 : i64} {
  func.func @_flash_mha_kernel(%arg0: i32, %arg1: i32, %arg2: i32, %arg3: memref<1x8x32xbf16, #tpu.memory_space<vmem>>, %arg4: memref<1x8x32xbf16, #tpu.memory_space<vmem>>, %arg5: memref<1x8x32xbf16, #tpu.memory_space<vmem>>, %arg6: memref<1x8x32xbf16, #tpu.memory_space<vmem>>, %arg7: memref<4x8x1xf32, #tpu.memory_space<vmem>>, %arg8: memref<4x8x1xf32, #tpu.memory_space<vmem>>, %arg9: memref<8x32xf32, #tpu.memory_space<vmem>>) attributes {dimension_semantics = [#tpu.dimension_semantics<parallel>, #tpu.dimension_semantics<parallel>, #tpu.dimension_semantics<arbitrary>], iteration_bounds = array<i64: 2, 1, 1>, scalar_prefetch = 0 : i64, scratch_operands = 3 : i64, tpu.core_type = #tpu.core_type<tc>, window_params = [{transform_indices = @transform_0, window_bounds = array<i64: 1, 8, 32>}, {transform_indices = @transform_1, window_bounds = array<i64: 1, 8, 32>}, {transform_indices = @transform_2, window_bounds = array<i64: 1, 8, 32>}, {transform_indices = @transform_3, window_bounds = array<i64: 1, 8, 32>}]} {
    %c0_i32 = arith.constant 0 : i32
    %0 = arith.cmpi eq, %arg2, %c0_i32 : i32
    %1 = arith.extui %0 : i1 to i32
    %c0_i32_0 = arith.constant 0 : i32
    %2 = arith.cmpi ne, %1, %c0_i32_0 : i32
    scf.if %2 {
      %cst_17 = arith.constant -1.000000e+30 : f32
      %30 = vector.broadcast %cst_17 : f32 to vector<4x8x1xf32>
      %c0_18 = arith.constant 0 : index
      %c0_19 = arith.constant 0 : index
      %c0_20 = arith.constant 0 : index
      %31 = vector.load %arg7[%c0_18, %c0_19, %c0_20] : memref<4x8x1xf32, #tpu.memory_space<vmem>>, vector<4x8x1xf32>
      tpu.vector_store %arg7[%c0_18, %c0_19, %c0_20], %30 {strides = array<i32>} : memref<4x8x1xf32, #tpu.memory_space<vmem>>, vector<4x8x1xf32>,
      %cst_21 = arith.constant 0.000000e+00 : f32
      %32 = vector.broadcast %cst_21 : f32 to vector<4x8x1xf32>
      %c0_22 = arith.constant 0 : index
      %c0_23 = arith.constant 0 : index
      %c0_24 = arith.constant 0 : index
      %33 = vector.load %arg8[%c0_22, %c0_23, %c0_24] : memref<4x8x1xf32, #tpu.memory_space<vmem>>, vector<4x8x1xf32>
      tpu.vector_store %arg8[%c0_22, %c0_23, %c0_24], %32 {strides = array<i32>} : memref<4x8x1xf32, #tpu.memory_space<vmem>>, vector<4x8x1xf32>,
      %cst_25 = arith.constant 0.000000e+00 : f32
      %34 = vector.broadcast %cst_25 : f32 to vector<8x32xf32>
      %c0_26 = arith.constant 0 : index
      %c0_27 = arith.constant 0 : index
      %35 = vector.load %arg9[%c0_26, %c0_27] : memref<8x32xf32, #tpu.memory_space<vmem>>, vector<8x32xf32>
      tpu.vector_store %arg9[%c0_26, %c0_27], %34 {strides = array<i32>} : memref<8x32xf32, #tpu.memory_space<vmem>>, vector<8x32xf32>,
    } else {
    }
    %c0 = arith.constant 0 : index
    %c0_1 = arith.constant 0 : index
    %c0_2 = arith.constant 0 : index
    %3 = vector.load %arg3[%c0, %c0_1, %c0_2] : memref<1x8x32xbf16, #tpu.memory_space<vmem>>, vector<1x8x32xbf16>
    %4 = vector.shape_cast %3 : vector<1x8x32xbf16> to vector<8x32xbf16>
    %5 = arith.extf %4 : vector<8x32xbf16> to vector<8x32xf32>
    %cst = arith.constant 0.353553385 : f32
    %6 = vector.broadcast %cst : f32 to vector<8x32xf32>
    %7 = arith.mulf %5, %6 : vector<8x32xf32>
    %8 = arith.truncf %7 : vector<8x32xf32> to vector<8x32xbf16>
    %c0_3 = arith.constant 0 : index
    %c0_4 = arith.constant 0 : index
    %c0_5 = arith.constant 0 : index
    %9 = vector.load %arg4[%c0_3, %c0_4, %c0_5] : memref<1x8x32xbf16, #tpu.memory_space<vmem>>, vector<1x8x32xbf16>
    %10 = vector.shape_cast %9 : vector<1x8x32xbf16> to vector<8x32xbf16>
    %c0_6 = arith.constant 0 : index
    %c0_7 = arith.constant 0 : index
    %c0_8 = arith.constant 0 : index
    %11 = vector.load %arg5[%c0_6, %c0_7, %c0_8] : memref<1x8x32xbf16, #tpu.memory_space<vmem>>, vector<1x8x32xbf16>
    %12 = vector.shape_cast %11 : vector<1x8x32xbf16> to vector<8x32xbf16>
    %c8_i32 = arith.constant 8 : i32
    %13 = arith.muli %arg1, %c8_i32 : i32
    %c8_i32_9 = arith.constant 8 : i32
    %14 = arith.muli %arg2, %c8_i32_9 : i32
    %c8_i32_10 = arith.constant 8 : i32
    %15 = arith.addi %14, %c8_i32_10 : i32
    %c1_i32 = arith.constant 1 : i32
    %16 = arith.subi %15, %c1_i32 : i32
    %17 = arith.cmpi sle, %16, %13 : i32
    %c8_i32_11 = arith.constant 8 : i32
    %18 = arith.addi %13, %c8_i32_11 : i32
    %c1_i32_12 = arith.constant 1 : i32
    %19 = arith.subi %18, %c1_i32_12 : i32
    %20 = arith.cmpi sle, %14, %19 : i32
    %21 = arith.extui %17 : i1 to i32
    %c0_i32_13 = arith.constant 0 : i32
    %22 = arith.cmpi ne, %21, %c0_i32_13 : i32
    scf.if %22 {
      %30 = vector.extract_strided_slice %8 {offsets = [0, 0], sizes = [8, 8], strides = [1, 1]} : vector<8x32xbf16> to vector<8x8xbf16>
      %31 = vector.extract_strided_slice %10 {offsets = [0, 0], sizes = [8, 8], strides = [1, 1]} : vector<8x32xbf16> to vector<8x8xbf16>
      %cst_17 = arith.constant dense<0.000000e+00> : vector<8x8xf32>
      %32 = tpu.matmul %30, %31, %cst_17 {dimension_numbers = #tpu.dot_dimension_numbers<[1], [1], [0], [0], [0, 0, 1, 0], [], []>} : vector<8x8xbf16>, vector<8x8xbf16>, vector<8x8xf32> -> vector<8x8xf32>
      %c0_18 = arith.constant 0 : index
      %c0_19 = arith.constant 0 : index
      %c0_20 = arith.constant 0 : index
      %33 = vector.load %arg7[%c0_18, %c0_19, %c0_20] : memref<4x8x1xf32, #tpu.memory_space<vmem>>, vector<1x8x1xf32>
      %34 = vector.shape_cast %33 : vector<1x8x1xf32> to vector<8x1xf32>
      %cst_21 = arith.constant dense<0xFF800000> : vector<8xf32>
      %35 = vector.multi_reduction <maximumf>, %32, %cst_21 [1] : vector<8x8xf32> to vector<8xf32>
      %36 = vector.shape_cast %35 : vector<8xf32> to vector<8x1xf32>
      %37 = arith.maximumf %34, %36 : vector<8x1xf32>
      %38 = arith.subf %34, %37 : vector<8x1xf32>
      %39 = math.exp %38 : vector<8x1xf32>
      %40 = vector.broadcast %37 : vector<8x1xf32> to vector<8x8xf32>
      %41 = arith.subf %32, %40 : vector<8x8xf32>
      %42 = math.exp %41 : vector<8x8xf32>
      %c0_22 = arith.constant 0 : index
      %c0_23 = arith.constant 0 : index
      %c0_24 = arith.constant 0 : index
      %43 = vector.load %arg8[%c0_22, %c0_23, %c0_24] : memref<4x8x1xf32, #tpu.memory_space<vmem>>, vector<1x8x1xf32>
      %44 = vector.shape_cast %43 : vector<1x8x1xf32> to vector<8x1xf32>
      %45 = arith.mulf %39, %44 : vector<8x1xf32>
      %cst_25 = arith.constant dense<0.000000e+00> : vector<8xf32>
      %46 = vector.multi_reduction <add>, %42, %cst_25 [1] : vector<8x8xf32> to vector<8xf32>
      %47 = vector.shape_cast %46 : vector<8xf32> to vector<8x1xf32>
      %48 = arith.addf %45, %47 : vector<8x1xf32>
      %c0_26 = arith.constant 0 : index
      %c0_27 = arith.constant 0 : index
      %c0_28 = arith.constant 0 : index
      %49 = vector.load %arg8[%c0_26, %c0_27, %c0_28] : memref<4x8x1xf32, #tpu.memory_space<vmem>>, vector<1x8x1xf32>
      %50 = vector.shape_cast %49 : vector<1x8x1xf32> to vector<8x1xf32>
      %51 = vector.shape_cast %48 : vector<8x1xf32> to vector<1x8x1xf32>
      tpu.vector_store %arg8[%c0_26, %c0_27, %c0_28], %51 {strides = array<i32>} : memref<4x8x1xf32, #tpu.memory_space<vmem>>, vector<1x8x1xf32>,
      %c0_29 = arith.constant 0 : index
      %c0_30 = arith.constant 0 : index
      %52 = vector.load %arg9[%c0_29, %c0_30] : memref<8x32xf32, #tpu.memory_space<vmem>>, vector<8x8xf32>
      %53 = vector.broadcast %39 : vector<8x1xf32> to vector<8x8xf32>
      %54 = arith.mulf %53, %52 : vector<8x8xf32>
      %55 = arith.truncf %42 : vector<8x8xf32> to vector<8x8xbf16>
      %56 = vector.extract_strided_slice %12 {offsets = [0, 0], sizes = [8, 8], strides = [1, 1]} : vector<8x32xbf16> to vector<8x8xbf16>
      %cst_31 = arith.constant dense<0.000000e+00> : vector<8x8xf32>
      %57 = tpu.matmul %55, %56, %cst_31 {dimension_numbers = #tpu.dot_dimension_numbers<[1], [0], [0], [1], [0, 0, 1, 1], [], []>} : vector<8x8xbf16>, vector<8x8xbf16>, vector<8x8xf32> -> vector<8x8xf32>
      %58 = arith.addf %54, %57 : vector<8x8xf32>
      %c0_32 = arith.constant 0 : index
      %c0_33 = arith.constant 0 : index
      %59 = vector.load %arg9[%c0_32, %c0_33] : memref<8x32xf32, #tpu.memory_space<vmem>>, vector<8x8xf32>
      tpu.vector_store %arg9[%c0_32, %c0_33], %58 {strides = array<i32>} : memref<8x32xf32, #tpu.memory_space<vmem>>, vector<8x8xf32>,
      %c0_34 = arith.constant 0 : index
      %c0_35 = arith.constant 0 : index
      %c0_36 = arith.constant 0 : index
      %60 = vector.load %arg7[%c0_34, %c0_35, %c0_36] : memref<4x8x1xf32, #tpu.memory_space<vmem>>, vector<1x8x1xf32>
      %61 = vector.shape_cast %60 : vector<1x8x1xf32> to vector<8x1xf32>
      %62 = vector.shape_cast %37 : vector<8x1xf32> to vector<1x8x1xf32>
      tpu.vector_store %arg7[%c0_34, %c0_35, %c0_36], %62 {strides = array<i32>} : memref<4x8x1xf32, #tpu.memory_space<vmem>>, vector<1x8x1xf32>,
      %63 = vector.extract_strided_slice %8 {offsets = [0, 8], sizes = [8, 8], strides = [1, 1]} : vector<8x32xbf16> to vector<8x8xbf16>
      %64 = vector.extract_strided_slice %10 {offsets = [0, 8], sizes = [8, 8], strides = [1, 1]} : vector<8x32xbf16> to vector<8x8xbf16>
      %cst_37 = arith.constant dense<0.000000e+00> : vector<8x8xf32>
      %65 = tpu.matmul %63, %64, %cst_37 {dimension_numbers = #tpu.dot_dimension_numbers<[1], [1], [0], [0], [0, 0, 1, 0], [], []>} : vector<8x8xbf16>, vector<8x8xbf16>, vector<8x8xf32> -> vector<8x8xf32>
      %c1 = arith.constant 1 : index
      %c0_38 = arith.constant 0 : index
      %c0_39 = arith.constant 0 : index
      %66 = vector.load %arg7[%c1, %c0_38, %c0_39] : memref<4x8x1xf32, #tpu.memory_space<vmem>>, vector<1x8x1xf32>
      %67 = vector.shape_cast %66 : vector<1x8x1xf32> to vector<8x1xf32>
      %cst_40 = arith.constant dense<0xFF800000> : vector<8xf32>
      %68 = vector.multi_reduction <maximumf>, %65, %cst_40 [1] : vector<8x8xf32> to vector<8xf32>
      %69 = vector.shape_cast %68 : vector<8xf32> to vector<8x1xf32>
      %70 = arith.maximumf %67, %69 : vector<8x1xf32>
      %71 = arith.subf %67, %70 : vector<8x1xf32>
      %72 = math.exp %71 : vector<8x1xf32>
      %73 = vector.broadcast %70 : vector<8x1xf32> to vector<8x8xf32>
      %74 = arith.subf %65, %73 : vector<8x8xf32>
      %75 = math.exp %74 : vector<8x8xf32>
      %c1_41 = arith.constant 1 : index
      %c0_42 = arith.constant 0 : index
      %c0_43 = arith.constant 0 : index
      %76 = vector.load %arg8[%c1_41, %c0_42, %c0_43] : memref<4x8x1xf32, #tpu.memory_space<vmem>>, vector<1x8x1xf32>
      %77 = vector.shape_cast %76 : vector<1x8x1xf32> to vector<8x1xf32>
      %78 = arith.mulf %72, %77 : vector<8x1xf32>
      %cst_44 = arith.constant dense<0.000000e+00> : vector<8xf32>
      %79 = vector.multi_reduction <add>, %75, %cst_44 [1] : vector<8x8xf32> to vector<8xf32>
      %80 = vector.shape_cast %79 : vector<8xf32> to vector<8x1xf32>
      %81 = arith.addf %78, %80 : vector<8x1xf32>
      %c1_45 = arith.constant 1 : index
      %c0_46 = arith.constant 0 : index
      %c0_47 = arith.constant 0 : index
      %82 = vector.load %arg8[%c1_45, %c0_46, %c0_47] : memref<4x8x1xf32, #tpu.memory_space<vmem>>, vector<1x8x1xf32>
      %83 = vector.shape_cast %82 : vector<1x8x1xf32> to vector<8x1xf32>
      %84 = vector.shape_cast %81 : vector<8x1xf32> to vector<1x8x1xf32>
      tpu.vector_store %arg8[%c1_45, %c0_46, %c0_47], %84 {strides = array<i32>} : memref<4x8x1xf32, #tpu.memory_space<vmem>>, vector<1x8x1xf32>,
      %c0_48 = arith.constant 0 : index
      %c8 = arith.constant 8 : index
      %85 = vector.load %arg9[%c0_48, %c8] : memref<8x32xf32, #tpu.memory_space<vmem>>, vector<8x8xf32>
      %86 = vector.broadcast %72 : vector<8x1xf32> to vector<8x8xf32>
      %87 = arith.mulf %86, %85 : vector<8x8xf32>
      %88 = arith.truncf %75 : vector<8x8xf32> to vector<8x8xbf16>
      %89 = vector.extract_strided_slice %12 {offsets = [0, 8], sizes = [8, 8], strides = [1, 1]} : vector<8x32xbf16> to vector<8x8xbf16>
      %cst_49 = arith.constant dense<0.000000e+00> : vector<8x8xf32>
      %90 = tpu.matmul %88, %89, %cst_49 {dimension_numbers = #tpu.dot_dimension_numbers<[1], [0], [0], [1], [0, 0, 1, 1], [], []>} : vector<8x8xbf16>, vector<8x8xbf16>, vector<8x8xf32> -> vector<8x8xf32>
      %91 = arith.addf %87, %90 : vector<8x8xf32>
      %c0_50 = arith.constant 0 : index
      %c8_51 = arith.constant 8 : index
      %92 = vector.load %arg9[%c0_50, %c8_51] : memref<8x32xf32, #tpu.memory_space<vmem>>, vector<8x8xf32>
      tpu.vector_store %arg9[%c0_50, %c8_51], %91 {strides = array<i32>} : memref<8x32xf32, #tpu.memory_space<vmem>>, vector<8x8xf32>,
      %c1_52 = arith.constant 1 : index
      %c0_53 = arith.constant 0 : index
      %c0_54 = arith.constant 0 : index
      %93 = vector.load %arg7[%c1_52, %c0_53, %c0_54] : memref<4x8x1xf32, #tpu.memory_space<vmem>>, vector<1x8x1xf32>
      %94 = vector.shape_cast %93 : vector<1x8x1xf32> to vector<8x1xf32>
      %95 = vector.shape_cast %70 : vector<8x1xf32> to vector<1x8x1xf32>
      tpu.vector_store %arg7[%c1_52, %c0_53, %c0_54], %95 {strides = array<i32>} : memref<4x8x1xf32, #tpu.memory_space<vmem>>, vector<1x8x1xf32>,
      %96 = vector.extract_strided_slice %8 {offsets = [0, 16], sizes = [8, 8], strides = [1, 1]} : vector<8x32xbf16> to vector<8x8xbf16>
      %97 = vector.extract_strided_slice %10 {offsets = [0, 16], sizes = [8, 8], strides = [1, 1]} : vector<8x32xbf16> to vector<8x8xbf16>
      %cst_55 = arith.constant dense<0.000000e+00> : vector<8x8xf32>
      %98 = tpu.matmul %96, %97, %cst_55 {dimension_numbers = #tpu.dot_dimension_numbers<[1], [1], [0], [0], [0, 0, 1, 0], [], []>} : vector<8x8xbf16>, vector<8x8xbf16>, vector<8x8xf32> -> vector<8x8xf32>
      %c2 = arith.constant 2 : index
      %c0_56 = arith.constant 0 : index
      %c0_57 = arith.constant 0 : index
      %99 = vector.load %arg7[%c2, %c0_56, %c0_57] : memref<4x8x1xf32, #tpu.memory_space<vmem>>, vector<1x8x1xf32>
      %100 = vector.shape_cast %99 : vector<1x8x1xf32> to vector<8x1xf32>
      %cst_58 = arith.constant dense<0xFF800000> : vector<8xf32>
      %101 = vector.multi_reduction <maximumf>, %98, %cst_58 [1] : vector<8x8xf32> to vector<8xf32>
      %102 = vector.shape_cast %101 : vector<8xf32> to vector<8x1xf32>
      %103 = arith.maximumf %100, %102 : vector<8x1xf32>
      %104 = arith.subf %100, %103 : vector<8x1xf32>
      %105 = math.exp %104 : vector<8x1xf32>
      %106 = vector.broadcast %103 : vector<8x1xf32> to vector<8x8xf32>
      %107 = arith.subf %98, %106 : vector<8x8xf32>
      %108 = math.exp %107 : vector<8x8xf32>
      %c2_59 = arith.constant 2 : index
      %c0_60 = arith.constant 0 : index
      %c0_61 = arith.constant 0 : index
      %109 = vector.load %arg8[%c2_59, %c0_60, %c0_61] : memref<4x8x1xf32, #tpu.memory_space<vmem>>, vector<1x8x1xf32>
      %110 = vector.shape_cast %109 : vector<1x8x1xf32> to vector<8x1xf32>
      %111 = arith.mulf %105, %110 : vector<8x1xf32>
      %cst_62 = arith.constant dense<0.000000e+00> : vector<8xf32>
      %112 = vector.multi_reduction <add>, %108, %cst_62 [1] : vector<8x8xf32> to vector<8xf32>
      %113 = vector.shape_cast %112 : vector<8xf32> to vector<8x1xf32>
      %114 = arith.addf %111, %113 : vector<8x1xf32>
      %c2_63 = arith.constant 2 : index
      %c0_64 = arith.constant 0 : index
      %c0_65 = arith.constant 0 : index
      %115 = vector.load %arg8[%c2_63, %c0_64, %c0_65] : memref<4x8x1xf32, #tpu.memory_space<vmem>>, vector<1x8x1xf32>
      %116 = vector.shape_cast %115 : vector<1x8x1xf32> to vector<8x1xf32>
      %117 = vector.shape_cast %114 : vector<8x1xf32> to vector<1x8x1xf32>
      tpu.vector_store %arg8[%c2_63, %c0_64, %c0_65], %117 {strides = array<i32>} : memref<4x8x1xf32, #tpu.memory_space<vmem>>, vector<1x8x1xf32>,
      %c0_66 = arith.constant 0 : index
      %c16 = arith.constant 16 : index
      %118 = vector.load %arg9[%c0_66, %c16] : memref<8x32xf32, #tpu.memory_space<vmem>>, vector<8x8xf32>
      %119 = vector.broadcast %105 : vector<8x1xf32> to vector<8x8xf32>
      %120 = arith.mulf %119, %118 : vector<8x8xf32>
      %121 = arith.truncf %108 : vector<8x8xf32> to vector<8x8xbf16>
      %122 = vector.extract_strided_slice %12 {offsets = [0, 16], sizes = [8, 8], strides = [1, 1]} : vector<8x32xbf16> to vector<8x8xbf16>
      %cst_67 = arith.constant dense<0.000000e+00> : vector<8x8xf32>
      %123 = tpu.matmul %121, %122, %cst_67 {dimension_numbers = #tpu.dot_dimension_numbers<[1], [0], [0], [1], [0, 0, 1, 1], [], []>} : vector<8x8xbf16>, vector<8x8xbf16>, vector<8x8xf32> -> vector<8x8xf32>
      %124 = arith.addf %120, %123 : vector<8x8xf32>
      %c0_68 = arith.constant 0 : index
      %c16_69 = arith.constant 16 : index
      %125 = vector.load %arg9[%c0_68, %c16_69] : memref<8x32xf32, #tpu.memory_space<vmem>>, vector<8x8xf32>
      tpu.vector_store %arg9[%c0_68, %c16_69], %124 {strides = array<i32>} : memref<8x32xf32, #tpu.memory_space<vmem>>, vector<8x8xf32>,
      %c2_70 = arith.constant 2 : index
      %c0_71 = arith.constant 0 : index
      %c0_72 = arith.constant 0 : index
      %126 = vector.load %arg7[%c2_70, %c0_71, %c0_72] : memref<4x8x1xf32, #tpu.memory_space<vmem>>, vector<1x8x1xf32>
      %127 = vector.shape_cast %126 : vector<1x8x1xf32> to vector<8x1xf32>
      %128 = vector.shape_cast %103 : vector<8x1xf32> to vector<1x8x1xf32>
      tpu.vector_store %arg7[%c2_70, %c0_71, %c0_72], %128 {strides = array<i32>} : memref<4x8x1xf32, #tpu.memory_space<vmem>>, vector<1x8x1xf32>,
      %129 = vector.extract_strided_slice %8 {offsets = [0, 24], sizes = [8, 8], strides = [1, 1]} : vector<8x32xbf16> to vector<8x8xbf16>
      %130 = vector.extract_strided_slice %10 {offsets = [0, 24], sizes = [8, 8], strides = [1, 1]} : vector<8x32xbf16> to vector<8x8xbf16>
      %cst_73 = arith.constant dense<0.000000e+00> : vector<8x8xf32>
      %131 = tpu.matmul %129, %130, %cst_73 {dimension_numbers = #tpu.dot_dimension_numbers<[1], [1], [0], [0], [0, 0, 1, 0], [], []>} : vector<8x8xbf16>, vector<8x8xbf16>, vector<8x8xf32> -> vector<8x8xf32>
      %c3 = arith.constant 3 : index
      %c0_74 = arith.constant 0 : index
      %c0_75 = arith.constant 0 : index
      %132 = vector.load %arg7[%c3, %c0_74, %c0_75] : memref<4x8x1xf32, #tpu.memory_space<vmem>>, vector<1x8x1xf32>
      %133 = vector.shape_cast %132 : vector<1x8x1xf32> to vector<8x1xf32>
      %cst_76 = arith.constant dense<0xFF800000> : vector<8xf32>
      %134 = vector.multi_reduction <maximumf>, %131, %cst_76 [1] : vector<8x8xf32> to vector<8xf32>
      %135 = vector.shape_cast %134 : vector<8xf32> to vector<8x1xf32>
      %136 = arith.maximumf %133, %135 : vector<8x1xf32>
      %137 = arith.subf %133, %136 : vector<8x1xf32>
      %138 = math.exp %137 : vector<8x1xf32>
      %139 = vector.broadcast %136 : vector<8x1xf32> to vector<8x8xf32>
      %140 = arith.subf %131, %139 : vector<8x8xf32>
      %141 = math.exp %140 : vector<8x8xf32>
      %c3_77 = arith.constant 3 : index
      %c0_78 = arith.constant 0 : index
      %c0_79 = arith.constant 0 : index
      %142 = vector.load %arg8[%c3_77, %c0_78, %c0_79] : memref<4x8x1xf32, #tpu.memory_space<vmem>>, vector<1x8x1xf32>
      %143 = vector.shape_cast %142 : vector<1x8x1xf32> to vector<8x1xf32>
      %144 = arith.mulf %138, %143 : vector<8x1xf32>
      %cst_80 = arith.constant dense<0.000000e+00> : vector<8xf32>
      %145 = vector.multi_reduction <add>, %141, %cst_80 [1] : vector<8x8xf32> to vector<8xf32>
      %146 = vector.shape_cast %145 : vector<8xf32> to vector<8x1xf32>
      %147 = arith.addf %144, %146 : vector<8x1xf32>
      %c3_81 = arith.constant 3 : index
      %c0_82 = arith.constant 0 : index
      %c0_83 = arith.constant 0 : index
      %148 = vector.load %arg8[%c3_81, %c0_82, %c0_83] : memref<4x8x1xf32, #tpu.memory_space<vmem>>, vector<1x8x1xf32>
      %149 = vector.shape_cast %148 : vector<1x8x1xf32> to vector<8x1xf32>
      %150 = vector.shape_cast %147 : vector<8x1xf32> to vector<1x8x1xf32>
      tpu.vector_store %arg8[%c3_81, %c0_82, %c0_83], %150 {strides = array<i32>} : memref<4x8x1xf32, #tpu.memory_space<vmem>>, vector<1x8x1xf32>,
      %c0_84 = arith.constant 0 : index
      %c24 = arith.constant 24 : index
      %151 = vector.load %arg9[%c0_84, %c24] : memref<8x32xf32, #tpu.memory_space<vmem>>, vector<8x8xf32>
      %152 = vector.broadcast %138 : vector<8x1xf32> to vector<8x8xf32>
      %153 = arith.mulf %152, %151 : vector<8x8xf32>
      %154 = arith.truncf %141 : vector<8x8xf32> to vector<8x8xbf16>
      %155 = vector.extract_strided_slice %12 {offsets = [0, 24], sizes = [8, 8], strides = [1, 1]} : vector<8x32xbf16> to vector<8x8xbf16>
      %cst_85 = arith.constant dense<0.000000e+00> : vector<8x8xf32>
      %156 = tpu.matmul %154, %155, %cst_85 {dimension_numbers = #tpu.dot_dimension_numbers<[1], [0], [0], [1], [0, 0, 1, 1], [], []>} : vector<8x8xbf16>, vector<8x8xbf16>, vector<8x8xf32> -> vector<8x8xf32>
      %157 = arith.addf %153, %156 : vector<8x8xf32>
      %c0_86 = arith.constant 0 : index
      %c24_87 = arith.constant 24 : index
      %158 = vector.load %arg9[%c0_86, %c24_87] : memref<8x32xf32, #tpu.memory_space<vmem>>, vector<8x8xf32>
      tpu.vector_store %arg9[%c0_86, %c24_87], %157 {strides = array<i32>} : memref<8x32xf32, #tpu.memory_space<vmem>>, vector<8x8xf32>,
      %c3_88 = arith.constant 3 : index
      %c0_89 = arith.constant 0 : index
      %c0_90 = arith.constant 0 : index
      %159 = vector.load %arg7[%c3_88, %c0_89, %c0_90] : memref<4x8x1xf32, #tpu.memory_space<vmem>>, vector<1x8x1xf32>
      %160 = vector.shape_cast %159 : vector<1x8x1xf32> to vector<8x1xf32>
      %161 = vector.shape_cast %136 : vector<8x1xf32> to vector<1x8x1xf32>
      tpu.vector_store %arg7[%c3_88, %c0_89, %c0_90], %161 {strides = array<i32>} : memref<4x8x1xf32, #tpu.memory_space<vmem>>, vector<1x8x1xf32>,
    } else {
    }
    %true = arith.constant true
    %23 = arith.xori %17, %true : i1
    %24 = arith.andi %20, %23 : i1
    %25 = arith.extui %24 : i1 to i32
    %c0_i32_14 = arith.constant 0 : i32
    %26 = arith.cmpi ne, %25, %c0_i32_14 : i32
    scf.if %26 {
      %30 = tpu.iota {dimensions = array<i32: 0>} : vector<8x8xi32>
      %31 = vector.broadcast %13 : i32 to vector<8x8xi32>
      %32 = arith.addi %31, %30 : vector<8x8xi32>
      %33 = tpu.iota {dimensions = array<i32: 1>} : vector<8x8xi32>
      %34 = vector.broadcast %14 : i32 to vector<8x8xi32>
      %35 = arith.addi %34, %33 : vector<8x8xi32>
      %36 = arith.cmpi sge, %32, %35 : vector<8x8xi32>
      %cst_17 = arith.constant 0.000000e+00 : f32
      %cst_18 = arith.constant -1.000000e+30 : f32
      %37 = vector.broadcast %cst_17 : f32 to vector<8x8xf32>
      %38 = vector.broadcast %cst_18 : f32 to vector<8x8xf32>
      %39 = arith.select %36, %37, %38 : vector<8x8xi1>, vector<8x8xf32>
      %40 = vector.extract_strided_slice %8 {offsets = [0, 0], sizes = [8, 8], strides = [1, 1]} : vector<8x32xbf16> to vector<8x8xbf16>
      %41 = vector.extract_strided_slice %10 {offsets = [0, 0], sizes = [8, 8], strides = [1, 1]} : vector<8x32xbf16> to vector<8x8xbf16>
      %cst_19 = arith.constant dense<0.000000e+00> : vector<8x8xf32>
      %42 = tpu.matmul %40, %41, %cst_19 {dimension_numbers = #tpu.dot_dimension_numbers<[1], [1], [0], [0], [0, 0, 1, 0], [], []>} : vector<8x8xbf16>, vector<8x8xbf16>, vector<8x8xf32> -> vector<8x8xf32>
      %43 = arith.addf %42, %39 : vector<8x8xf32>
      %c0_20 = arith.constant 0 : index
      %c0_21 = arith.constant 0 : index
      %c0_22 = arith.constant 0 : index
      %44 = vector.load %arg7[%c0_20, %c0_21, %c0_22] : memref<4x8x1xf32, #tpu.memory_space<vmem>>, vector<1x8x1xf32>
      %45 = vector.shape_cast %44 : vector<1x8x1xf32> to vector<8x1xf32>
      %cst_23 = arith.constant dense<0xFF800000> : vector<8xf32>
      %46 = vector.multi_reduction <maximumf>, %43, %cst_23 [1] : vector<8x8xf32> to vector<8xf32>
      %47 = vector.shape_cast %46 : vector<8xf32> to vector<8x1xf32>
      %48 = arith.maximumf %45, %47 : vector<8x1xf32>
      %49 = arith.subf %45, %48 : vector<8x1xf32>
      %50 = math.exp %49 : vector<8x1xf32>
      %51 = vector.broadcast %48 : vector<8x1xf32> to vector<8x8xf32>
      %52 = arith.subf %43, %51 : vector<8x8xf32>
      %53 = math.exp %52 : vector<8x8xf32>
      %c0_24 = arith.constant 0 : index
      %c0_25 = arith.constant 0 : index
      %c0_26 = arith.constant 0 : index
      %54 = vector.load %arg8[%c0_24, %c0_25, %c0_26] : memref<4x8x1xf32, #tpu.memory_space<vmem>>, vector<1x8x1xf32>
      %55 = vector.shape_cast %54 : vector<1x8x1xf32> to vector<8x1xf32>
      %56 = arith.mulf %50, %55 : vector<8x1xf32>
      %cst_27 = arith.constant dense<0.000000e+00> : vector<8xf32>
      %57 = vector.multi_reduction <add>, %53, %cst_27 [1] : vector<8x8xf32> to vector<8xf32>
      %58 = vector.shape_cast %57 : vector<8xf32> to vector<8x1xf32>
      %59 = arith.addf %56, %58 : vector<8x1xf32>
      %c0_28 = arith.constant 0 : index
      %c0_29 = arith.constant 0 : index
      %c0_30 = arith.constant 0 : index
      %60 = vector.load %arg8[%c0_28, %c0_29, %c0_30] : memref<4x8x1xf32, #tpu.memory_space<vmem>>, vector<1x8x1xf32>
      %61 = vector.shape_cast %60 : vector<1x8x1xf32> to vector<8x1xf32>
      %62 = vector.shape_cast %59 : vector<8x1xf32> to vector<1x8x1xf32>
      tpu.vector_store %arg8[%c0_28, %c0_29, %c0_30], %62 {strides = array<i32>} : memref<4x8x1xf32, #tpu.memory_space<vmem>>, vector<1x8x1xf32>,
      %c0_31 = arith.constant 0 : index
      %c0_32 = arith.constant 0 : index
      %63 = vector.load %arg9[%c0_31, %c0_32] : memref<8x32xf32, #tpu.memory_space<vmem>>, vector<8x8xf32>
      %64 = vector.broadcast %50 : vector<8x1xf32> to vector<8x8xf32>
      %65 = arith.mulf %64, %63 : vector<8x8xf32>
      %66 = arith.truncf %53 : vector<8x8xf32> to vector<8x8xbf16>
      %67 = vector.extract_strided_slice %12 {offsets = [0, 0], sizes = [8, 8], strides = [1, 1]} : vector<8x32xbf16> to vector<8x8xbf16>
      %cst_33 = arith.constant dense<0.000000e+00> : vector<8x8xf32>
      %68 = tpu.matmul %66, %67, %cst_33 {dimension_numbers = #tpu.dot_dimension_numbers<[1], [0], [0], [1], [0, 0, 1, 1], [], []>} : vector<8x8xbf16>, vector<8x8xbf16>, vector<8x8xf32> -> vector<8x8xf32>
      %69 = arith.addf %65, %68 : vector<8x8xf32>
      %c0_34 = arith.constant 0 : index
      %c0_35 = arith.constant 0 : index
      %70 = vector.load %arg9[%c0_34, %c0_35] : memref<8x32xf32, #tpu.memory_space<vmem>>, vector<8x8xf32>
      tpu.vector_store %arg9[%c0_34, %c0_35], %69 {strides = array<i32>} : memref<8x32xf32, #tpu.memory_space<vmem>>, vector<8x8xf32>,
      %c0_36 = arith.constant 0 : index
      %c0_37 = arith.constant 0 : index
      %c0_38 = arith.constant 0 : index
      %71 = vector.load %arg7[%c0_36, %c0_37, %c0_38] : memref<4x8x1xf32, #tpu.memory_space<vmem>>, vector<1x8x1xf32>
      %72 = vector.shape_cast %71 : vector<1x8x1xf32> to vector<8x1xf32>
      %73 = vector.shape_cast %48 : vector<8x1xf32> to vector<1x8x1xf32>
      tpu.vector_store %arg7[%c0_36, %c0_37, %c0_38], %73 {strides = array<i32>} : memref<4x8x1xf32, #tpu.memory_space<vmem>>, vector<1x8x1xf32>,
      %74 = vector.extract_strided_slice %8 {offsets = [0, 8], sizes = [8, 8], strides = [1, 1]} : vector<8x32xbf16> to vector<8x8xbf16>
      %75 = vector.extract_strided_slice %10 {offsets = [0, 8], sizes = [8, 8], strides = [1, 1]} : vector<8x32xbf16> to vector<8x8xbf16>
      %cst_39 = arith.constant dense<0.000000e+00> : vector<8x8xf32>
      %76 = tpu.matmul %74, %75, %cst_39 {dimension_numbers = #tpu.dot_dimension_numbers<[1], [1], [0], [0], [0, 0, 1, 0], [], []>} : vector<8x8xbf16>, vector<8x8xbf16>, vector<8x8xf32> -> vector<8x8xf32>
      %77 = arith.addf %76, %39 : vector<8x8xf32>
      %c1 = arith.constant 1 : index
      %c0_40 = arith.constant 0 : index
      %c0_41 = arith.constant 0 : index
      %78 = vector.load %arg7[%c1, %c0_40, %c0_41] : memref<4x8x1xf32, #tpu.memory_space<vmem>>, vector<1x8x1xf32>
      %79 = vector.shape_cast %78 : vector<1x8x1xf32> to vector<8x1xf32>
      %cst_42 = arith.constant dense<0xFF800000> : vector<8xf32>
      %80 = vector.multi_reduction <maximumf>, %77, %cst_42 [1] : vector<8x8xf32> to vector<8xf32>
      %81 = vector.shape_cast %80 : vector<8xf32> to vector<8x1xf32>
      %82 = arith.maximumf %79, %81 : vector<8x1xf32>
      %83 = arith.subf %79, %82 : vector<8x1xf32>
      %84 = math.exp %83 : vector<8x1xf32>
      %85 = vector.broadcast %82 : vector<8x1xf32> to vector<8x8xf32>
      %86 = arith.subf %77, %85 : vector<8x8xf32>
      %87 = math.exp %86 : vector<8x8xf32>
      %c1_43 = arith.constant 1 : index
      %c0_44 = arith.constant 0 : index
      %c0_45 = arith.constant 0 : index
      %88 = vector.load %arg8[%c1_43, %c0_44, %c0_45] : memref<4x8x1xf32, #tpu.memory_space<vmem>>, vector<1x8x1xf32>
      %89 = vector.shape_cast %88 : vector<1x8x1xf32> to vector<8x1xf32>
      %90 = arith.mulf %84, %89 : vector<8x1xf32>
      %cst_46 = arith.constant dense<0.000000e+00> : vector<8xf32>
      %91 = vector.multi_reduction <add>, %87, %cst_46 [1] : vector<8x8xf32> to vector<8xf32>
      %92 = vector.shape_cast %91 : vector<8xf32> to vector<8x1xf32>
      %93 = arith.addf %90, %92 : vector<8x1xf32>
      %c1_47 = arith.constant 1 : index
      %c0_48 = arith.constant 0 : index
      %c0_49 = arith.constant 0 : index
      %94 = vector.load %arg8[%c1_47, %c0_48, %c0_49] : memref<4x8x1xf32, #tpu.memory_space<vmem>>, vector<1x8x1xf32>
      %95 = vector.shape_cast %94 : vector<1x8x1xf32> to vector<8x1xf32>
      %96 = vector.shape_cast %93 : vector<8x1xf32> to vector<1x8x1xf32>
      tpu.vector_store %arg8[%c1_47, %c0_48, %c0_49], %96 {strides = array<i32>} : memref<4x8x1xf32, #tpu.memory_space<vmem>>, vector<1x8x1xf32>,
      %c0_50 = arith.constant 0 : index
      %c8 = arith.constant 8 : index
      %97 = vector.load %arg9[%c0_50, %c8] : memref<8x32xf32, #tpu.memory_space<vmem>>, vector<8x8xf32>
      %98 = vector.broadcast %84 : vector<8x1xf32> to vector<8x8xf32>
      %99 = arith.mulf %98, %97 : vector<8x8xf32>
      %100 = arith.truncf %87 : vector<8x8xf32> to vector<8x8xbf16>
      %101 = vector.extract_strided_slice %12 {offsets = [0, 8], sizes = [8, 8], strides = [1, 1]} : vector<8x32xbf16> to vector<8x8xbf16>
      %cst_51 = arith.constant dense<0.000000e+00> : vector<8x8xf32>
      %102 = tpu.matmul %100, %101, %cst_51 {dimension_numbers = #tpu.dot_dimension_numbers<[1], [0], [0], [1], [0, 0, 1, 1], [], []>} : vector<8x8xbf16>, vector<8x8xbf16>, vector<8x8xf32> -> vector<8x8xf32>
      %103 = arith.addf %99, %102 : vector<8x8xf32>
      %c0_52 = arith.constant 0 : index
      %c8_53 = arith.constant 8 : index
      %104 = vector.load %arg9[%c0_52, %c8_53] : memref<8x32xf32, #tpu.memory_space<vmem>>, vector<8x8xf32>
      tpu.vector_store %arg9[%c0_52, %c8_53], %103 {strides = array<i32>} : memref<8x32xf32, #tpu.memory_space<vmem>>, vector<8x8xf32>,
      %c1_54 = arith.constant 1 : index
      %c0_55 = arith.constant 0 : index
      %c0_56 = arith.constant 0 : index
      %105 = vector.load %arg7[%c1_54, %c0_55, %c0_56] : memref<4x8x1xf32, #tpu.memory_space<vmem>>, vector<1x8x1xf32>
      %106 = vector.shape_cast %105 : vector<1x8x1xf32> to vector<8x1xf32>
      %107 = vector.shape_cast %82 : vector<8x1xf32> to vector<1x8x1xf32>
      tpu.vector_store %arg7[%c1_54, %c0_55, %c0_56], %107 {strides = array<i32>} : memref<4x8x1xf32, #tpu.memory_space<vmem>>, vector<1x8x1xf32>,
      %108 = vector.extract_strided_slice %8 {offsets = [0, 16], sizes = [8, 8], strides = [1, 1]} : vector<8x32xbf16> to vector<8x8xbf16>
      %109 = vector.extract_strided_slice %10 {offsets = [0, 16], sizes = [8, 8], strides = [1, 1]} : vector<8x32xbf16> to vector<8x8xbf16>
      %cst_57 = arith.constant dense<0.000000e+00> : vector<8x8xf32>
      %110 = tpu.matmul %108, %109, %cst_57 {dimension_numbers = #tpu.dot_dimension_numbers<[1], [1], [0], [0], [0, 0, 1, 0], [], []>} : vector<8x8xbf16>, vector<8x8xbf16>, vector<8x8xf32> -> vector<8x8xf32>
      %111 = arith.addf %110, %39 : vector<8x8xf32>
      %c2 = arith.constant 2 : index
      %c0_58 = arith.constant 0 : index
      %c0_59 = arith.constant 0 : index
      %112 = vector.load %arg7[%c2, %c0_58, %c0_59] : memref<4x8x1xf32, #tpu.memory_space<vmem>>, vector<1x8x1xf32>
      %113 = vector.shape_cast %112 : vector<1x8x1xf32> to vector<8x1xf32>
      %cst_60 = arith.constant dense<0xFF800000> : vector<8xf32>
      %114 = vector.multi_reduction <maximumf>, %111, %cst_60 [1] : vector<8x8xf32> to vector<8xf32>
      %115 = vector.shape_cast %114 : vector<8xf32> to vector<8x1xf32>
      %116 = arith.maximumf %113, %115 : vector<8x1xf32>
      %117 = arith.subf %113, %116 : vector<8x1xf32>
      %118 = math.exp %117 : vector<8x1xf32>
      %119 = vector.broadcast %116 : vector<8x1xf32> to vector<8x8xf32>
      %120 = arith.subf %111, %119 : vector<8x8xf32>
      %121 = math.exp %120 : vector<8x8xf32>
      %c2_61 = arith.constant 2 : index
      %c0_62 = arith.constant 0 : index
      %c0_63 = arith.constant 0 : index
      %122 = vector.load %arg8[%c2_61, %c0_62, %c0_63] : memref<4x8x1xf32, #tpu.memory_space<vmem>>, vector<1x8x1xf32>
      %123 = vector.shape_cast %122 : vector<1x8x1xf32> to vector<8x1xf32>
      %124 = arith.mulf %118, %123 : vector<8x1xf32>
      %cst_64 = arith.constant dense<0.000000e+00> : vector<8xf32>
      %125 = vector.multi_reduction <add>, %121, %cst_64 [1] : vector<8x8xf32> to vector<8xf32>
      %126 = vector.shape_cast %125 : vector<8xf32> to vector<8x1xf32>
      %127 = arith.addf %124, %126 : vector<8x1xf32>
      %c2_65 = arith.constant 2 : index
      %c0_66 = arith.constant 0 : index
      %c0_67 = arith.constant 0 : index
      %128 = vector.load %arg8[%c2_65, %c0_66, %c0_67] : memref<4x8x1xf32, #tpu.memory_space<vmem>>, vector<1x8x1xf32>
      %129 = vector.shape_cast %128 : vector<1x8x1xf32> to vector<8x1xf32>
      %130 = vector.shape_cast %127 : vector<8x1xf32> to vector<1x8x1xf32>
      tpu.vector_store %arg8[%c2_65, %c0_66, %c0_67], %130 {strides = array<i32>} : memref<4x8x1xf32, #tpu.memory_space<vmem>>, vector<1x8x1xf32>,
      %c0_68 = arith.constant 0 : index
      %c16 = arith.constant 16 : index
      %131 = vector.load %arg9[%c0_68, %c16] : memref<8x32xf32, #tpu.memory_space<vmem>>, vector<8x8xf32>
      %132 = vector.broadcast %118 : vector<8x1xf32> to vector<8x8xf32>
      %133 = arith.mulf %132, %131 : vector<8x8xf32>
      %134 = arith.truncf %121 : vector<8x8xf32> to vector<8x8xbf16>
      %135 = vector.extract_strided_slice %12 {offsets = [0, 16], sizes = [8, 8], strides = [1, 1]} : vector<8x32xbf16> to vector<8x8xbf16>
      %cst_69 = arith.constant dense<0.000000e+00> : vector<8x8xf32>
      %136 = tpu.matmul %134, %135, %cst_69 {dimension_numbers = #tpu.dot_dimension_numbers<[1], [0], [0], [1], [0, 0, 1, 1], [], []>} : vector<8x8xbf16>, vector<8x8xbf16>, vector<8x8xf32> -> vector<8x8xf32>
      %137 = arith.addf %133, %136 : vector<8x8xf32>
      %c0_70 = arith.constant 0 : index
      %c16_71 = arith.constant 16 : index
      %138 = vector.load %arg9[%c0_70, %c16_71] : memref<8x32xf32, #tpu.memory_space<vmem>>, vector<8x8xf32>
      tpu.vector_store %arg9[%c0_70, %c16_71], %137 {strides = array<i32>} : memref<8x32xf32, #tpu.memory_space<vmem>>, vector<8x8xf32>,
      %c2_72 = arith.constant 2 : index
      %c0_73 = arith.constant 0 : index
      %c0_74 = arith.constant 0 : index
      %139 = vector.load %arg7[%c2_72, %c0_73, %c0_74] : memref<4x8x1xf32, #tpu.memory_space<vmem>>, vector<1x8x1xf32>
      %140 = vector.shape_cast %139 : vector<1x8x1xf32> to vector<8x1xf32>
      %141 = vector.shape_cast %116 : vector<8x1xf32> to vector<1x8x1xf32>
      tpu.vector_store %arg7[%c2_72, %c0_73, %c0_74], %141 {strides = array<i32>} : memref<4x8x1xf32, #tpu.memory_space<vmem>>, vector<1x8x1xf32>,
      %142 = vector.extract_strided_slice %8 {offsets = [0, 24], sizes = [8, 8], strides = [1, 1]} : vector<8x32xbf16> to vector<8x8xbf16>
      %143 = vector.extract_strided_slice %10 {offsets = [0, 24], sizes = [8, 8], strides = [1, 1]} : vector<8x32xbf16> to vector<8x8xbf16>
      %cst_75 = arith.constant dense<0.000000e+00> : vector<8x8xf32>
      %144 = tpu.matmul %142, %143, %cst_75 {dimension_numbers = #tpu.dot_dimension_numbers<[1], [1], [0], [0], [0, 0, 1, 0], [], []>} : vector<8x8xbf16>, vector<8x8xbf16>, vector<8x8xf32> -> vector<8x8xf32>
      %145 = arith.addf %144, %39 : vector<8x8xf32>
      %c3 = arith.constant 3 : index
      %c0_76 = arith.constant 0 : index
      %c0_77 = arith.constant 0 : index
      %146 = vector.load %arg7[%c3, %c0_76, %c0_77] : memref<4x8x1xf32, #tpu.memory_space<vmem>>, vector<1x8x1xf32>
      %147 = vector.shape_cast %146 : vector<1x8x1xf32> to vector<8x1xf32>
      %cst_78 = arith.constant dense<0xFF800000> : vector<8xf32>
      %148 = vector.multi_reduction <maximumf>, %145, %cst_78 [1] : vector<8x8xf32> to vector<8xf32>
      %149 = vector.shape_cast %148 : vector<8xf32> to vector<8x1xf32>
      %150 = arith.maximumf %147, %149 : vector<8x1xf32>
      %151 = arith.subf %147, %150 : vector<8x1xf32>
      %152 = math.exp %151 : vector<8x1xf32>
      %153 = vector.broadcast %150 : vector<8x1xf32> to vector<8x8xf32>
      %154 = arith.subf %145, %153 : vector<8x8xf32>
      %155 = math.exp %154 : vector<8x8xf32>
      %c3_79 = arith.constant 3 : index
      %c0_80 = arith.constant 0 : index
      %c0_81 = arith.constant 0 : index
      %156 = vector.load %arg8[%c3_79, %c0_80, %c0_81] : memref<4x8x1xf32, #tpu.memory_space<vmem>>, vector<1x8x1xf32>
      %157 = vector.shape_cast %156 : vector<1x8x1xf32> to vector<8x1xf32>
      %158 = arith.mulf %152, %157 : vector<8x1xf32>
      %cst_82 = arith.constant dense<0.000000e+00> : vector<8xf32>
      %159 = vector.multi_reduction <add>, %155, %cst_82 [1] : vector<8x8xf32> to vector<8xf32>
      %160 = vector.shape_cast %159 : vector<8xf32> to vector<8x1xf32>
      %161 = arith.addf %158, %160 : vector<8x1xf32>
      %c3_83 = arith.constant 3 : index
      %c0_84 = arith.constant 0 : index
      %c0_85 = arith.constant 0 : index
      %162 = vector.load %arg8[%c3_83, %c0_84, %c0_85] : memref<4x8x1xf32, #tpu.memory_space<vmem>>, vector<1x8x1xf32>
      %163 = vector.shape_cast %162 : vector<1x8x1xf32> to vector<8x1xf32>
      %164 = vector.shape_cast %161 : vector<8x1xf32> to vector<1x8x1xf32>
      tpu.vector_store %arg8[%c3_83, %c0_84, %c0_85], %164 {strides = array<i32>} : memref<4x8x1xf32, #tpu.memory_space<vmem>>, vector<1x8x1xf32>,
      %c0_86 = arith.constant 0 : index
      %c24 = arith.constant 24 : index
      %165 = vector.load %arg9[%c0_86, %c24] : memref<8x32xf32, #tpu.memory_space<vmem>>, vector<8x8xf32>
      %166 = vector.broadcast %152 : vector<8x1xf32> to vector<8x8xf32>
      %167 = arith.mulf %166, %165 : vector<8x8xf32>
      %168 = arith.truncf %155 : vector<8x8xf32> to vector<8x8xbf16>
      %169 = vector.extract_strided_slice %12 {offsets = [0, 24], sizes = [8, 8], strides = [1, 1]} : vector<8x32xbf16> to vector<8x8xbf16>
      %cst_87 = arith.constant dense<0.000000e+00> : vector<8x8xf32>
      %170 = tpu.matmul %168, %169, %cst_87 {dimension_numbers = #tpu.dot_dimension_numbers<[1], [0], [0], [1], [0, 0, 1, 1], [], []>} : vector<8x8xbf16>, vector<8x8xbf16>, vector<8x8xf32> -> vector<8x8xf32>
      %171 = arith.addf %167, %170 : vector<8x8xf32>
      %c0_88 = arith.constant 0 : index
      %c24_89 = arith.constant 24 : index
      %172 = vector.load %arg9[%c0_88, %c24_89] : memref<8x32xf32, #tpu.memory_space<vmem>>, vector<8x8xf32>
      tpu.vector_store %arg9[%c0_88, %c24_89], %171 {strides = array<i32>} : memref<8x32xf32, #tpu.memory_space<vmem>>, vector<8x8xf32>,
      %c3_90 = arith.constant 3 : index
      %c0_91 = arith.constant 0 : index
      %c0_92 = arith.constant 0 : index
      %173 = vector.load %arg7[%c3_90, %c0_91, %c0_92] : memref<4x8x1xf32, #tpu.memory_space<vmem>>, vector<1x8x1xf32>
      %174 = vector.shape_cast %173 : vector<1x8x1xf32> to vector<8x1xf32>
      %175 = vector.shape_cast %150 : vector<8x1xf32> to vector<1x8x1xf32>
      tpu.vector_store %arg7[%c3_90, %c0_91, %c0_92], %175 {strides = array<i32>} : memref<4x8x1xf32, #tpu.memory_space<vmem>>, vector<1x8x1xf32>,
    } else {
    }
    %c0_i32_15 = arith.constant 0 : i32
    %27 = arith.cmpi eq, %arg2, %c0_i32_15 : i32
    %28 = arith.extui %27 : i1 to i32
    %c0_i32_16 = arith.constant 0 : i32
    %29 = arith.cmpi ne, %28, %c0_i32_16 : i32
    scf.if %29 {
      %c0_17 = arith.constant 0 : index
      %c0_18 = arith.constant 0 : index
      %c0_19 = arith.constant 0 : index
      %30 = vector.load %arg8[%c0_17, %c0_18, %c0_19] : memref<4x8x1xf32, #tpu.memory_space<vmem>>, vector<1x8x1xf32>
      %31 = vector.shape_cast %30 : vector<1x8x1xf32> to vector<8x1xf32>
      %32 = tpu.reciprocal %31 {approx = true} : vector<8x1xf32> -> vector<8x1xf32>
      %33 = vector.shape_cast %32 : vector<8x1xf32> to vector<8x1xf32>
      %34 = vector.broadcast %33 : vector<8x1xf32> to vector<8x8xf32>
      %c1 = arith.constant 1 : index
      %c0_20 = arith.constant 0 : index
      %c0_21 = arith.constant 0 : index
      %35 = vector.load %arg8[%c1, %c0_20, %c0_21] : memref<4x8x1xf32, #tpu.memory_space<vmem>>, vector<1x8x1xf32>
      %36 = vector.shape_cast %35 : vector<1x8x1xf32> to vector<8x1xf32>
      %37 = tpu.reciprocal %36 {approx = true} : vector<8x1xf32> -> vector<8x1xf32>
      %38 = vector.shape_cast %37 : vector<8x1xf32> to vector<8x1xf32>
      %39 = vector.broadcast %38 : vector<8x1xf32> to vector<8x8xf32>
      %c2 = arith.constant 2 : index
      %c0_22 = arith.constant 0 : index
      %c0_23 = arith.constant 0 : index
      %40 = vector.load %arg8[%c2, %c0_22, %c0_23] : memref<4x8x1xf32, #tpu.memory_space<vmem>>, vector<1x8x1xf32>
      %41 = vector.shape_cast %40 : vector<1x8x1xf32> to vector<8x1xf32>
      %42 = tpu.reciprocal %41 {approx = true} : vector<8x1xf32> -> vector<8x1xf32>
      %43 = vector.shape_cast %42 : vector<8x1xf32> to vector<8x1xf32>
      %44 = vector.broadcast %43 : vector<8x1xf32> to vector<8x8xf32>
      %c3 = arith.constant 3 : index
      %c0_24 = arith.constant 0 : index
      %c0_25 = arith.constant 0 : index
      %45 = vector.load %arg8[%c3, %c0_24, %c0_25] : memref<4x8x1xf32, #tpu.memory_space<vmem>>, vector<1x8x1xf32>
      %46 = vector.shape_cast %45 : vector<1x8x1xf32> to vector<8x1xf32>
      %47 = tpu.reciprocal %46 {approx = true} : vector<8x1xf32> -> vector<8x1xf32>
      %48 = vector.shape_cast %47 : vector<8x1xf32> to vector<8x1xf32>
      %49 = vector.broadcast %48 : vector<8x1xf32> to vector<8x8xf32>
      %50 = tpu.concatenate %34, %39, %44, %49 in 1 : vector<8x8xf32>, vector<8x8xf32>, vector<8x8xf32>, vector<8x8xf32> -> vector<8x32xf32>
      %c0_26 = arith.constant 0 : index
      %c0_27 = arith.constant 0 : index
      %51 = vector.load %arg9[%c0_26, %c0_27] : memref<8x32xf32, #tpu.memory_space<vmem>>, vector<8x32xf32>
      %52 = arith.mulf %51, %50 : vector<8x32xf32>
      %53 = arith.truncf %52 : vector<8x32xf32> to vector<8x32xbf16>
      %c0_28 = arith.constant 0 : index
      %c0_29 = arith.constant 0 : index
      %c0_30 = arith.constant 0 : index
      %54 = vector.load %arg6[%c0_28, %c0_29, %c0_30] : memref<1x8x32xbf16, #tpu.memory_space<vmem>>, vector<1x8x32xbf16>
      %55 = vector.shape_cast %54 : vector<1x8x32xbf16> to vector<8x32xbf16>
      %56 = vector.shape_cast %53 : vector<8x32xbf16> to vector<1x8x32xbf16>
      tpu.vector_store %arg6[%c0_28, %c0_29, %c0_30], %56 {strides = array<i32>} : memref<1x8x32xbf16, #tpu.memory_space<vmem>>, vector<1x8x32xbf16>,
    } else {
    }
    return
  }
  func.func @transform_0(%arg0: i32, %arg1: i32, %arg2: i32) -> (i32, i32, i32) {
    %c0_i32 = arith.constant 0 : i32
    %c0_i32_0 = arith.constant 0 : i32
    return %arg0, %arg1, %c0_i32 : i32, i32, i32
  }
  func.func @transform_1(%arg0: i32, %arg1: i32, %arg2: i32) -> (i32, i32, i32) {
    %c0_i32 = arith.constant 0 : i32
    %c0_i32_0 = arith.constant 0 : i32
    return %arg0, %arg2, %c0_i32 : i32, i32, i32
  }
  func.func @transform_2(%arg0: i32, %arg1: i32, %arg2: i32) -> (i32, i32, i32) {
    %c0_i32 = arith.constant 0 : i32
    %c0_i32_0 = arith.constant 0 : i32
    return %arg0, %arg2, %c0_i32 : i32, i32, i32
  }
  func.func @transform_3(%arg0: i32, %arg1: i32, %arg2: i32) -> (i32, i32, i32) {
    %c0_i32 = arith.constant 0 : i32
    %c0_i32_0 = arith.constant 0 : i32
    return %arg0, %arg1, %c0_i32 : i32, i32, i32
  }
}

module attributes {stable_mosaic.version = 11 : i64} {
  func.func @_linear_kernel(%arg0: i32, %arg1: i32, %arg2: i32, %arg3: memref<16x32xbf16, #tpu.memory_space<vmem>>, %arg4: memref<32x32xbf16, #tpu.memory_space<vmem>>, %arg5: memref<1x32xf32, #tpu.memory_space<vmem>>, %arg6: memref<16x32xbf16, #tpu.memory_space<vmem>>, %arg7: memref<16x32xf32, #tpu.memory_space<vmem>>) attributes {dimension_semantics = [#tpu.dimension_semantics<parallel>, #tpu.dimension_semantics<parallel>, #tpu.dimension_semantics<arbitrary>], iteration_bounds = array<i64: 1, 1, 1>, scalar_prefetch = 0 : i64, scratch_operands = 1 : i64, tpu.core_type = #tpu.core_type<tc>, window_params = [{transform_indices = @transform_0, window_bounds = array<i64: 16, 32>}, {transform_indices = @transform_1, window_bounds = array<i64: 32, 32>}, {transform_indices = @transform_2, window_bounds = array<i64: 1, 32>}, {transform_indices = @transform_3, window_bounds = array<i64: 16, 32>}]} {
    %c0_i32 = arith.constant 0 : i32
    %0 = arith.cmpi eq, %arg2, %c0_i32 : i32
    %1 = arith.extui %0 : i1 to i32
    %c0_i32_0 = arith.constant 0 : i32
    %2 = arith.cmpi ne, %1, %c0_i32_0 : i32
    scf.if %2 {
      %cst_10 = arith.constant 0.000000e+00 : f32
      %12 = vector.broadcast %cst_10 : f32 to vector<16x32xf32>
      %c0_11 = arith.constant 0 : index
      %c0_12 = arith.constant 0 : index
      %13 = vector.load %arg7[%c0_11, %c0_12] : memref<16x32xf32, #tpu.memory_space<vmem>>, vector<16x32xf32>
      tpu.vector_store %arg7[%c0_11, %c0_12], %12 {strides = array<i32>} : memref<16x32xf32, #tpu.memory_space<vmem>>, vector<16x32xf32>,
    } else {
    }
    %c0 = arith.constant 0 : index
    %c0_1 = arith.constant 0 : index
    %3 = vector.load %arg7[%c0, %c0_1] : memref<16x32xf32, #tpu.memory_space<vmem>>, vector<16x32xf32>
    %c0_2 = arith.constant 0 : index
    %c0_3 = arith.constant 0 : index
    %4 = vector.load %arg3[%c0_2, %c0_3] : memref<16x32xbf16, #tpu.memory_space<vmem>>, vector<16x32xbf16>
    %c0_4 = arith.constant 0 : index
    %c0_5 = arith.constant 0 : index
    %5 = vector.load %arg4[%c0_4, %c0_5] : memref<32x32xbf16, #tpu.memory_space<vmem>>, vector<32x32xbf16>
    %cst = arith.constant dense<0.000000e+00> : vector<16x32xf32>
    %6 = tpu.matmul %4, %5, %cst {dimension_numbers = #tpu.dot_dimension_numbers<[1], [0], [0], [1], [0, 0, 1, 1], [], []>} : vector<16x32xbf16>, vector<32x32xbf16>, vector<16x32xf32> -> vector<16x32xf32>
    %7 = arith.addf %3, %6 : vector<16x32xf32>
    %c0_6 = arith.constant 0 : index
    %c0_7 = arith.constant 0 : index
    %8 = vector.load %arg7[%c0_6, %c0_7] : memref<16x32xf32, #tpu.memory_space<vmem>>, vector<16x32xf32>
    tpu.vector_store %arg7[%c0_6, %c0_7], %7 {strides = array<i32>} : memref<16x32xf32, #tpu.memory_space<vmem>>, vector<16x32xf32>,
    %c0_i32_8 = arith.constant 0 : i32
    %9 = arith.cmpi eq, %arg2, %c0_i32_8 : i32
    %10 = arith.extui %9 : i1 to i32
    %c0_i32_9 = arith.constant 0 : i32
    %11 = arith.cmpi ne, %10, %c0_i32_9 : i32
    scf.if %11 {
      %c0_10 = arith.constant 0 : index
      %c0_11 = arith.constant 0 : index
      %12 = vector.load %arg7[%c0_10, %c0_11] : memref<16x32xf32, #tpu.memory_space<vmem>>, vector<16x32xf32>
      %c0_12 = arith.constant 0 : index
      %c0_13 = arith.constant 0 : index
      %13 = vector.load %arg5[%c0_12, %c0_13] : memref<1x32xf32, #tpu.memory_space<vmem>>, vector<1x32xf32>
      %14 = vector.broadcast %13 : vector<1x32xf32> to vector<16x32xf32>
      %15 = arith.addf %12, %14 : vector<16x32xf32>
      %16 = arith.truncf %15 : vector<16x32xf32> to vector<16x32xbf16>
      %c0_14 = arith.constant 0 : index
      %c0_15 = arith.constant 0 : index
      %17 = vector.load %arg6[%c0_14, %c0_15] : memref<16x32xbf16, #tpu.memory_space<vmem>>, vector<16x32xbf16>
      tpu.vector_store %arg6[%c0_14, %c0_15], %16 {strides = array<i32>} : memref<16x32xbf16, #tpu.memory_space<vmem>>, vector<16x32xbf16>,
    } else {
    }
    return
  }
  func.func @transform_0(%arg0: i32, %arg1: i32, %arg2: i32) -> (i32, i32) {
    %c0_i32 = arith.constant 0 : i32
    return %arg0, %arg2 : i32, i32
  }
  func.func @transform_1(%arg0: i32, %arg1: i32, %arg2: i32) -> (i32, i32) {
    %c0_i32 = arith.constant 0 : i32
    return %arg2, %arg1 : i32, i32
  }
  func.func @transform_2(%arg0: i32, %arg1: i32, %arg2: i32) -> (i32, i32) {
    %c0_i32 = arith.constant 0 : i32
    %c0_i32_0 = arith.constant 0 : i32
    return %c0_i32, %arg1 : i32, i32
  }
  func.func @transform_3(%arg0: i32, %arg1: i32, %arg2: i32) -> (i32, i32) {
    %c0_i32 = arith.constant 0 : i32
    return %arg0, %arg1 : i32, i32
  }
}

module attributes {stable_mosaic.version = 11 : i64} {
  func.func @_flash_mha_kernel(%arg0: i32, %arg1: i32, %arg2: i32, %arg3: memref<1x8x32xbf16, #tpu.memory_space<vmem>>, %arg4: memref<1x8x32xbf16, #tpu.memory_space<vmem>>, %arg5: memref<1x8x32xbf16, #tpu.memory_space<vmem>>, %arg6: memref<1x8x32xbf16, #tpu.memory_space<vmem>>, %arg7: memref<4x8x1xf32, #tpu.memory_space<vmem>>, %arg8: memref<4x8x1xf32, #tpu.memory_space<vmem>>, %arg9: memref<8x32xf32, #tpu.memory_space<vmem>>) attributes {dimension_semantics = [#tpu.dimension_semantics<parallel>, #tpu.dimension_semantics<parallel>, #tpu.dimension_semantics<arbitrary>], iteration_bounds = array<i64: 2, 1, 1>, scalar_prefetch = 0 : i64, scratch_operands = 3 : i64, tpu.core_type = #tpu.core_type<tc>, window_params = [{transform_indices = @transform_0, window_bounds = array<i64: 1, 8, 32>}, {transform_indices = @transform_1, window_bounds = array<i64: 1, 8, 32>}, {transform_indices = @transform_2, window_bounds = array<i64: 1, 8, 32>}, {transform_indices = @transform_3, window_bounds = array<i64: 1, 8, 32>}]} {
    %c0_i32 = arith.constant 0 : i32
    %0 = arith.cmpi eq, %arg2, %c0_i32 : i32
    %1 = arith.extui %0 : i1 to i32
    %c0_i32_0 = arith.constant 0 : i32
    %2 = arith.cmpi ne, %1, %c0_i32_0 : i32
    scf.if %2 {
      %cst_85 = arith.constant -1.000000e+30 : f32
      %148 = vector.broadcast %cst_85 : f32 to vector<4x8x1xf32>
      %c0_86 = arith.constant 0 : index
      %c0_87 = arith.constant 0 : index
      %c0_88 = arith.constant 0 : index
      %149 = vector.load %arg7[%c0_86, %c0_87, %c0_88] : memref<4x8x1xf32, #tpu.memory_space<vmem>>, vector<4x8x1xf32>
      tpu.vector_store %arg7[%c0_86, %c0_87, %c0_88], %148 {strides = array<i32>} : memref<4x8x1xf32, #tpu.memory_space<vmem>>, vector<4x8x1xf32>,
      %cst_89 = arith.constant 0.000000e+00 : f32
      %150 = vector.broadcast %cst_89 : f32 to vector<4x8x1xf32>
      %c0_90 = arith.constant 0 : index
      %c0_91 = arith.constant 0 : index
      %c0_92 = arith.constant 0 : index
      %151 = vector.load %arg8[%c0_90, %c0_91, %c0_92] : memref<4x8x1xf32, #tpu.memory_space<vmem>>, vector<4x8x1xf32>
      tpu.vector_store %arg8[%c0_90, %c0_91, %c0_92], %150 {strides = array<i32>} : memref<4x8x1xf32, #tpu.memory_space<vmem>>, vector<4x8x1xf32>,
      %cst_93 = arith.constant 0.000000e+00 : f32
      %152 = vector.broadcast %cst_93 : f32 to vector<8x32xf32>
      %c0_94 = arith.constant 0 : index
      %c0_95 = arith.constant 0 : index
      %153 = vector.load %arg9[%c0_94, %c0_95] : memref<8x32xf32, #tpu.memory_space<vmem>>, vector<8x32xf32>
      tpu.vector_store %arg9[%c0_94, %c0_95], %152 {strides = array<i32>} : memref<8x32xf32, #tpu.memory_space<vmem>>, vector<8x32xf32>,
    } else {
    }
    %c0 = arith.constant 0 : index
    %c0_1 = arith.constant 0 : index
    %c0_2 = arith.constant 0 : index
    %3 = vector.load %arg3[%c0, %c0_1, %c0_2] : memref<1x8x32xbf16, #tpu.memory_space<vmem>>, vector<1x8x32xbf16>
    %4 = vector.shape_cast %3 : vector<1x8x32xbf16> to vector<8x32xbf16>
    %5 = arith.extf %4 : vector<8x32xbf16> to vector<8x32xf32>
    %cst = arith.constant 0.353553385 : f32
    %6 = vector.broadcast %cst : f32 to vector<8x32xf32>
    %7 = arith.mulf %5, %6 : vector<8x32xf32>
    %8 = arith.truncf %7 : vector<8x32xf32> to vector<8x32xbf16>
    %c0_3 = arith.constant 0 : index
    %c0_4 = arith.constant 0 : index
    %c0_5 = arith.constant 0 : index
    %9 = vector.load %arg4[%c0_3, %c0_4, %c0_5] : memref<1x8x32xbf16, #tpu.memory_space<vmem>>, vector<1x8x32xbf16>
    %10 = vector.shape_cast %9 : vector<1x8x32xbf16> to vector<8x32xbf16>
    %c0_6 = arith.constant 0 : index
    %c0_7 = arith.constant 0 : index
    %c0_8 = arith.constant 0 : index
    %11 = vector.load %arg5[%c0_6, %c0_7, %c0_8] : memref<1x8x32xbf16, #tpu.memory_space<vmem>>, vector<1x8x32xbf16>
    %12 = vector.shape_cast %11 : vector<1x8x32xbf16> to vector<8x32xbf16>
    %13 = vector.extract_strided_slice %8 {offsets = [0, 0], sizes = [8, 8], strides = [1, 1]} : vector<8x32xbf16> to vector<8x8xbf16>
    %14 = vector.extract_strided_slice %10 {offsets = [0, 0], sizes = [8, 8], strides = [1, 1]} : vector<8x32xbf16> to vector<8x8xbf16>
    %cst_9 = arith.constant dense<0.000000e+00> : vector<8x8xf32>
    %15 = tpu.matmul %13, %14, %cst_9 {dimension_numbers = #tpu.dot_dimension_numbers<[1], [1], [0], [0], [0, 0, 1, 0], [], []>} : vector<8x8xbf16>, vector<8x8xbf16>, vector<8x8xf32> -> vector<8x8xf32>
    %c0_10 = arith.constant 0 : index
    %c0_11 = arith.constant 0 : index
    %c0_12 = arith.constant 0 : index
    %16 = vector.load %arg7[%c0_10, %c0_11, %c0_12] : memref<4x8x1xf32, #tpu.memory_space<vmem>>, vector<1x8x1xf32>
    %17 = vector.shape_cast %16 : vector<1x8x1xf32> to vector<8x1xf32>
    %cst_13 = arith.constant dense<0xFF800000> : vector<8xf32>
    %18 = vector.multi_reduction <maximumf>, %15, %cst_13 [1] : vector<8x8xf32> to vector<8xf32>
    %19 = vector.shape_cast %18 : vector<8xf32> to vector<8x1xf32>
    %20 = arith.maximumf %17, %19 : vector<8x1xf32>
    %21 = arith.subf %17, %20 : vector<8x1xf32>
    %22 = math.exp %21 : vector<8x1xf32>
    %23 = vector.broadcast %20 : vector<8x1xf32> to vector<8x8xf32>
    %24 = arith.subf %15, %23 : vector<8x8xf32>
    %25 = math.exp %24 : vector<8x8xf32>
    %c0_14 = arith.constant 0 : index
    %c0_15 = arith.constant 0 : index
    %c0_16 = arith.constant 0 : index
    %26 = vector.load %arg8[%c0_14, %c0_15, %c0_16] : memref<4x8x1xf32, #tpu.memory_space<vmem>>, vector<1x8x1xf32>
    %27 = vector.shape_cast %26 : vector<1x8x1xf32> to vector<8x1xf32>
    %28 = arith.mulf %22, %27 : vector<8x1xf32>
    %cst_17 = arith.constant dense<0.000000e+00> : vector<8xf32>
    %29 = vector.multi_reduction <add>, %25, %cst_17 [1] : vector<8x8xf32> to vector<8xf32>
    %30 = vector.shape_cast %29 : vector<8xf32> to vector<8x1xf32>
    %31 = arith.addf %28, %30 : vector<8x1xf32>
    %c0_18 = arith.constant 0 : index
    %c0_19 = arith.constant 0 : index
    %c0_20 = arith.constant 0 : index
    %32 = vector.load %arg8[%c0_18, %c0_19, %c0_20] : memref<4x8x1xf32, #tpu.memory_space<vmem>>, vector<1x8x1xf32>
    %33 = vector.shape_cast %32 : vector<1x8x1xf32> to vector<8x1xf32>
    %34 = vector.shape_cast %31 : vector<8x1xf32> to vector<1x8x1xf32>
    tpu.vector_store %arg8[%c0_18, %c0_19, %c0_20], %34 {strides = array<i32>} : memref<4x8x1xf32, #tpu.memory_space<vmem>>, vector<1x8x1xf32>,
    %c0_21 = arith.constant 0 : index
    %c0_22 = arith.constant 0 : index
    %35 = vector.load %arg9[%c0_21, %c0_22] : memref<8x32xf32, #tpu.memory_space<vmem>>, vector<8x8xf32>
    %36 = vector.broadcast %22 : vector<8x1xf32> to vector<8x8xf32>
    %37 = arith.mulf %36, %35 : vector<8x8xf32>
    %38 = arith.truncf %25 : vector<8x8xf32> to vector<8x8xbf16>
    %39 = vector.extract_strided_slice %12 {offsets = [0, 0], sizes = [8, 8], strides = [1, 1]} : vector<8x32xbf16> to vector<8x8xbf16>
    %cst_23 = arith.constant dense<0.000000e+00> : vector<8x8xf32>
    %40 = tpu.matmul %38, %39, %cst_23 {dimension_numbers = #tpu.dot_dimension_numbers<[1], [0], [0], [1], [0, 0, 1, 1], [], []>} : vector<8x8xbf16>, vector<8x8xbf16>, vector<8x8xf32> -> vector<8x8xf32>
    %41 = arith.addf %37, %40 : vector<8x8xf32>
    %c0_24 = arith.constant 0 : index
    %c0_25 = arith.constant 0 : index
    %42 = vector.load %arg9[%c0_24, %c0_25] : memref<8x32xf32, #tpu.memory_space<vmem>>, vector<8x8xf32>
    tpu.vector_store %arg9[%c0_24, %c0_25], %41 {strides = array<i32>} : memref<8x32xf32, #tpu.memory_space<vmem>>, vector<8x8xf32>,
    %c0_26 = arith.constant 0 : index
    %c0_27 = arith.constant 0 : index
    %c0_28 = arith.constant 0 : index
    %43 = vector.load %arg7[%c0_26, %c0_27, %c0_28] : memref<4x8x1xf32, #tpu.memory_space<vmem>>, vector<1x8x1xf32>
    %44 = vector.shape_cast %43 : vector<1x8x1xf32> to vector<8x1xf32>
    %45 = vector.shape_cast %20 : vector<8x1xf32> to vector<1x8x1xf32>
    tpu.vector_store %arg7[%c0_26, %c0_27, %c0_28], %45 {strides = array<i32>} : memref<4x8x1xf32, #tpu.memory_space<vmem>>, vector<1x8x1xf32>,
    %46 = vector.extract_strided_slice %8 {offsets = [0, 8], sizes = [8, 8], strides = [1, 1]} : vector<8x32xbf16> to vector<8x8xbf16>
    %47 = vector.extract_strided_slice %10 {offsets = [0, 8], sizes = [8, 8], strides = [1, 1]} : vector<8x32xbf16> to vector<8x8xbf16>
    %cst_29 = arith.constant dense<0.000000e+00> : vector<8x8xf32>
    %48 = tpu.matmul %46, %47, %cst_29 {dimension_numbers = #tpu.dot_dimension_numbers<[1], [1], [0], [0], [0, 0, 1, 0], [], []>} : vector<8x8xbf16>, vector<8x8xbf16>, vector<8x8xf32> -> vector<8x8xf32>
    %c1 = arith.constant 1 : index
    %c0_30 = arith.constant 0 : index
    %c0_31 = arith.constant 0 : index
    %49 = vector.load %arg7[%c1, %c0_30, %c0_31] : memref<4x8x1xf32, #tpu.memory_space<vmem>>, vector<1x8x1xf32>
    %50 = vector.shape_cast %49 : vector<1x8x1xf32> to vector<8x1xf32>
    %cst_32 = arith.constant dense<0xFF800000> : vector<8xf32>
    %51 = vector.multi_reduction <maximumf>, %48, %cst_32 [1] : vector<8x8xf32> to vector<8xf32>
    %52 = vector.shape_cast %51 : vector<8xf32> to vector<8x1xf32>
    %53 = arith.maximumf %50, %52 : vector<8x1xf32>
    %54 = arith.subf %50, %53 : vector<8x1xf32>
    %55 = math.exp %54 : vector<8x1xf32>
    %56 = vector.broadcast %53 : vector<8x1xf32> to vector<8x8xf32>
    %57 = arith.subf %48, %56 : vector<8x8xf32>
    %58 = math.exp %57 : vector<8x8xf32>
    %c1_33 = arith.constant 1 : index
    %c0_34 = arith.constant 0 : index
    %c0_35 = arith.constant 0 : index
    %59 = vector.load %arg8[%c1_33, %c0_34, %c0_35] : memref<4x8x1xf32, #tpu.memory_space<vmem>>, vector<1x8x1xf32>
    %60 = vector.shape_cast %59 : vector<1x8x1xf32> to vector<8x1xf32>
    %61 = arith.mulf %55, %60 : vector<8x1xf32>
    %cst_36 = arith.constant dense<0.000000e+00> : vector<8xf32>
    %62 = vector.multi_reduction <add>, %58, %cst_36 [1] : vector<8x8xf32> to vector<8xf32>
    %63 = vector.shape_cast %62 : vector<8xf32> to vector<8x1xf32>
    %64 = arith.addf %61, %63 : vector<8x1xf32>
    %c1_37 = arith.constant 1 : index
    %c0_38 = arith.constant 0 : index
    %c0_39 = arith.constant 0 : index
    %65 = vector.load %arg8[%c1_37, %c0_38, %c0_39] : memref<4x8x1xf32, #tpu.memory_space<vmem>>, vector<1x8x1xf32>
    %66 = vector.shape_cast %65 : vector<1x8x1xf32> to vector<8x1xf32>
    %67 = vector.shape_cast %64 : vector<8x1xf32> to vector<1x8x1xf32>
    tpu.vector_store %arg8[%c1_37, %c0_38, %c0_39], %67 {strides = array<i32>} : memref<4x8x1xf32, #tpu.memory_space<vmem>>, vector<1x8x1xf32>,
    %c0_40 = arith.constant 0 : index
    %c8 = arith.constant 8 : index
    %68 = vector.load %arg9[%c0_40, %c8] : memref<8x32xf32, #tpu.memory_space<vmem>>, vector<8x8xf32>
    %69 = vector.broadcast %55 : vector<8x1xf32> to vector<8x8xf32>
    %70 = arith.mulf %69, %68 : vector<8x8xf32>
    %71 = arith.truncf %58 : vector<8x8xf32> to vector<8x8xbf16>
    %72 = vector.extract_strided_slice %12 {offsets = [0, 8], sizes = [8, 8], strides = [1, 1]} : vector<8x32xbf16> to vector<8x8xbf16>
    %cst_41 = arith.constant dense<0.000000e+00> : vector<8x8xf32>
    %73 = tpu.matmul %71, %72, %cst_41 {dimension_numbers = #tpu.dot_dimension_numbers<[1], [0], [0], [1], [0, 0, 1, 1], [], []>} : vector<8x8xbf16>, vector<8x8xbf16>, vector<8x8xf32> -> vector<8x8xf32>
    %74 = arith.addf %70, %73 : vector<8x8xf32>
    %c0_42 = arith.constant 0 : index
    %c8_43 = arith.constant 8 : index
    %75 = vector.load %arg9[%c0_42, %c8_43] : memref<8x32xf32, #tpu.memory_space<vmem>>, vector<8x8xf32>
    tpu.vector_store %arg9[%c0_42, %c8_43], %74 {strides = array<i32>} : memref<8x32xf32, #tpu.memory_space<vmem>>, vector<8x8xf32>,
    %c1_44 = arith.constant 1 : index
    %c0_45 = arith.constant 0 : index
    %c0_46 = arith.constant 0 : index
    %76 = vector.load %arg7[%c1_44, %c0_45, %c0_46] : memref<4x8x1xf32, #tpu.memory_space<vmem>>, vector<1x8x1xf32>
    %77 = vector.shape_cast %76 : vector<1x8x1xf32> to vector<8x1xf32>
    %78 = vector.shape_cast %53 : vector<8x1xf32> to vector<1x8x1xf32>
    tpu.vector_store %arg7[%c1_44, %c0_45, %c0_46], %78 {strides = array<i32>} : memref<4x8x1xf32, #tpu.memory_space<vmem>>, vector<1x8x1xf32>,
    %79 = vector.extract_strided_slice %8 {offsets = [0, 16], sizes = [8, 8], strides = [1, 1]} : vector<8x32xbf16> to vector<8x8xbf16>
    %80 = vector.extract_strided_slice %10 {offsets = [0, 16], sizes = [8, 8], strides = [1, 1]} : vector<8x32xbf16> to vector<8x8xbf16>
    %cst_47 = arith.constant dense<0.000000e+00> : vector<8x8xf32>
    %81 = tpu.matmul %79, %80, %cst_47 {dimension_numbers = #tpu.dot_dimension_numbers<[1], [1], [0], [0], [0, 0, 1, 0], [], []>} : vector<8x8xbf16>, vector<8x8xbf16>, vector<8x8xf32> -> vector<8x8xf32>
    %c2 = arith.constant 2 : index
    %c0_48 = arith.constant 0 : index
    %c0_49 = arith.constant 0 : index
    %82 = vector.load %arg7[%c2, %c0_48, %c0_49] : memref<4x8x1xf32, #tpu.memory_space<vmem>>, vector<1x8x1xf32>
    %83 = vector.shape_cast %82 : vector<1x8x1xf32> to vector<8x1xf32>
    %cst_50 = arith.constant dense<0xFF800000> : vector<8xf32>
    %84 = vector.multi_reduction <maximumf>, %81, %cst_50 [1] : vector<8x8xf32> to vector<8xf32>
    %85 = vector.shape_cast %84 : vector<8xf32> to vector<8x1xf32>
    %86 = arith.maximumf %83, %85 : vector<8x1xf32>
    %87 = arith.subf %83, %86 : vector<8x1xf32>
    %88 = math.exp %87 : vector<8x1xf32>
    %89 = vector.broadcast %86 : vector<8x1xf32> to vector<8x8xf32>
    %90 = arith.subf %81, %89 : vector<8x8xf32>
    %91 = math.exp %90 : vector<8x8xf32>
    %c2_51 = arith.constant 2 : index
    %c0_52 = arith.constant 0 : index
    %c0_53 = arith.constant 0 : index
    %92 = vector.load %arg8[%c2_51, %c0_52, %c0_53] : memref<4x8x1xf32, #tpu.memory_space<vmem>>, vector<1x8x1xf32>
    %93 = vector.shape_cast %92 : vector<1x8x1xf32> to vector<8x1xf32>
    %94 = arith.mulf %88, %93 : vector<8x1xf32>
    %cst_54 = arith.constant dense<0.000000e+00> : vector<8xf32>
    %95 = vector.multi_reduction <add>, %91, %cst_54 [1] : vector<8x8xf32> to vector<8xf32>
    %96 = vector.shape_cast %95 : vector<8xf32> to vector<8x1xf32>
    %97 = arith.addf %94, %96 : vector<8x1xf32>
    %c2_55 = arith.constant 2 : index
    %c0_56 = arith.constant 0 : index
    %c0_57 = arith.constant 0 : index
    %98 = vector.load %arg8[%c2_55, %c0_56, %c0_57] : memref<4x8x1xf32, #tpu.memory_space<vmem>>, vector<1x8x1xf32>
    %99 = vector.shape_cast %98 : vector<1x8x1xf32> to vector<8x1xf32>
    %100 = vector.shape_cast %97 : vector<8x1xf32> to vector<1x8x1xf32>
    tpu.vector_store %arg8[%c2_55, %c0_56, %c0_57], %100 {strides = array<i32>} : memref<4x8x1xf32, #tpu.memory_space<vmem>>, vector<1x8x1xf32>,
    %c0_58 = arith.constant 0 : index
    %c16 = arith.constant 16 : index
    %101 = vector.load %arg9[%c0_58, %c16] : memref<8x32xf32, #tpu.memory_space<vmem>>, vector<8x8xf32>
    %102 = vector.broadcast %88 : vector<8x1xf32> to vector<8x8xf32>
    %103 = arith.mulf %102, %101 : vector<8x8xf32>
    %104 = arith.truncf %91 : vector<8x8xf32> to vector<8x8xbf16>
    %105 = vector.extract_strided_slice %12 {offsets = [0, 16], sizes = [8, 8], strides = [1, 1]} : vector<8x32xbf16> to vector<8x8xbf16>
    %cst_59 = arith.constant dense<0.000000e+00> : vector<8x8xf32>
    %106 = tpu.matmul %104, %105, %cst_59 {dimension_numbers = #tpu.dot_dimension_numbers<[1], [0], [0], [1], [0, 0, 1, 1], [], []>} : vector<8x8xbf16>, vector<8x8xbf16>, vector<8x8xf32> -> vector<8x8xf32>
    %107 = arith.addf %103, %106 : vector<8x8xf32>
    %c0_60 = arith.constant 0 : index
    %c16_61 = arith.constant 16 : index
    %108 = vector.load %arg9[%c0_60, %c16_61] : memref<8x32xf32, #tpu.memory_space<vmem>>, vector<8x8xf32>
    tpu.vector_store %arg9[%c0_60, %c16_61], %107 {strides = array<i32>} : memref<8x32xf32, #tpu.memory_space<vmem>>, vector<8x8xf32>,
    %c2_62 = arith.constant 2 : index
    %c0_63 = arith.constant 0 : index
    %c0_64 = arith.constant 0 : index
    %109 = vector.load %arg7[%c2_62, %c0_63, %c0_64] : memref<4x8x1xf32, #tpu.memory_space<vmem>>, vector<1x8x1xf32>
    %110 = vector.shape_cast %109 : vector<1x8x1xf32> to vector<8x1xf32>
    %111 = vector.shape_cast %86 : vector<8x1xf32> to vector<1x8x1xf32>
    tpu.vector_store %arg7[%c2_62, %c0_63, %c0_64], %111 {strides = array<i32>} : memref<4x8x1xf32, #tpu.memory_space<vmem>>, vector<1x8x1xf32>,
    %112 = vector.extract_strided_slice %8 {offsets = [0, 24], sizes = [8, 8], strides = [1, 1]} : vector<8x32xbf16> to vector<8x8xbf16>
    %113 = vector.extract_strided_slice %10 {offsets = [0, 24], sizes = [8, 8], strides = [1, 1]} : vector<8x32xbf16> to vector<8x8xbf16>
    %cst_65 = arith.constant dense<0.000000e+00> : vector<8x8xf32>
    %114 = tpu.matmul %112, %113, %cst_65 {dimension_numbers = #tpu.dot_dimension_numbers<[1], [1], [0], [0], [0, 0, 1, 0], [], []>} : vector<8x8xbf16>, vector<8x8xbf16>, vector<8x8xf32> -> vector<8x8xf32>
    %c3 = arith.constant 3 : index
    %c0_66 = arith.constant 0 : index
    %c0_67 = arith.constant 0 : index
    %115 = vector.load %arg7[%c3, %c0_66, %c0_67] : memref<4x8x1xf32, #tpu.memory_space<vmem>>, vector<1x8x1xf32>
    %116 = vector.shape_cast %115 : vector<1x8x1xf32> to vector<8x1xf32>
    %cst_68 = arith.constant dense<0xFF800000> : vector<8xf32>
    %117 = vector.multi_reduction <maximumf>, %114, %cst_68 [1] : vector<8x8xf32> to vector<8xf32>
    %118 = vector.shape_cast %117 : vector<8xf32> to vector<8x1xf32>
    %119 = arith.maximumf %116, %118 : vector<8x1xf32>
    %120 = arith.subf %116, %119 : vector<8x1xf32>
    %121 = math.exp %120 : vector<8x1xf32>
    %122 = vector.broadcast %119 : vector<8x1xf32> to vector<8x8xf32>
    %123 = arith.subf %114, %122 : vector<8x8xf32>
    %124 = math.exp %123 : vector<8x8xf32>
    %c3_69 = arith.constant 3 : index
    %c0_70 = arith.constant 0 : index
    %c0_71 = arith.constant 0 : index
    %125 = vector.load %arg8[%c3_69, %c0_70, %c0_71] : memref<4x8x1xf32, #tpu.memory_space<vmem>>, vector<1x8x1xf32>
    %126 = vector.shape_cast %125 : vector<1x8x1xf32> to vector<8x1xf32>
    %127 = arith.mulf %121, %126 : vector<8x1xf32>
    %cst_72 = arith.constant dense<0.000000e+00> : vector<8xf32>
    %128 = vector.multi_reduction <add>, %124, %cst_72 [1] : vector<8x8xf32> to vector<8xf32>
    %129 = vector.shape_cast %128 : vector<8xf32> to vector<8x1xf32>
    %130 = arith.addf %127, %129 : vector<8x1xf32>
    %c3_73 = arith.constant 3 : index
    %c0_74 = arith.constant 0 : index
    %c0_75 = arith.constant 0 : index
    %131 = vector.load %arg8[%c3_73, %c0_74, %c0_75] : memref<4x8x1xf32, #tpu.memory_space<vmem>>, vector<1x8x1xf32>
    %132 = vector.shape_cast %131 : vector<1x8x1xf32> to vector<8x1xf32>
    %133 = vector.shape_cast %130 : vector<8x1xf32> to vector<1x8x1xf32>
    tpu.vector_store %arg8[%c3_73, %c0_74, %c0_75], %133 {strides = array<i32>} : memref<4x8x1xf32, #tpu.memory_space<vmem>>, vector<1x8x1xf32>,
    %c0_76 = arith.constant 0 : index
    %c24 = arith.constant 24 : index
    %134 = vector.load %arg9[%c0_76, %c24] : memref<8x32xf32, #tpu.memory_space<vmem>>, vector<8x8xf32>
    %135 = vector.broadcast %121 : vector<8x1xf32> to vector<8x8xf32>
    %136 = arith.mulf %135, %134 : vector<8x8xf32>
    %137 = arith.truncf %124 : vector<8x8xf32> to vector<8x8xbf16>
    %138 = vector.extract_strided_slice %12 {offsets = [0, 24], sizes = [8, 8], strides = [1, 1]} : vector<8x32xbf16> to vector<8x8xbf16>
    %cst_77 = arith.constant dense<0.000000e+00> : vector<8x8xf32>
    %139 = tpu.matmul %137, %138, %cst_77 {dimension_numbers = #tpu.dot_dimension_numbers<[1], [0], [0], [1], [0, 0, 1, 1], [], []>} : vector<8x8xbf16>, vector<8x8xbf16>, vector<8x8xf32> -> vector<8x8xf32>
    %140 = arith.addf %136, %139 : vector<8x8xf32>
    %c0_78 = arith.constant 0 : index
    %c24_79 = arith.constant 24 : index
    %141 = vector.load %arg9[%c0_78, %c24_79] : memref<8x32xf32, #tpu.memory_space<vmem>>, vector<8x8xf32>
    tpu.vector_store %arg9[%c0_78, %c24_79], %140 {strides = array<i32>} : memref<8x32xf32, #tpu.memory_space<vmem>>, vector<8x8xf32>,
    %c3_80 = arith.constant 3 : index
    %c0_81 = arith.constant 0 : index
    %c0_82 = arith.constant 0 : index
    %142 = vector.load %arg7[%c3_80, %c0_81, %c0_82] : memref<4x8x1xf32, #tpu.memory_space<vmem>>, vector<1x8x1xf32>
    %143 = vector.shape_cast %142 : vector<1x8x1xf32> to vector<8x1xf32>
    %144 = vector.shape_cast %119 : vector<8x1xf32> to vector<1x8x1xf32>
    tpu.vector_store %arg7[%c3_80, %c0_81, %c0_82], %144 {strides = array<i32>} : memref<4x8x1xf32, #tpu.memory_space<vmem>>, vector<1x8x1xf32>,
    %c0_i32_83 = arith.constant 0 : i32
    %145 = arith.cmpi eq, %arg2, %c0_i32_83 : i32
    %146 = arith.extui %145 : i1 to i32
    %c0_i32_84 = arith.constant 0 : i32
    %147 = arith.cmpi ne, %146, %c0_i32_84 : i32
    scf.if %147 {
      %c0_85 = arith.constant 0 : index
      %c0_86 = arith.constant 0 : index
      %c0_87 = arith.constant 0 : index
      %148 = vector.load %arg8[%c0_85, %c0_86, %c0_87] : memref<4x8x1xf32, #tpu.memory_space<vmem>>, vector<1x8x1xf32>
      %149 = vector.shape_cast %148 : vector<1x8x1xf32> to vector<8x1xf32>
      %150 = tpu.reciprocal %149 {approx = true} : vector<8x1xf32> -> vector<8x1xf32>
      %151 = vector.shape_cast %150 : vector<8x1xf32> to vector<8x1xf32>
      %152 = vector.broadcast %151 : vector<8x1xf32> to vector<8x8xf32>
      %c1_88 = arith.constant 1 : index
      %c0_89 = arith.constant 0 : index
      %c0_90 = arith.constant 0 : index
      %153 = vector.load %arg8[%c1_88, %c0_89, %c0_90] : memref<4x8x1xf32, #tpu.memory_space<vmem>>, vector<1x8x1xf32>
      %154 = vector.shape_cast %153 : vector<1x8x1xf32> to vector<8x1xf32>
      %155 = tpu.reciprocal %154 {approx = true} : vector<8x1xf32> -> vector<8x1xf32>
      %156 = vector.shape_cast %155 : vector<8x1xf32> to vector<8x1xf32>
      %157 = vector.broadcast %156 : vector<8x1xf32> to vector<8x8xf32>
      %c2_91 = arith.constant 2 : index
      %c0_92 = arith.constant 0 : index
      %c0_93 = arith.constant 0 : index
      %158 = vector.load %arg8[%c2_91, %c0_92, %c0_93] : memref<4x8x1xf32, #tpu.memory_space<vmem>>, vector<1x8x1xf32>
      %159 = vector.shape_cast %158 : vector<1x8x1xf32> to vector<8x1xf32>
      %160 = tpu.reciprocal %159 {approx = true} : vector<8x1xf32> -> vector<8x1xf32>
      %161 = vector.shape_cast %160 : vector<8x1xf32> to vector<8x1xf32>
      %162 = vector.broadcast %161 : vector<8x1xf32> to vector<8x8xf32>
      %c3_94 = arith.constant 3 : index
      %c0_95 = arith.constant 0 : index
      %c0_96 = arith.constant 0 : index
      %163 = vector.load %arg8[%c3_94, %c0_95, %c0_96] : memref<4x8x1xf32, #tpu.memory_space<vmem>>, vector<1x8x1xf32>
      %164 = vector.shape_cast %163 : vector<1x8x1xf32> to vector<8x1xf32>
      %165 = tpu.reciprocal %164 {approx = true} : vector<8x1xf32> -> vector<8x1xf32>
      %166 = vector.shape_cast %165 : vector<8x1xf32> to vector<8x1xf32>
      %167 = vector.broadcast %166 : vector<8x1xf32> to vector<8x8xf32>
      %168 = tpu.concatenate %152, %157, %162, %167 in 1 : vector<8x8xf32>, vector<8x8xf32>, vector<8x8xf32>, vector<8x8xf32> -> vector<8x32xf32>
      %c0_97 = arith.constant 0 : index
      %c0_98 = arith.constant 0 : index
      %169 = vector.load %arg9[%c0_97, %c0_98] : memref<8x32xf32, #tpu.memory_space<vmem>>, vector<8x32xf32>
      %170 = arith.mulf %169, %168 : vector<8x32xf32>
      %171 = arith.truncf %170 : vector<8x32xf32> to vector<8x32xbf16>
      %c0_99 = arith.constant 0 : index
      %c0_100 = arith.constant 0 : index
      %c0_101 = arith.constant 0 : index
      %172 = vector.load %arg6[%c0_99, %c0_100, %c0_101] : memref<1x8x32xbf16, #tpu.memory_space<vmem>>, vector<1x8x32xbf16>
      %173 = vector.shape_cast %172 : vector<1x8x32xbf16> to vector<8x32xbf16>
      %174 = vector.shape_cast %171 : vector<8x32xbf16> to vector<1x8x32xbf16>
      tpu.vector_store %arg6[%c0_99, %c0_100, %c0_101], %174 {strides = array<i32>} : memref<1x8x32xbf16, #tpu.memory_space<vmem>>, vector<1x8x32xbf16>,
    } else {
    }
    return
  }
  func.func @transform_0(%arg0: i32, %arg1: i32, %arg2: i32) -> (i32, i32, i32) {
    %c0_i32 = arith.constant 0 : i32
    %c0_i32_0 = arith.constant 0 : i32
    return %arg0, %arg1, %c0_i32 : i32, i32, i32
  }
  func.func @transform_1(%arg0: i32, %arg1: i32, %arg2: i32) -> (i32, i32, i32) {
    %c0_i32 = arith.constant 0 : i32
    %c0_i32_0 = arith.constant 0 : i32
    return %arg0, %arg2, %c0_i32 : i32, i32, i32
  }
  func.func @transform_2(%arg0: i32, %arg1: i32, %arg2: i32) -> (i32, i32, i32) {
    %c0_i32 = arith.constant 0 : i32
    %c0_i32_0 = arith.constant 0 : i32
    return %arg0, %arg2, %c0_i32 : i32, i32, i32
  }
  func.func @transform_3(%arg0: i32, %arg1: i32, %arg2: i32) -> (i32, i32, i32) {
    %c0_i32 = arith.constant 0 : i32
    %c0_i32_0 = arith.constant 0 : i32
    return %arg0, %arg1, %c0_i32 : i32, i32, i32
  }
}

module attributes {stable_mosaic.version = 11 : i64} {
  func.func @_ffn_ln_kernel(%arg0: i32, %arg1: i32, %arg2: memref<16x32xbf16, #tpu.memory_space<vmem>>, %arg3: memref<32x64xbf16, #tpu.memory_space<vmem>>, %arg4: memref<1x64xf32, #tpu.memory_space<vmem>>, %arg5: memref<64x32xbf16, #tpu.memory_space<vmem>>, %arg6: memref<1x32xf32, #tpu.memory_space<vmem>>, %arg7: memref<1x32xf32, #tpu.memory_space<vmem>>, %arg8: memref<1x32xf32, #tpu.memory_space<vmem>>, %arg9: memref<16x32xbf16, #tpu.memory_space<vmem>>, %arg10: memref<16x32xf32, #tpu.memory_space<vmem>>) attributes {dimension_semantics = [#tpu.dimension_semantics<parallel>, #tpu.dimension_semantics<arbitrary>], iteration_bounds = array<i64: 1, 1>, scalar_prefetch = 0 : i64, scratch_operands = 1 : i64, tpu.core_type = #tpu.core_type<tc>, window_params = [{transform_indices = @transform_0, window_bounds = array<i64: 16, 32>}, {transform_indices = @transform_1, window_bounds = array<i64: 32, 64>}, {transform_indices = @transform_2, window_bounds = array<i64: 1, 64>}, {transform_indices = @transform_3, window_bounds = array<i64: 64, 32>}, {pipeline_mode = #tpu.pipeline_mode<synchronous>, transform_indices = @transform_4, window_bounds = array<i64: 1, 32>}, {pipeline_mode = #tpu.pipeline_mode<synchronous>, transform_indices = @transform_5, window_bounds = array<i64: 1, 32>}, {pipeline_mode = #tpu.pipeline_mode<synchronous>, transform_indices = @transform_6, window_bounds = array<i64: 1, 32>}, {transform_indices = @transform_7, window_bounds = array<i64: 16, 32>}]} {
    %c0_i32 = arith.constant 0 : i32
    %0 = arith.cmpi eq, %arg1, %c0_i32 : i32
    %1 = arith.extui %0 : i1 to i32
    %c0_i32_0 = arith.constant 0 : i32
    %2 = arith.cmpi ne, %1, %c0_i32_0 : i32
    scf.if %2 {
      %cst_16 = arith.constant 0.000000e+00 : f32
      %20 = vector.broadcast %cst_16 : f32 to vector<16x32xf32>
      %c0_17 = arith.constant 0 : index
      %c0_18 = arith.constant 0 : index
      %21 = vector.load %arg10[%c0_17, %c0_18] : memref<16x32xf32, #tpu.memory_space<vmem>>, vector<16x32xf32>
      tpu.vector_store %arg10[%c0_17, %c0_18], %20 {strides = array<i32>} : memref<16x32xf32, #tpu.memory_space<vmem>>, vector<16x32xf32>,
    } else {
    }
    %c0 = arith.constant 0 : index
    %c0_1 = arith.constant 0 : index
    %3 = vector.load %arg2[%c0, %c0_1] : memref<16x32xbf16, #tpu.memory_space<vmem>>, vector<16x32xbf16>
    %c0_2 = arith.constant 0 : index
    %c0_3 = arith.constant 0 : index
    %4 = vector.load %arg3[%c0_2, %c0_3] : memref<32x64xbf16, #tpu.memory_space<vmem>>, vector<32x64xbf16>
    %cst = arith.constant dense<0.000000e+00> : vector<16x64xf32>
    %5 = tpu.matmul %3, %4, %cst {dimension_numbers = #tpu.dot_dimension_numbers<[1], [0], [0], [1], [0, 0, 1, 1], [], []>} : vector<16x32xbf16>, vector<32x64xbf16>, vector<16x64xf32> -> vector<16x64xf32>
    %c0_4 = arith.constant 0 : index
    %c0_5 = arith.constant 0 : index
    %6 = vector.load %arg4[%c0_4, %c0_5] : memref<1x64xf32, #tpu.memory_space<vmem>>, vector<1x64xf32>
    %7 = vector.broadcast %6 : vector<1x64xf32> to vector<16x64xf32>
    %8 = arith.addf %5, %7 : vector<16x64xf32>
    %cst_6 = arith.constant 0.000000e+00 : f32
    %9 = vector.broadcast %cst_6 : f32 to vector<16x64xf32>
    %10 = arith.maximumf %8, %9 : vector<16x64xf32>
    %c0_7 = arith.constant 0 : index
    %c0_8 = arith.constant 0 : index
    %11 = vector.load %arg10[%c0_7, %c0_8] : memref<16x32xf32, #tpu.memory_space<vmem>>, vector<16x32xf32>
    %12 = arith.truncf %10 : vector<16x64xf32> to vector<16x64xbf16>
    %c0_9 = arith.constant 0 : index
    %c0_10 = arith.constant 0 : index
    %13 = vector.load %arg5[%c0_9, %c0_10] : memref<64x32xbf16, #tpu.memory_space<vmem>>, vector<64x32xbf16>
    %cst_11 = arith.constant dense<0.000000e+00> : vector<16x32xf32>
    %14 = tpu.matmul %12, %13, %cst_11 {dimension_numbers = #tpu.dot_dimension_numbers<[1], [0], [0], [1], [0, 0, 1, 1], [], []>} : vector<16x64xbf16>, vector<64x32xbf16>, vector<16x32xf32> -> vector<16x32xf32>
    %15 = arith.addf %11, %14 : vector<16x32xf32>
    %c0_12 = arith.constant 0 : index
    %c0_13 = arith.constant 0 : index
    %16 = vector.load %arg10[%c0_12, %c0_13] : memref<16x32xf32, #tpu.memory_space<vmem>>, vector<16x32xf32>
    tpu.vector_store %arg10[%c0_12, %c0_13], %15 {strides = array<i32>} : memref<16x32xf32, #tpu.memory_space<vmem>>, vector<16x32xf32>,
    %c0_i32_14 = arith.constant 0 : i32
    %17 = arith.cmpi eq, %arg1, %c0_i32_14 : i32
    %18 = arith.extui %17 : i1 to i32
    %c0_i32_15 = arith.constant 0 : i32
    %19 = arith.cmpi ne, %18, %c0_i32_15 : i32
    scf.if %19 {
      %c0_16 = arith.constant 0 : index
      %c0_17 = arith.constant 0 : index
      %20 = vector.load %arg10[%c0_16, %c0_17] : memref<16x32xf32, #tpu.memory_space<vmem>>, vector<16x32xf32>
      %c0_18 = arith.constant 0 : index
      %c0_19 = arith.constant 0 : index
      %21 = vector.load %arg6[%c0_18, %c0_19] : memref<1x32xf32, #tpu.memory_space<vmem>>, vector<1x32xf32>
      %22 = vector.broadcast %21 : vector<1x32xf32> to vector<16x32xf32>
      %23 = arith.addf %20, %22 : vector<16x32xf32>
      %24 = arith.extf %3 : vector<16x32xbf16> to vector<16x32xf32>
      %25 = arith.addf %23, %24 : vector<16x32xf32>
      %cst_20 = arith.constant dense<0.000000e+00> : vector<16xf32>
      %26 = vector.multi_reduction <add>, %25, %cst_20 [1] : vector<16x32xf32> to vector<16xf32>
      %27 = vector.shape_cast %26 : vector<16xf32> to vector<16x1xf32>
      %cst_21 = arith.constant 3.200000e+01 : f32
      %28 = vector.broadcast %cst_21 : f32 to vector<16x1xf32>
      %29 = arith.divf %27, %28 : vector<16x1xf32>
      %30 = vector.broadcast %29 : vector<16x1xf32> to vector<16x32xf32>
      %31 = arith.subf %25, %30 : vector<16x32xf32>
      %32 = arith.mulf %31, %31 : vector<16x32xf32>
      %cst_22 = arith.constant dense<0.000000e+00> : vector<16xf32>
      %33 = vector.multi_reduction <add>, %32, %cst_22 [1] : vector<16x32xf32> to vector<16xf32>
      %34 = vector.shape_cast %33 : vector<16xf32> to vector<16x1xf32>
      %cst_23 = arith.constant 3.200000e+01 : f32
      %35 = vector.broadcast %cst_23 : f32 to vector<16x1xf32>
      %36 = arith.divf %34, %35 : vector<16x1xf32>
      %37 = vector.broadcast %29 : vector<16x1xf32> to vector<16x32xf32>
      %38 = arith.subf %25, %37 : vector<16x32xf32>
      %cst_24 = arith.constant 9.99999974E-6 : f32
      %39 = vector.broadcast %cst_24 : f32 to vector<16x1xf32>
      %40 = arith.addf %36, %39 : vector<16x1xf32>
      %41 = math.rsqrt %40 : vector<16x1xf32>
      %42 = vector.broadcast %41 : vector<16x1xf32> to vector<16x32xf32>
      %43 = arith.mulf %38, %42 : vector<16x32xf32>
      %c0_25 = arith.constant 0 : index
      %c0_26 = arith.constant 0 : index
      %44 = vector.load %arg7[%c0_25, %c0_26] : memref<1x32xf32, #tpu.memory_space<vmem>>, vector<1x32xf32>
      %45 = vector.broadcast %44 : vector<1x32xf32> to vector<16x32xf32>
      %46 = arith.mulf %43, %45 : vector<16x32xf32>
      %c0_27 = arith.constant 0 : index
      %c0_28 = arith.constant 0 : index
      %47 = vector.load %arg8[%c0_27, %c0_28] : memref<1x32xf32, #tpu.memory_space<vmem>>, vector<1x32xf32>
      %48 = vector.broadcast %47 : vector<1x32xf32> to vector<16x32xf32>
      %49 = arith.addf %46, %48 : vector<16x32xf32>
      %50 = arith.truncf %49 : vector<16x32xf32> to vector<16x32xbf16>
      %c0_29 = arith.constant 0 : index
      %c0_30 = arith.constant 0 : index
      %51 = vector.load %arg9[%c0_29, %c0_30] : memref<16x32xbf16, #tpu.memory_space<vmem>>, vector<16x32xbf16>
      tpu.vector_store %arg9[%c0_29, %c0_30], %50 {strides = array<i32>} : memref<16x32xbf16, #tpu.memory_space<vmem>>, vector<16x32xbf16>,
    } else {
    }
    return
  }
  func.func @transform_0(%arg0: i32, %arg1: i32) -> (i32, i32) {
    %c0_i32 = arith.constant 0 : i32
    %c0_i32_0 = arith.constant 0 : i32
    return %arg0, %c0_i32 : i32, i32
  }
  func.func @transform_1(%arg0: i32, %arg1: i32) -> (i32, i32) {
    %c0_i32 = arith.constant 0 : i32
    %c0_i32_0 = arith.constant 0 : i32
    return %c0_i32, %arg1 : i32, i32
  }
  func.func @transform_2(%arg0: i32, %arg1: i32) -> (i32, i32) {
    %c0_i32 = arith.constant 0 : i32
    %c0_i32_0 = arith.constant 0 : i32
    return %c0_i32, %arg1 : i32, i32
  }
  func.func @transform_3(%arg0: i32, %arg1: i32) -> (i32, i32) {
    %c0_i32 = arith.constant 0 : i32
    %c0_i32_0 = arith.constant 0 : i32
    return %arg1, %c0_i32 : i32, i32
  }
  func.func @transform_4(%arg0: i32, %arg1: i32) -> (i32, i32) {
    %c0_i32 = arith.constant 0 : i32
    %c0_i32_0 = arith.constant 0 : i32
    %c0_i32_1 = arith.constant 0 : i32
    return %c0_i32, %c0_i32_0 : i32, i32
  }
  func.func @transform_5(%arg0: i32, %arg1: i32) -> (i32, i32) {
    %c0_i32 = arith.constant 0 : i32
    %c0_i32_0 = arith.constant 0 : i32
    %c0_i32_1 = arith.constant 0 : i32
    return %c0_i32, %c0_i32_0 : i32, i32
  }
  func.func @transform_6(%arg0: i32, %arg1: i32) -> (i32, i32) {
    %c0_i32 = arith.constant 0 : i32
    %c0_i32_0 = arith.constant 0 : i32
    %c0_i32_1 = arith.constant 0 : i32
    return %c0_i32, %c0_i32_0 : i32, i32
  }
  func.func @transform_7(%arg0: i32, %arg1: i32) -> (i32, i32) {
    %c0_i32 = arith.constant 0 : i32
    %c0_i32_0 = arith.constant 0 : i32
    return %arg0, %c0_i32 : i32, i32
  }
}

module attributes {stable_mosaic.version = 11 : i64} {
  func.func @_linear_kernel(%arg0: i32, %arg1: i32, %arg2: i32, %arg3: memref<16x32xbf16, #tpu.memory_space<vmem>>, %arg4: memref<32x64xbf16, #tpu.memory_space<vmem>>, %arg5: memref<1x64xf32, #tpu.memory_space<vmem>>, %arg6: memref<16x64xbf16, #tpu.memory_space<vmem>>, %arg7: memref<16x64xf32, #tpu.memory_space<vmem>>) attributes {dimension_semantics = [#tpu.dimension_semantics<parallel>, #tpu.dimension_semantics<parallel>, #tpu.dimension_semantics<arbitrary>], iteration_bounds = array<i64: 1, 1, 1>, scalar_prefetch = 0 : i64, scratch_operands = 1 : i64, tpu.core_type = #tpu.core_type<tc>, window_params = [{transform_indices = @transform_0, window_bounds = array<i64: 16, 32>}, {transform_indices = @transform_1, window_bounds = array<i64: 32, 64>}, {transform_indices = @transform_2, window_bounds = array<i64: 1, 64>}, {transform_indices = @transform_3, window_bounds = array<i64: 16, 64>}]} {
    %c0_i32 = arith.constant 0 : i32
    %0 = arith.cmpi eq, %arg2, %c0_i32 : i32
    %1 = arith.extui %0 : i1 to i32
    %c0_i32_0 = arith.constant 0 : i32
    %2 = arith.cmpi ne, %1, %c0_i32_0 : i32
    scf.if %2 {
      %cst_10 = arith.constant 0.000000e+00 : f32
      %12 = vector.broadcast %cst_10 : f32 to vector<16x64xf32>
      %c0_11 = arith.constant 0 : index
      %c0_12 = arith.constant 0 : index
      %13 = vector.load %arg7[%c0_11, %c0_12] : memref<16x64xf32, #tpu.memory_space<vmem>>, vector<16x64xf32>
      tpu.vector_store %arg7[%c0_11, %c0_12], %12 {strides = array<i32>} : memref<16x64xf32, #tpu.memory_space<vmem>>, vector<16x64xf32>,
    } else {
    }
    %c0 = arith.constant 0 : index
    %c0_1 = arith.constant 0 : index
    %3 = vector.load %arg7[%c0, %c0_1] : memref<16x64xf32, #tpu.memory_space<vmem>>, vector<16x64xf32>
    %c0_2 = arith.constant 0 : index
    %c0_3 = arith.constant 0 : index
    %4 = vector.load %arg3[%c0_2, %c0_3] : memref<16x32xbf16, #tpu.memory_space<vmem>>, vector<16x32xbf16>
    %c0_4 = arith.constant 0 : index
    %c0_5 = arith.constant 0 : index
    %5 = vector.load %arg4[%c0_4, %c0_5] : memref<32x64xbf16, #tpu.memory_space<vmem>>, vector<32x64xbf16>
    %cst = arith.constant dense<0.000000e+00> : vector<16x64xf32>
    %6 = tpu.matmul %4, %5, %cst {dimension_numbers = #tpu.dot_dimension_numbers<[1], [0], [0], [1], [0, 0, 1, 1], [], []>} : vector<16x32xbf16>, vector<32x64xbf16>, vector<16x64xf32> -> vector<16x64xf32>
    %7 = arith.addf %3, %6 : vector<16x64xf32>
    %c0_6 = arith.constant 0 : index
    %c0_7 = arith.constant 0 : index
    %8 = vector.load %arg7[%c0_6, %c0_7] : memref<16x64xf32, #tpu.memory_space<vmem>>, vector<16x64xf32>
    tpu.vector_store %arg7[%c0_6, %c0_7], %7 {strides = array<i32>} : memref<16x64xf32, #tpu.memory_space<vmem>>, vector<16x64xf32>,
    %c0_i32_8 = arith.constant 0 : i32
    %9 = arith.cmpi eq, %arg2, %c0_i32_8 : i32
    %10 = arith.extui %9 : i1 to i32
    %c0_i32_9 = arith.constant 0 : i32
    %11 = arith.cmpi ne, %10, %c0_i32_9 : i32
    scf.if %11 {
      %c0_10 = arith.constant 0 : index
      %c0_11 = arith.constant 0 : index
      %12 = vector.load %arg7[%c0_10, %c0_11] : memref<16x64xf32, #tpu.memory_space<vmem>>, vector<16x64xf32>
      %c0_12 = arith.constant 0 : index
      %c0_13 = arith.constant 0 : index
      %13 = vector.load %arg5[%c0_12, %c0_13] : memref<1x64xf32, #tpu.memory_space<vmem>>, vector<1x64xf32>
      %14 = vector.broadcast %13 : vector<1x64xf32> to vector<16x64xf32>
      %15 = arith.addf %12, %14 : vector<16x64xf32>
      %16 = arith.truncf %15 : vector<16x64xf32> to vector<16x64xbf16>
      %c0_14 = arith.constant 0 : index
      %c0_15 = arith.constant 0 : index
      %17 = vector.load %arg6[%c0_14, %c0_15] : memref<16x64xbf16, #tpu.memory_space<vmem>>, vector<16x64xbf16>
      tpu.vector_store %arg6[%c0_14, %c0_15], %16 {strides = array<i32>} : memref<16x64xbf16, #tpu.memory_space<vmem>>, vector<16x64xbf16>,
    } else {
    }
    return
  }
  func.func @transform_0(%arg0: i32, %arg1: i32, %arg2: i32) -> (i32, i32) {
    %c0_i32 = arith.constant 0 : i32
    return %arg0, %arg2 : i32, i32
  }
  func.func @transform_1(%arg0: i32, %arg1: i32, %arg2: i32) -> (i32, i32) {
    %c0_i32 = arith.constant 0 : i32
    return %arg2, %arg1 : i32, i32
  }
  func.func @transform_2(%arg0: i32, %arg1: i32, %arg2: i32) -> (i32, i32) {
    %c0_i32 = arith.constant 0 : i32
    %c0_i32_0 = arith.constant 0 : i32
    return %c0_i32, %arg1 : i32, i32
  }
  func.func @transform_3(%arg0: i32, %arg1: i32, %arg2: i32) -> (i32, i32) {
    %c0_i32 = arith.constant 0 : i32
    return %arg0, %arg1 : i32, i32
  }
}

module attributes {stable_mosaic.version = 11 : i64} {
  func.func @_linear_kernel(%arg0: i32, %arg1: i32, %arg2: i32, %arg3: memref<16x32xbf16, #tpu.memory_space<vmem>>, %arg4: memref<32x256xbf16, #tpu.memory_space<vmem>>, %arg5: memref<1x256xf32, #tpu.memory_space<vmem>>, %arg6: memref<16x256xf32, #tpu.memory_space<vmem>>, %arg7: memref<16x256xf32, #tpu.memory_space<vmem>>) attributes {dimension_semantics = [#tpu.dimension_semantics<parallel>, #tpu.dimension_semantics<parallel>, #tpu.dimension_semantics<arbitrary>], iteration_bounds = array<i64: 1, 1, 1>, scalar_prefetch = 0 : i64, scratch_operands = 1 : i64, tpu.core_type = #tpu.core_type<tc>, window_params = [{transform_indices = @transform_0, window_bounds = array<i64: 16, 32>}, {transform_indices = @transform_1, window_bounds = array<i64: 32, 256>}, {transform_indices = @transform_2, window_bounds = array<i64: 1, 256>}, {transform_indices = @transform_3, window_bounds = array<i64: 16, 256>}]} {
    %c0_i32 = arith.constant 0 : i32
    %0 = arith.cmpi eq, %arg2, %c0_i32 : i32
    %1 = arith.extui %0 : i1 to i32
    %c0_i32_0 = arith.constant 0 : i32
    %2 = arith.cmpi ne, %1, %c0_i32_0 : i32
    scf.if %2 {
      %cst_10 = arith.constant 0.000000e+00 : f32
      %12 = vector.broadcast %cst_10 : f32 to vector<16x256xf32>
      %c0_11 = arith.constant 0 : index
      %c0_12 = arith.constant 0 : index
      %13 = vector.load %arg7[%c0_11, %c0_12] : memref<16x256xf32, #tpu.memory_space<vmem>>, vector<16x256xf32>
      tpu.vector_store %arg7[%c0_11, %c0_12], %12 {strides = array<i32>} : memref<16x256xf32, #tpu.memory_space<vmem>>, vector<16x256xf32>,
    } else {
    }
    %c0 = arith.constant 0 : index
    %c0_1 = arith.constant 0 : index
    %3 = vector.load %arg7[%c0, %c0_1] : memref<16x256xf32, #tpu.memory_space<vmem>>, vector<16x256xf32>
    %c0_2 = arith.constant 0 : index
    %c0_3 = arith.constant 0 : index
    %4 = vector.load %arg3[%c0_2, %c0_3] : memref<16x32xbf16, #tpu.memory_space<vmem>>, vector<16x32xbf16>
    %c0_4 = arith.constant 0 : index
    %c0_5 = arith.constant 0 : index
    %5 = vector.load %arg4[%c0_4, %c0_5] : memref<32x256xbf16, #tpu.memory_space<vmem>>, vector<32x256xbf16>
    %cst = arith.constant dense<0.000000e+00> : vector<16x256xf32>
    %6 = tpu.matmul %4, %5, %cst {dimension_numbers = #tpu.dot_dimension_numbers<[1], [0], [0], [1], [0, 0, 1, 1], [], []>} : vector<16x32xbf16>, vector<32x256xbf16>, vector<16x256xf32> -> vector<16x256xf32>
    %7 = arith.addf %3, %6 : vector<16x256xf32>
    %c0_6 = arith.constant 0 : index
    %c0_7 = arith.constant 0 : index
    %8 = vector.load %arg7[%c0_6, %c0_7] : memref<16x256xf32, #tpu.memory_space<vmem>>, vector<16x256xf32>
    tpu.vector_store %arg7[%c0_6, %c0_7], %7 {strides = array<i32>} : memref<16x256xf32, #tpu.memory_space<vmem>>, vector<16x256xf32>,
    %c0_i32_8 = arith.constant 0 : i32
    %9 = arith.cmpi eq, %arg2, %c0_i32_8 : i32
    %10 = arith.extui %9 : i1 to i32
    %c0_i32_9 = arith.constant 0 : i32
    %11 = arith.cmpi ne, %10, %c0_i32_9 : i32
    scf.if %11 {
      %c0_10 = arith.constant 0 : index
      %c0_11 = arith.constant 0 : index
      %12 = vector.load %arg7[%c0_10, %c0_11] : memref<16x256xf32, #tpu.memory_space<vmem>>, vector<16x256xf32>
      %c0_12 = arith.constant 0 : index
      %c0_13 = arith.constant 0 : index
      %13 = vector.load %arg5[%c0_12, %c0_13] : memref<1x256xf32, #tpu.memory_space<vmem>>, vector<1x256xf32>
      %14 = vector.broadcast %13 : vector<1x256xf32> to vector<16x256xf32>
      %15 = arith.addf %12, %14 : vector<16x256xf32>
      %c0_14 = arith.constant 0 : index
      %c0_15 = arith.constant 0 : index
      %16 = vector.load %arg6[%c0_14, %c0_15] : memref<16x256xf32, #tpu.memory_space<vmem>>, vector<16x256xf32>
      tpu.vector_store %arg6[%c0_14, %c0_15], %15 {strides = array<i32>} : memref<16x256xf32, #tpu.memory_space<vmem>>, vector<16x256xf32>,
    } else {
    }
    return
  }
  func.func @transform_0(%arg0: i32, %arg1: i32, %arg2: i32) -> (i32, i32) {
    %c0_i32 = arith.constant 0 : i32
    return %arg0, %arg2 : i32, i32
  }
  func.func @transform_1(%arg0: i32, %arg1: i32, %arg2: i32) -> (i32, i32) {
    %c0_i32 = arith.constant 0 : i32
    return %arg2, %arg1 : i32, i32
  }
  func.func @transform_2(%arg0: i32, %arg1: i32, %arg2: i32) -> (i32, i32) {
    %c0_i32 = arith.constant 0 : i32
    %c0_i32_0 = arith.constant 0 : i32
    return %c0_i32, %arg1 : i32, i32
  }
  func.func @transform_3(%arg0: i32, %arg1: i32, %arg2: i32) -> (i32, i32) {
    %c0_i32 = arith.constant 0 : i32
    return %arg0, %arg1 : i32, i32
  }
}

</mosaic_0001>

<llo_original>
// kernel: _lambda_.33
$region0: #{_lambda_.33}
  #allocation0 [shape = 'u32[]', space=smem, size = 0x4, offset = 0x4, fixed_abs, tag = 'smem constant byte address 0x4 - core index']
  #allocation1 [shape = 'u32[144,128]{1,0:T(1,128)}', space=vmem, size = 0x12000, scoped, tag = 'internal scratch']
  #allocation2 [shape = 'f32[16,96]{1,0:T(8,128)}', space=vmem, size = 0x2000, scoped, tag = 'scratch operand']
  %s0 = inlined_call_operand.vmem [shape: bf16[16,32], index: 0, kind: input, shape index: {}]
  %s1 = inlined_call_operand.vmem [shape: bf16[32,96], index: 1, kind: input, shape index: {}]
  %s2 = inlined_call_operand.vmem [shape: f32[1,96], index: 2, kind: input, shape index: {}]
  %s3 = inlined_call_operand.vmem [shape: bf16[16,96], index: 3, kind: output, shape index: {}]
  %s4 = sld [smem:[#allocation0]]
  $region30: #{_lambda_.33} parent=0
    _
  %s6 = ssub.s32 1, %s4
  %s7 = scalar_select 0, %s6, %s4
  // Predicated region
  $region2: #{_lambda_.33} parent=0 // pred_check
    _
  $region3: #{_lambda_.33} parent=0 // pred_check_branch
    %9 = sbr.rel (0) target = $region5
  $region4: #{_lambda_.33} parent=0 // pred_region
    _
  $region5: #{_lambda_.33} parent=0 // pred_fallthru
    _
  // Predicated region
  $region6: #{_lambda_.33} parent=0 // pred_check
    _
  $region7: #{_lambda_.33} parent=0 // pred_check_branch
    %11 = sbr.rel (0) target = $region9
  $region8: #{_lambda_.33} parent=0 // pred_region
    _
  $region9: #{_lambda_.33} parent=0 // pred_fallthru
    _
  // Predicated region
  $region10: #{_lambda_.33} parent=0 // pred_check
    _
  $region11: #{_lambda_.33} parent=0 // pred_check_branch
    %13 = sbr.rel (0) target = $region13
  $region12: #{_lambda_.33} parent=0 // pred_region
    _
  $region13: #{_lambda_.33} parent=0 // pred_fallthru
    _
  %p15 = scmp.eq.s32.totalorder 0, 0
  // Predicated region
  $region14: #{_lambda_.33} parent=0 // pred_check
    %p16 = pneg %p15
  $region15: #{_lambda_.33} parent=0 // pred_check_branch
    %18 = sbr.rel (%p16) target = $region17
  $region16: #{_lambda_.33} parent=0 // pred_region
    %vm19 = vcmask 785408
    %20 = vst.msk [vmem:[#allocation2] sm:$0xff] %vm19, 0.0
    %21 = vst.msk [vmem:[#allocation2 + $0x8] sm:$0xff] %vm19, 0.0
  $region17: #{_lambda_.33} parent=0 // pred_fallthru
    _
  %v22 = vld [vmem:[#allocation2] sm:$0xff]
  %v23 = vld [vmem:[#allocation2 + $0x8] sm:$0xff]
  %v24 = vld [vmem:[%s0] sm:$0xf]
  %v25 = vld [vmem:[%s0 + $0x4] sm:$0xf]
  %v26 = vld [vmem:[%s1] sm:$0xf]
  %v27 = vld [vmem:[%s1 + $0x4] sm:$0xf]
  %v28 = vld [vmem:[%s1 + $0x8] sm:$0xf]
  %v29 = vld [vmem:[%s1 + $0xc] sm:$0xf]
  %v32 = vunpack.c.l.b16 %v24
  %v33 = vunpack.c.l.b16 %v25
  %v34 = vpack.c.b16 %v33, %v32
  %v39 = vunpack.c.l.b16 %v26
  %v40 = vunpack.c.l.b16 %v27
  %v41 = vunpack.c.l.b16 %v28
  %v42 = vunpack.c.l.b16 %v29
  %v43 = vpack.c.b16 %v40, %v39
  %v44 = vpack.c.b16 %v42, %v41
  %vm47 = vcmask 261120
  %v49 = vsel %vm47, %v34, 0
  %51 = vmatprep.subr.bf16.mxu0 0
  %52 = vmatpush1.bf16.msra.mxu0 %v43
  %53 = vmatprep.subr.bf16.mxu0 0
  %54 = vmatpush1.bf16.msra.mxu0 %v44
  %55 = vmatprep.subr.bf16.mxu0 0
  %56 = vmatpush1.bf16.msra.mxu0 0
  %57 = vmatprep.subr.bf16.mxu0 0
  %58 = vmatpush1.bf16.msra.mxu0 0
  %59 = vmatprep.subr.bf16.mxu0 0
  %60 = vmatpush1.bf16.msra.mxu0 0
  %61 = vmatprep.subr.bf16.mxu0 0
  %62 = vmatpush1.bf16.msra.mxu0 0
  %63 = vmatprep.subr.bf16.mxu0 0
  %64 = vmatpush1.bf16.msra.mxu0 0
  %65 = vmatprep.subr.bf16.mxu0 0
  %66 = vmatpush1.bf16.msra.mxu0 0
  %67 = vmatprep.subr.bf16.mxu0 0
  %68 = vmatpush1.bf16.msra.mxu0 0
  %69 = vmatprep.subr.bf16.mxu0 0
  %70 = vmatpush1.bf16.msra.mxu0 0
  %71 = vmatprep.subr.bf16.mxu0 0
  %72 = vmatpush1.bf16.msra.mxu0 0
  %73 = vmatprep.subr.bf16.mxu0 0
  %74 = vmatpush1.bf16.msra.mxu0 0
  %75 = vmatprep.subr.bf16.mxu0 0
  %76 = vmatpush1.bf16.msra.mxu0 0
  %77 = vmatprep.subr.bf16.mxu0 0
  %78 = vmatpush1.bf16.msra.mxu0 0
  %79 = vmatprep.subr.bf16.mxu0 0
  %80 = vmatpush1.bf16.msra.mxu0 0
  %81 = vmatprep.subr.bf16.mxu0 0
  %82 = vmatpush1.bf16.msra.mxu0 0
  %83 = vmatprep.mubr.bf16.mxu0 0
  %84 = vmatmul.mubr.bf16.gmra.mrb[0].mxu0 %v49
  %v85 = vpop.f32.mrb[0].mxu0
  %v86 = vadd.f32 0.0, %v85
  %v87 = vpop.f32.mrb[0].mxu0
  %v88 = vpop.f32.mrb[0].mxu0
  %v89 = vadd.f32 0.0, %v88
  %v90 = vpop.f32.mrb[0].mxu0
  %91 = vdwg.mxu0
  %v92 = vadd.f32 %v22, %v86
  %v93 = vadd.f32 %v23, %v89
  %vm94 = vcmask 785408
  %95 = vst.msk [vmem:[#allocation2] sm:$0xff] %vm94, %v92
  %96 = vst.msk [vmem:[#allocation2 + $0x8] sm:$0xff] %vm94, %v93
  // Predicated region
  $region18: #{_lambda_.33} parent=0 // pred_check
    %p97 = pneg %p15
  $region19: #{_lambda_.33} parent=0 // pred_check_branch
    %99 = sbr.rel (%p97) target = $region21
  $region20: #{_lambda_.33} parent=0 // pred_region
    %v100 = vld [vmem:[#allocation2] sm:$0xff]
    %v101 = vld [vmem:[#allocation2 + $0x8] sm:$0xff]
    %v102 = vld [vmem:[%s2] sm:$0x1]
    %v104 = vlaneseq
    %v105 = vshrl.u32 %v104, 7
    %v106 = vsub.s32 0, %v105
    %v107 = vrot.slane %v102, %v106
    %v109 = vadd.f32 %v100, %v107
    %v110 = vadd.f32 %v101, %v107
    %v111 = vpack.c.bf16 %v110, %v109
    %v113 = vunpack.c.l.b16 %v111
    %v114 = vunpack.c.h.b16 %v111
    %v115 = vpack.c.b16 %v113, %v113
    %v116 = vpack.c.b16 %v114, %v114
    %vm119 = vcmask 781312
    %120 = vst.msk [vmem:[%s3] sm:$0xf] %vm119, %v115
    %121 = vst.msk [vmem:[%s3 + $0x4] sm:$0xf] %vm119, %v116
  $region21: #{_lambda_.33} parent=0 // pred_fallthru
    _
  // Predicated region
  $region22: #{_lambda_.33} parent=0 // pred_check
    _
  $region23: #{_lambda_.33} parent=0 // pred_check_branch
    %123 = sbr.rel (0) target = $region25
  $region24: #{_lambda_.33} parent=0 // pred_region
    _
  $region25: #{_lambda_.33} parent=0 // pred_fallthru
    _
  // Predicated region
  $region26: #{_lambda_.33} parent=0 // pred_check
    _
  $region27: #{_lambda_.33} parent=0 // pred_check_branch
    %125 = sbr.rel (0) target = $region29
  $region28: #{_lambda_.33} parent=0 // pred_region
    _
  $region29: #{_lambda_.33} parent=0 // pred_fallthru
    _

// kernel: _lambda_.35
$region0: #{_lambda_.35}
  #allocation0 [shape = 'u32[]', space=smem, size = 0x4, offset = 0x4, fixed_abs, tag = 'smem constant byte address 0x4 - core index']
  #allocation1 [shape = 'u32[144,128]{1,0:T(1,128)}', space=vmem, size = 0x12000, scoped, tag = 'internal scratch']
  #allocation2 [shape = 'f32[16,32]{1,0:T(8,128)}', space=vmem, size = 0x2000, scoped, tag = 'scratch operand']
  %s0 = inlined_call_operand.vmem [shape: bf16[16,32], index: 0, kind: input, shape index: {}]
  %s1 = inlined_call_operand.vmem [shape: bf16[32,32], index: 1, kind: input, shape index: {}]
  %s2 = inlined_call_operand.vmem [shape: f32[1,32], index: 2, kind: input, shape index: {}]
  %s3 = inlined_call_operand.vmem [shape: bf16[16,32], index: 3, kind: input, shape index: {}]
  %s4 = inlined_call_operand.vmem [shape: f32[1,32], index: 4, kind: input, shape index: {}]
  %s5 = inlined_call_operand.vmem [shape: f32[1,32], index: 5, kind: input, shape index: {}]
  %s6 = inlined_call_operand.vmem [shape: bf16[16,32], index: 6, kind: output, shape index: {}]
  %s7 = sld [smem:[#allocation0]]
  $region42: #{_lambda_.35} parent=0
    _
  %s9 = ssub.s32 1, %s7
  %s10 = scalar_select 0, %s9, %s7
  // Predicated region
  $region2: #{_lambda_.35} parent=0 // pred_check
    _
  $region3: #{_lambda_.35} parent=0 // pred_check_branch
    %12 = sbr.rel (0) target = $region5
  $region4: #{_lambda_.35} parent=0 // pred_region
    _
  $region5: #{_lambda_.35} parent=0 // pred_fallthru
    _
  // Predicated region
  $region6: #{_lambda_.35} parent=0 // pred_check
    _
  $region7: #{_lambda_.35} parent=0 // pred_check_branch
    %14 = sbr.rel (0) target = $region9
  $region8: #{_lambda_.35} parent=0 // pred_region
    _
  $region9: #{_lambda_.35} parent=0 // pred_fallthru
    _
  // Predicated region
  $region10: #{_lambda_.35} parent=0 // pred_check
    _
  $region11: #{_lambda_.35} parent=0 // pred_check_branch
    %16 = sbr.rel (0) target = $region13
  $region12: #{_lambda_.35} parent=0 // pred_region
    _
  $region13: #{_lambda_.35} parent=0 // pred_fallthru
    _
  // Predicated region
  $region14: #{_lambda_.35} parent=0 // pred_check
    _
  $region15: #{_lambda_.35} parent=0 // pred_check_branch
    %18 = sbr.rel (0) target = $region17
  $region16: #{_lambda_.35} parent=0 // pred_region
    _
  $region17: #{_lambda_.35} parent=0 // pred_fallthru
    _
  // Predicated region
  $region18: #{_lambda_.35} parent=0 // pred_check
    _
  $region19: #{_lambda_.35} parent=0 // pred_check_branch
    %20 = sbr.rel (0) target = $region21
  $region20: #{_lambda_.35} parent=0 // pred_region
    _
  $region21: #{_lambda_.35} parent=0 // pred_fallthru
    _
  // Predicated region
  $region22: #{_lambda_.35} parent=0 // pred_check
    _
  $region23: #{_lambda_.35} parent=0 // pred_check_branch
    %22 = sbr.rel (0) target = $region25
  $region24: #{_lambda_.35} parent=0 // pred_region
    _
  $region25: #{_lambda_.35} parent=0 // pred_fallthru
    _
  %p24 = scmp.eq.s32.totalorder 0, 0
  // Predicated region
  $region26: #{_lambda_.35} parent=0 // pred_check
    %p25 = pneg %p24
  $region27: #{_lambda_.35} parent=0 // pred_check_branch
    %27 = sbr.rel (%p25) target = $region29
  $region28: #{_lambda_.35} parent=0 // pred_region
    %vm28 = vcmask 261120
    %29 = vst.msk [vmem:[#allocation2] sm:$0xff] %vm28, 0.0
    %30 = vst.msk [vmem:[#allocation2 + $0x8] sm:$0xff] %vm28, 0.0
  $region29: #{_lambda_.35} parent=0 // pred_fallthru
    _
  %v31 = vld [vmem:[#allocation2] sm:$0xff]
  %v32 = vld [vmem:[#allocation2 + $0x8] sm:$0xff]
  %v33 = vld [vmem:[%s0] sm:$0xf]
  %v34 = vld [vmem:[%s0 + $0x4] sm:$0xf]
  %v35 = vld [vmem:[%s1] sm:$0xf]
  %v36 = vld [vmem:[%s1 + $0x4] sm:$0xf]
  %v37 = vld [vmem:[%s1 + $0x8] sm:$0xf]
  %v38 = vld [vmem:[%s1 + $0xc] sm:$0xf]
  %v41 = vunpack.c.l.b16 %v33
  %v42 = vunpack.c.l.b16 %v34
  %v43 = vpack.c.b16 %v42, %v41
  %v48 = vunpack.c.l.b16 %v35
  %v49 = vunpack.c.l.b16 %v36
  %v50 = vunpack.c.l.b16 %v37
  %v51 = vunpack.c.l.b16 %v38
  %v52 = vpack.c.b16 %v49, %v48
  %v53 = vpack.c.b16 %v51, %v50
  %vm56 = vcmask 261120
  %v58 = vsel %vm56, %v43, 0
  %60 = vmatprep.subr.bf16.mxu0 0
  %61 = vmatpush1.bf16.msra.mxu0 %v52
  %62 = vmatprep.subr.bf16.mxu0 0
  %63 = vmatpush1.bf16.msra.mxu0 %v53
  %64 = vmatprep.subr.bf16.mxu0 0
  %65 = vmatpush1.bf16.msra.mxu0 0
  %66 = vmatprep.subr.bf16.mxu0 0
  %67 = vmatpush1.bf16.msra.mxu0 0
  %68 = vmatprep.subr.bf16.mxu0 0
  %69 = vmatpush1.bf16.msra.mxu0 0
  %70 = vmatprep.subr.bf16.mxu0 0
  %71 = vmatpush1.bf16.msra.mxu0 0
  %72 = vmatprep.subr.bf16.mxu0 0
  %73 = vmatpush1.bf16.msra.mxu0 0
  %74 = vmatprep.subr.bf16.mxu0 0
  %75 = vmatpush1.bf16.msra.mxu0 0
  %76 = vmatprep.subr.bf16.mxu0 0
  %77 = vmatpush1.bf16.msra.mxu0 0
  %78 = vmatprep.subr.bf16.mxu0 0
  %79 = vmatpush1.bf16.msra.mxu0 0
  %80 = vmatprep.subr.bf16.mxu0 0
  %81 = vmatpush1.bf16.msra.mxu0 0
  %82 = vmatprep.subr.bf16.mxu0 0
  %83 = vmatpush1.bf16.msra.mxu0 0
  %84 = vmatprep.subr.bf16.mxu0 0
  %85 = vmatpush1.bf16.msra.mxu0 0
  %86 = vmatprep.subr.bf16.mxu0 0
  %87 = vmatpush1.bf16.msra.mxu0 0
  %88 = vmatprep.subr.bf16.mxu0 0
  %89 = vmatpush1.bf16.msra.mxu0 0
  %90 = vmatprep.subr.bf16.mxu0 0
  %91 = vmatpush1.bf16.msra.mxu0 0
  %92 = vmatprep.mubr.bf16.mxu0 0
  %93 = vmatmul.mubr.bf16.gmra.mrb[0].mxu0 %v58
  %v94 = vpop.f32.mrb[0].mxu0
  %v95 = vadd.f32 0.0, %v94
  %v96 = vpop.f32.mrb[0].mxu0
  %v97 = vpop.f32.mrb[0].mxu0
  %v98 = vadd.f32 0.0, %v97
  %v99 = vpop.f32.mrb[0].mxu0
  %100 = vdwg.mxu0
  %v101 = vadd.f32 %v31, %v95
  %v102 = vadd.f32 %v32, %v98
  %103 = vst.msk [vmem:[#allocation2] sm:$0xff] %vm56, %v101
  %104 = vst.msk [vmem:[#allocation2 + $0x8] sm:$0xff] %vm56, %v102
  // Predicated region
  $region30: #{_lambda_.35} parent=0 // pred_check
    %p105 = pneg %p24
  $region31: #{_lambda_.35} parent=0 // pred_check_branch
    %107 = sbr.rel (%p105) target = $region33
  $region32: #{_lambda_.35} parent=0 // pred_region
    %v108 = vld [vmem:[#allocation2] sm:$0xff]
    %v109 = vld [vmem:[#allocation2 + $0x8] sm:$0xff]
    %v110 = vld [vmem:[%s2] sm:$0x1]
    %v112 = vlaneseq
    %v113 = vshrl.u32 %v112, 7
    %v114 = vsub.s32 0, %v113
    %v115 = vrot.slane %v110, %v114
    %v117 = vadd.f32 %v108, %v115
    %v118 = vadd.f32 %v109, %v115
    %v119 = vld [vmem:[%s3] sm:$0xf]
    %v120 = vld [vmem:[%s3 + $0x4] sm:$0xf]
    %v121 = vunpack.c.l.bf16 %v119
    %v122 = vunpack.c.l.bf16 %v120
    %v123 = vadd.f32 %v117, %v121
    %v124 = vadd.f32 %v118, %v122
    %v125 = vsel %vm56, %v123, 0.0
    %126 = vadd.xlane.f32.xlu0 %v125
    %v127 = vpop.xlane.xlu0 %126
    %v128 = vsel %vm56, %v124, 0.0
    %129 = vadd.xlane.f32.xlu0 %v128
    %v130 = vpop.xlane.xlu0 %129
    %v131 = vrcp.pop 32.0
    %v132 = vmul.f32 %v127, %v131
    %v133 = vmul.f32 %v130, %v131
    %v134 = vsub.f32 %v123, %v132
    %v135 = vsub.f32 %v124, %v133
    %v136 = vmul.f32 %v134, %v134
    %v137 = vmul.f32 %v135, %v135
    %v138 = vsel %vm56, %v136, 0.0
    %139 = vadd.xlane.f32.xlu0 %v138
    %v140 = vpop.xlane.xlu0 %139
    %v141 = vsel %vm56, %v137, 0.0
    %142 = vadd.xlane.f32.xlu0 %v141
    %v143 = vpop.xlane.xlu0 %142
    %v144 = vmul.f32 %v140, %v131
    %v145 = vmul.f32 %v143, %v131
    %v146 = vadd.f32 %v144, 1e-05
    %v147 = vadd.f32 %v145, 1e-05
    %v148 = vrsqrt.pop %v146
    %v149 = vrsqrt.pop %v147
    %v150 = vmul.f32 %v134, %v148
    %v151 = vmul.f32 %v135, %v149
    %v152 = vld [vmem:[%s4] sm:$0x1]
    %v154 = vlaneseq
    %v155 = vshrl.u32 %v154, 7
    %v156 = vsub.s32 0, %v155
    %v157 = vrot.slane %v152, %v156
    %v159 = vmul.f32 %v150, %v157
    %v160 = vmul.f32 %v151, %v157
    %v161 = vld [vmem:[%s5] sm:$0x1]
    %v163 = vlaneseq
    %v164 = vshrl.u32 %v163, 7
    %v165 = vsub.s32 0, %v164
    %v166 = vrot.slane %v161, %v165
    %v168 = vadd.f32 %v159, %v166
    %v169 = vadd.f32 %v160, %v166
    %v170 = vpack.c.bf16 %v169, %v168
    %v172 = vunpack.c.l.b16 %v170
    %v173 = vunpack.c.h.b16 %v170
    %v174 = vpack.c.b16 %v172, %v172
    %v175 = vpack.c.b16 %v173, %v173
    %vm178 = vcmask 257024
    %179 = vst.msk [vmem:[%s6] sm:$0xf] %vm178, %v174
    %180 = vst.msk [vmem:[%s6 + $0x4] sm:$0xf] %vm178, %v175
  $region33: #{_lambda_.35} parent=0 // pred_fallthru
    _
  // Predicated region
  $region34: #{_lambda_.35} parent=0 // pred_check
    _
  $region35: #{_lambda_.35} parent=0 // pred_check_branch
    %182 = sbr.rel (0) target = $region37
  $region36: #{_lambda_.35} parent=0 // pred_region
    _
  $region37: #{_lambda_.35} parent=0 // pred_fallthru
    _
  // Predicated region
  $region38: #{_lambda_.35} parent=0 // pred_check
    _
  $region39: #{_lambda_.35} parent=0 // pred_check_branch
    %184 = sbr.rel (0) target = $region41
  $region40: #{_lambda_.35} parent=0 // pred_region
    _
  $region41: #{_lambda_.35} parent=0 // pred_fallthru
    _

// kernel: _lambda_.36
$region0: #{_lambda_.36}
  #allocation0 [shape = 'u32[]', space=smem, size = 0x4, offset = 0x4, fixed_abs, tag = 'smem constant byte address 0x4 - core index']
  #allocation1 [shape = 'u32[144,128]{1,0:T(1,128)}', space=vmem, size = 0x12000, scoped, tag = 'internal scratch']
  #allocation2 [shape = 'f32[16,32]{1,0:T(8,128)}', space=vmem, size = 0x2000, scoped, tag = 'scratch operand']
  %s0 = inlined_call_operand.vmem [shape: bf16[16,32], index: 0, kind: input, shape index: {}]
  %s1 = inlined_call_operand.vmem [shape: bf16[32,32], index: 1, kind: input, shape index: {}]
  %s2 = inlined_call_operand.vmem [shape: f32[1,32], index: 2, kind: input, shape index: {}]
  %s3 = inlined_call_operand.vmem [shape: bf16[16,32], index: 3, kind: output, shape index: {}]
  %s4 = sld [smem:[#allocation0]]
  $region30: #{_lambda_.36} parent=0
    _
  %s6 = ssub.s32 1, %s4
  %s7 = scalar_select 0, %s6, %s4
  // Predicated region
  $region2: #{_lambda_.36} parent=0 // pred_check
    _
  $region3: #{_lambda_.36} parent=0 // pred_check_branch
    %9 = sbr.rel (0) target = $region5
  $region4: #{_lambda_.36} parent=0 // pred_region
    _
  $region5: #{_lambda_.36} parent=0 // pred_fallthru
    _
  // Predicated region
  $region6: #{_lambda_.36} parent=0 // pred_check
    _
  $region7: #{_lambda_.36} parent=0 // pred_check_branch
    %11 = sbr.rel (0) target = $region9
  $region8: #{_lambda_.36} parent=0 // pred_region
    _
  $region9: #{_lambda_.36} parent=0 // pred_fallthru
    _
  // Predicated region
  $region10: #{_lambda_.36} parent=0 // pred_check
    _
  $region11: #{_lambda_.36} parent=0 // pred_check_branch
    %13 = sbr.rel (0) target = $region13
  $region12: #{_lambda_.36} parent=0 // pred_region
    _
  $region13: #{_lambda_.36} parent=0 // pred_fallthru
    _
  %p15 = scmp.eq.s32.totalorder 0, 0
  // Predicated region
  $region14: #{_lambda_.36} parent=0 // pred_check
    %p16 = pneg %p15
  $region15: #{_lambda_.36} parent=0 // pred_check_branch
    %18 = sbr.rel (%p16) target = $region17
  $region16: #{_lambda_.36} parent=0 // pred_region
    %vm19 = vcmask 261120
    %20 = vst.msk [vmem:[#allocation2] sm:$0xff] %vm19, 0.0
    %21 = vst.msk [vmem:[#allocation2 + $0x8] sm:$0xff] %vm19, 0.0
  $region17: #{_lambda_.36} parent=0 // pred_fallthru
    _
  %v22 = vld [vmem:[#allocation2] sm:$0xff]
  %v23 = vld [vmem:[#allocation2 + $0x8] sm:$0xff]
  %v24 = vld [vmem:[%s0] sm:$0xf]
  %v25 = vld [vmem:[%s0 + $0x4] sm:$0xf]
  %v26 = vld [vmem:[%s1] sm:$0xf]
  %v27 = vld [vmem:[%s1 + $0x4] sm:$0xf]
  %v28 = vld [vmem:[%s1 + $0x8] sm:$0xf]
  %v29 = vld [vmem:[%s1 + $0xc] sm:$0xf]
  %v32 = vunpack.c.l.b16 %v24
  %v33 = vunpack.c.l.b16 %v25
  %v34 = vpack.c.b16 %v33, %v32
  %v39 = vunpack.c.l.b16 %v26
  %v40 = vunpack.c.l.b16 %v27
  %v41 = vunpack.c.l.b16 %v28
  %v42 = vunpack.c.l.b16 %v29
  %v43 = vpack.c.b16 %v40, %v39
  %v44 = vpack.c.b16 %v42, %v41
  %vm47 = vcmask 261120
  %v49 = vsel %vm47, %v34, 0
  %51 = vmatprep.subr.bf16.mxu0 0
  %52 = vmatpush1.bf16.msra.mxu0 %v43
  %53 = vmatprep.subr.bf16.mxu0 0
  %54 = vmatpush1.bf16.msra.mxu0 %v44
  %55 = vmatprep.subr.bf16.mxu0 0
  %56 = vmatpush1.bf16.msra.mxu0 0
  %57 = vmatprep.subr.bf16.mxu0 0
  %58 = vmatpush1.bf16.msra.mxu0 0
  %59 = vmatprep.subr.bf16.mxu0 0
  %60 = vmatpush1.bf16.msra.mxu0 0
  %61 = vmatprep.subr.bf16.mxu0 0
  %62 = vmatpush1.bf16.msra.mxu0 0
  %63 = vmatprep.subr.bf16.mxu0 0
  %64 = vmatpush1.bf16.msra.mxu0 0
  %65 = vmatprep.subr.bf16.mxu0 0
  %66 = vmatpush1.bf16.msra.mxu0 0
  %67 = vmatprep.subr.bf16.mxu0 0
  %68 = vmatpush1.bf16.msra.mxu0 0
  %69 = vmatprep.subr.bf16.mxu0 0
  %70 = vmatpush1.bf16.msra.mxu0 0
  %71 = vmatprep.subr.bf16.mxu0 0
  %72 = vmatpush1.bf16.msra.mxu0 0
  %73 = vmatprep.subr.bf16.mxu0 0
  %74 = vmatpush1.bf16.msra.mxu0 0
  %75 = vmatprep.subr.bf16.mxu0 0
  %76 = vmatpush1.bf16.msra.mxu0 0
  %77 = vmatprep.subr.bf16.mxu0 0
  %78 = vmatpush1.bf16.msra.mxu0 0
  %79 = vmatprep.subr.bf16.mxu0 0
  %80 = vmatpush1.bf16.msra.mxu0 0
  %81 = vmatprep.subr.bf16.mxu0 0
  %82 = vmatpush1.bf16.msra.mxu0 0
  %83 = vmatprep.mubr.bf16.mxu0 0
  %84 = vmatmul.mubr.bf16.gmra.mrb[0].mxu0 %v49
  %v85 = vpop.f32.mrb[0].mxu0
  %v86 = vadd.f32 0.0, %v85
  %v87 = vpop.f32.mrb[0].mxu0
  %v88 = vpop.f32.mrb[0].mxu0
  %v89 = vadd.f32 0.0, %v88
  %v90 = vpop.f32.mrb[0].mxu0
  %91 = vdwg.mxu0
  %v92 = vadd.f32 %v22, %v86
  %v93 = vadd.f32 %v23, %v89
  %94 = vst.msk [vmem:[#allocation2] sm:$0xff] %vm47, %v92
  %95 = vst.msk [vmem:[#allocation2 + $0x8] sm:$0xff] %vm47, %v93
  // Predicated region
  $region18: #{_lambda_.36} parent=0 // pred_check
    %p96 = pneg %p15
  $region19: #{_lambda_.36} parent=0 // pred_check_branch
    %98 = sbr.rel (%p96) target = $region21
  $region20: #{_lambda_.36} parent=0 // pred_region
    %v99 = vld [vmem:[#allocation2] sm:$0xff]
    %v100 = vld [vmem:[#allocation2 + $0x8] sm:$0xff]
    %v101 = vld [vmem:[%s2] sm:$0x1]
    %v103 = vlaneseq
    %v104 = vshrl.u32 %v103, 7
    %v105 = vsub.s32 0, %v104
    %v106 = vrot.slane %v101, %v105
    %v108 = vadd.f32 %v99, %v106
    %v109 = vadd.f32 %v100, %v106
    %v110 = vpack.c.bf16 %v109, %v108
    %v112 = vunpack.c.l.b16 %v110
    %v113 = vunpack.c.h.b16 %v110
    %v114 = vpack.c.b16 %v112, %v112
    %v115 = vpack.c.b16 %v113, %v113
    %vm118 = vcmask 257024
    %119 = vst.msk [vmem:[%s3] sm:$0xf] %vm118, %v114
    %120 = vst.msk [vmem:[%s3 + $0x4] sm:$0xf] %vm118, %v115
  $region21: #{_lambda_.36} parent=0 // pred_fallthru
    _
  // Predicated region
  $region22: #{_lambda_.36} parent=0 // pred_check
    _
  $region23: #{_lambda_.36} parent=0 // pred_check_branch
    %122 = sbr.rel (0) target = $region25
  $region24: #{_lambda_.36} parent=0 // pred_region
    _
  $region25: #{_lambda_.36} parent=0 // pred_fallthru
    _
  // Predicated region
  $region26: #{_lambda_.36} parent=0 // pred_check
    _
  $region27: #{_lambda_.36} parent=0 // pred_check_branch
    %124 = sbr.rel (0) target = $region29
  $region28: #{_lambda_.36} parent=0 // pred_region
    _
  $region29: #{_lambda_.36} parent=0 // pred_fallthru
    _

// kernel: _lambda_.34
$region0: #{_lambda_.34}
  #allocation0 [shape = 'u32[]', space=smem, size = 0x4, offset = 0x4, fixed_abs, tag = 'smem constant byte address 0x4 - core index']
  #allocation1 [shape = 'u32[144,128]{1,0:T(1,128)}', space=vmem, size = 0x12000, scoped, tag = 'internal scratch']
  #allocation2 [shape = 'f32[4,8,1]{2,1,0:T(8,128)}', space=vmem, size = 0x4000, scoped, tag = 'scratch operand']
  #allocation3 [shape = 'f32[4,8,1]{2,1,0:T(8,128)}', space=vmem, size = 0x4000, scoped, tag = 'scratch operand']
  #allocation4 [shape = 'f32[8,32]{1,0:T(8,128)}', space=vmem, size = 0x1000, scoped, tag = 'scratch operand']
  %s0 = inlined_call_operand.vmem [shape: bf16[2,8,32], index: 0, kind: input, shape index: {}]
  %s1 = inlined_call_operand.vmem [shape: bf16[2,8,32], index: 1, kind: input, shape index: {}]
  %s2 = inlined_call_operand.vmem [shape: bf16[2,8,32], index: 2, kind: input, shape index: {}]
  %s3 = inlined_call_operand.vmem [shape: bf16[2,8,32], index: 3, kind: output, shape index: {}]
  %s4 = sld [smem:[#allocation0]]
  $region61: #{_lambda_.34} parent=0
    _
  %s6 = ssub.s32 1, %s4
  %s7 = scalar_select 0, %s6, %s4
  loop: start=0, step=1, limit=4
  $region2: #{_lambda_.34} parent=0 // loop_pre_header
    _
  $region3: #{_lambda_.34} parent=0 // loop_header
    %s9 = sphi 0, %s13
    %p10 = scmp.ge.s32.totalorder %s9, 4
    %s16 = sphi 0, %s35
    %s17 = sphi 0, %s31
    %s18 = sphi 0, %s27
    %s19 = sphi 0, %s16
    %s20 = sphi 0, %s17
    %s21 = sphi 0, %s18
    %s22 = sphi 0, %s19
    %s23 = sphi 0, %s20
    %s24 = sphi 0, %s21
    %s40 = sphi 0, %s42
    %s43 = sphi 0, %s40
    %s44 = sphi 0, %s43
    %s60 = sphi 0, %s44
    %s68 = sphi 0, %s70
    %s71 = sphi 0, %s68
    %s72 = sphi 0, %s71
    %s88 = sphi 0, %s72
    %s96 = sphi 0, %s98
    %s99 = sphi 0, %s96
    %s100 = sphi 0, %s99
    %s116 = sphi 0, %s100
    %s124 = sphi 0, %s126
    %s127 = sphi 0, %s124
    %s128 = sphi 0, %s127
    %s144 = sphi 0, %s128
  $region4: #{_lambda_.34} parent=0 // loop_header_branch
    %12 = sbr.rel (%p10) target = $region8
  $region5: #{_lambda_.34} parent=0 // loop_body
    %s14 = ssub.s32 %s9, 1
    %s15 = ssub.s32 %s9, 2
    %s25 = sadd.s32 1, %s18
    %p26 = scmp.ge.s32.totalorder %s25, 1
    %s27 = scalar_select %p26, 0, %s25
    %s28 = sadd.s32 1, %s17
    %s29 = scalar_select %p26, %s28, %s17
    %p30 = scmp.ge.s32.totalorder %s29, 1
    %s31 = scalar_select %p30, 0, %s29
    %s32 = sadd.s32 1, %s16
    %s33 = scalar_select %p30, %s32, %s16
    %p34 = scmp.ge.s32.totalorder %s33, 2
    %s35 = scalar_select %p34, 0, %s33
    %s36 = ssub.s32 %s16, %s35
    %s37 = ssub.s32 %s17, %s31
    %s38 = sor.u32 %s36, %s37
    %p39 = scmp.eq.s32.totalorder %s38, 0
    %s41 = sadd.s32 %s40, 1
    %s42 = scalar_select %p39, %s40, %s41
    %p45 = pneg %p39
    %p46 = scmp.eq.s32.totalorder %s9, 1
    %p47 = por %p45, %p46
    %p48 = scmp.ne.s32.totalorder %s40, %s43
    %p49 = scmp.eq.s32.totalorder %s9, 0
    %p50 = por %p48, %p49
    %p51 = scmp.ne.s32.totalorder %s40, %s43
    %p52 = scmp.eq.s32.totalorder %s14, 1
    %p53 = por %p51, %p52
    %p54 = scmp.ne.s32.totalorder %s43, %s44
    %p55 = scmp.eq.s32.totalorder %s14, 0
    %p56 = por %p54, %p55
    %p57 = scmp.ne.s32.totalorder %s43, %s44
    %p58 = scmp.eq.s32.totalorder %s15, 1
    %p59 = por %p57, %p58
    %p61 = scmp.ne.s32.totalorder %s44, %s60
    %p62 = scmp.eq.s32.totalorder %s15, 0
    %p63 = por %p61, %p62
    %s64 = ssub.s32 %s16, %s35
    %s65 = ssub.s32 %s18, %s27
    %s66 = sor.u32 %s64, %s65
    %p67 = scmp.eq.s32.totalorder %s66, 0
    %s69 = sadd.s32 %s68, 1
    %s70 = scalar_select %p67, %s68, %s69
    %p73 = pneg %p67
    %p74 = scmp.eq.s32.totalorder %s9, 1
    %p75 = por %p73, %p74
    %p76 = scmp.ne.s32.totalorder %s68, %s71
    %p77 = scmp.eq.s32.totalorder %s9, 0
    %p78 = por %p76, %p77
    %p79 = scmp.ne.s32.totalorder %s68, %s71
    %p80 = scmp.eq.s32.totalorder %s14, 1
    %p81 = por %p79, %p80
    %p82 = scmp.ne.s32.totalorder %s71, %s72
    %p83 = scmp.eq.s32.totalorder %s14, 0
    %p84 = por %p82, %p83
    %p85 = scmp.ne.s32.totalorder %s71, %s72
    %p86 = scmp.eq.s32.totalorder %s15, 1
    %p87 = por %p85, %p86
    %p89 = scmp.ne.s32.totalorder %s72, %s88
    %p90 = scmp.eq.s32.totalorder %s15, 0
    %p91 = por %p89, %p90
    %s92 = ssub.s32 %s16, %s35
    %s93 = ssub.s32 %s18, %s27
    %s94 = sor.u32 %s92, %s93
    %p95 = scmp.eq.s32.totalorder %s94, 0
    %s97 = sadd.s32 %s96, 1
    %s98 = scalar_select %p95, %s96, %s97
    %p101 = pneg %p95
    %p102 = scmp.eq.s32.totalorder %s9, 1
    %p103 = por %p101, %p102
    %p104 = scmp.ne.s32.totalorder %s96, %s99
    %p105 = scmp.eq.s32.totalorder %s9, 0
    %p106 = por %p104, %p105
    %p107 = scmp.ne.s32.totalorder %s96, %s99
    %p108 = scmp.eq.s32.totalorder %s14, 1
    %p109 = por %p107, %p108
    %p110 = scmp.ne.s32.totalorder %s99, %s100
    %p111 = scmp.eq.s32.totalorder %s14, 0
    %p112 = por %p110, %p111
    %p113 = scmp.ne.s32.totalorder %s99, %s100
    %p114 = scmp.eq.s32.totalorder %s15, 1
    %p115 = por %p113, %p114
    %p117 = scmp.ne.s32.totalorder %s100, %s116
    %p118 = scmp.eq.s32.totalorder %s15, 0
    %p119 = por %p117, %p118
    %s120 = ssub.s32 %s16, %s35
    %s121 = ssub.s32 %s17, %s31
    %s122 = sor.u32 %s120, %s121
    %p123 = scmp.eq.s32.totalorder %s122, 0
    %s125 = sadd.s32 %s124, 1
    %s126 = scalar_select %p123, %s124, %s125
    %p129 = pneg %p123
    %p130 = scmp.eq.s32.totalorder %s9, 1
    %p131 = por %p129, %p130
    %p132 = scmp.ne.s32.totalorder %s124, %s127
    %p133 = scmp.eq.s32.totalorder %s9, 0
    %p134 = por %p132, %p133
    %p135 = scmp.ne.s32.totalorder %s124, %s127
    %p136 = scmp.eq.s32.totalorder %s14, 1
    %p137 = por %p135, %p136
    %p138 = scmp.ne.s32.totalorder %s127, %s128
    %p139 = scmp.eq.s32.totalorder %s14, 0
    %p140 = por %p138, %p139
    %p141 = scmp.ne.s32.totalorder %s127, %s128
    %p142 = scmp.eq.s32.totalorder %s15, 1
    %p143 = por %p141, %p142
    %p145 = scmp.ne.s32.totalorder %s128, %s144
    %p146 = scmp.eq.s32.totalorder %s15, 0
    %p147 = por %p145, %p146
    %p148 = scmp.le.s32.totalorder 1, %s9
    %p149 = scmp.lt.s32.totalorder %s9, 3
    %p150 = pnand %p148, %p149
    %p151 = pneg %p150
    // Predicated region
    $region9: #{_lambda_.34} parent=5 // pred_check
      _
    $region10: #{_lambda_.34} parent=5 // pred_check_branch
      %153 = sbr.rel (%p150) target = $region12
    $region11: #{_lambda_.34} parent=5 // pred_region
      %s154 = ssub.s32 %s9, 1
    $region12: #{_lambda_.34} parent=5 // pred_fallthru
      _
    %p155 = scmp.lt.s32.totalorder %s9, 2
    // Predicated region
    $region13: #{_lambda_.34} parent=5 // pred_check
      %p156 = pneg %p155
    $region14: #{_lambda_.34} parent=5 // pred_check_branch
      %158 = sbr.rel (%p156) target = $region16
    $region15: #{_lambda_.34} parent=5 // pred_region
      // Predicated region
      $region17: #{_lambda_.34} parent=15 // pred_check
        %p159 = pneg %p50
      $region18: #{_lambda_.34} parent=15 // pred_check_branch
        %161 = sbr.rel (%p159) target = $region20
      $region19: #{_lambda_.34} parent=15 // pred_region
        %p162 = scmp.lt.s32.totalorder %s16, 1
        %s163 = scalar_select %p162, %s16, 1
        %p164 = scmp.lt.s32.totalorder %s17, 0
        %s165 = scalar_select %p164, %s17, 0
        %s166 = sadd.s32 %s165, %s163
        %s167 = smul.addr %s166, 4
        %s168 = scalar_lea.vmem %s0, %s167
      $region20: #{_lambda_.34} parent=15 // pred_fallthru
        _
      // Predicated region
      $region21: #{_lambda_.34} parent=15 // pred_check
        %p169 = pneg %p78
      $region22: #{_lambda_.34} parent=15 // pred_check_branch
        %171 = sbr.rel (%p169) target = $region24
      $region23: #{_lambda_.34} parent=15 // pred_region
        %p172 = scmp.lt.s32.totalorder %s16, 1
        %s173 = scalar_select %p172, %s16, 1
        %p174 = scmp.lt.s32.totalorder %s18, 0
        %s175 = scalar_select %p174, %s18, 0
        %s176 = sadd.s32 %s175, %s173
        %s177 = smul.addr %s176, 4
        %s178 = scalar_lea.vmem %s1, %s177
      $region24: #{_lambda_.34} parent=15 // pred_fallthru
        _
      // Predicated region
      $region25: #{_lambda_.34} parent=15 // pred_check
        %p179 = pneg %p106
      $region26: #{_lambda_.34} parent=15 // pred_check_branch
        %181 = sbr.rel (%p179) target = $region28
      $region27: #{_lambda_.34} parent=15 // pred_region
        %p182 = scmp.lt.s32.totalorder %s16, 1
        %s183 = scalar_select %p182, %s16, 1
        %p184 = scmp.lt.s32.totalorder %s18, 0
        %s185 = scalar_select %p184, %s18, 0
        %s186 = sadd.s32 %s185, %s183
        %s187 = smul.addr %s186, 4
        %s188 = scalar_lea.vmem %s2, %s187
      $region28: #{_lambda_.34} parent=15 // pred_fallthru
        _
    $region16: #{_lambda_.34} parent=5 // pred_fallthru
      _
    %p189 = scmp.le.s32.totalorder 1, %s9
    %p190 = scmp.lt.s32.totalorder %s9, 3
    %p191 = pnand %p189, %p190
    %p192 = pneg %p191
    // Predicated region
    $region29: #{_lambda_.34} parent=5 // pred_check
      _
    $region30: #{_lambda_.34} parent=5 // pred_check_branch
      %194 = sbr.rel (%p191) target = $region32
    $region31: #{_lambda_.34} parent=5 // pred_region
      %s195 = ssub.s32 %s9, 1
      %p196 = scmp.lt.s32.totalorder %s19, 1
      %s197 = scalar_select %p196, %s19, 1
      %p198 = scmp.lt.s32.totalorder %s20, 0
      %s199 = scalar_select %p198, %s20, 0
      %s200 = sadd.s32 %s199, %s197
      %s201 = smul.addr %s200, 4
      %s202 = scalar_lea.vmem %s0, %s201
      %p203 = pneg %p56
      %p204 = pneg %p53
      %p205 = scmp.lt.s32.totalorder %s19, 1
      %s206 = scalar_select %p205, %s19, 1
      %p207 = scmp.lt.s32.totalorder %s21, 0
      %s208 = scalar_select %p207, %s21, 0
      %s209 = sadd.s32 %s208, %s206
      %s210 = smul.addr %s209, 4
      %s211 = scalar_lea.vmem %s1, %s210
      %p212 = pneg %p84
      %p213 = pneg %p81
      %p214 = scmp.lt.s32.totalorder %s19, 1
      %s215 = scalar_select %p214, %s19, 1
      %p216 = scmp.lt.s32.totalorder %s21, 0
      %s217 = scalar_select %p216, %s21, 0
      %s218 = sadd.s32 %s217, %s215
      %s219 = smul.addr %s218, 4
      %s220 = scalar_lea.vmem %s2, %s219
      %p221 = pneg %p112
      %p222 = pneg %p109
      %p223 = pneg %p140
      %p224 = pneg %p137
      %p225 = scmp.lt.s32.totalorder %s19, 1
      %s226 = scalar_select %p225, %s19, 1
      %p227 = scmp.lt.s32.totalorder %s20, 0
      %s228 = scalar_select %p227, %s20, 0
      %s229 = sadd.s32 %s228, %s226
      %s230 = smul.addr %s229, 4
      %s231 = scalar_lea.vmem %s3, %s230
      %p232 = scmp.lt.s32.totalorder %s19, 1
      %s233 = scalar_select %p232, %s19, 1
      %p234 = scmp.lt.s32.totalorder %s20, 0
      %s235 = scalar_select %p234, %s20, 0
      %s236 = sadd.s32 %s235, %s233
      %s237 = smul.addr %s236, 4
      %s238 = scalar_lea.vmem %s0, %s237
      %p239 = scmp.lt.s32.totalorder %s19, 1
      %s240 = scalar_select %p239, %s19, 1
      %p241 = scmp.lt.s32.totalorder %s21, 0
      %s242 = scalar_select %p241, %s21, 0
      %s243 = sadd.s32 %s242, %s240
      %s244 = smul.addr %s243, 4
      %s245 = scalar_lea.vmem %s1, %s244
      %p246 = scmp.lt.s32.totalorder %s19, 1
      %s247 = scalar_select %p246, %s19, 1
      %p248 = scmp.lt.s32.totalorder %s21, 0
      %s249 = scalar_select %p248, %s21, 0
      %s250 = sadd.s32 %s249, %s247
      %s251 = smul.addr %s250, 4
      %s252 = scalar_lea.vmem %s2, %s251
      %p253 = scmp.lt.s32.totalorder %s19, 1
      %s254 = scalar_select %p253, %s19, 1
      %p255 = scmp.lt.s32.totalorder %s20, 0
      %s256 = scalar_select %p255, %s20, 0
      %s257 = sadd.s32 %s256, %s254
      %s258 = smul.addr %s257, 4
      %s259 = scalar_lea.vmem %s3, %s258
      %p261 = scmp.eq.s32.totalorder %s21, 0
      // Predicated region
      $region33: #{_lambda_.34} parent=31 // pred_check
        %p262 = pneg %p261
      $region34: #{_lambda_.34} parent=31 // pred_check_branch
        %264 = sbr.rel (%p262) target = $region36
      $region35: #{_lambda_.34} parent=31 // pred_region
        %vm265 = vcmask 7168
        %266 = vst.msk [vmem:[#allocation2] sm:$0xff] %vm265, -1e+30
        %267 = vst.msk [vmem:[#allocation2 + $0x8] sm:$0xff] %vm265, -1e+30
        %268 = vst.msk [vmem:[#allocation2 + $0x10] sm:$0xff] %vm265, -1e+30
        %269 = vst.msk [vmem:[#allocation2 + $0x18] sm:$0xff] %vm265, -1e+30
        %270 = vst.msk [vmem:[#allocation3] sm:$0xff] %vm265, 0.0
        %271 = vst.msk [vmem:[#allocation3 + $0x8] sm:$0xff] %vm265, 0.0
        %272 = vst.msk [vmem:[#allocation3 + $0x10] sm:$0xff] %vm265, 0.0
        %273 = vst.msk [vmem:[#allocation3 + $0x18] sm:$0xff] %vm265, 0.0
        %vm274 = vcmask 261120
        %275 = vst.msk [vmem:[#allocation4] sm:$0xff] %vm274, 0.0
      $region36: #{_lambda_.34} parent=31 // pred_fallthru
        _
      %v276 = vld [vmem:[%s238] sm:$0xf]
      %v277 = vunpack.c.l.bf16 %v276
      %v278 = vmul.f32 %v277, 0.35355338
      %v279 = vpack.c.bf16 %v278, %v278
      %v280 = vld [vmem:[%s245] sm:$0xf]
      %v281 = vld [vmem:[%s252] sm:$0xf]
      %s282 = smul.u32 %s20, 8
      %s283 = smul.u32 %s21, 8
      %s284 = sadd.s32 %s283, 7
      %p285 = scmp.le.s32.totalorder %s284, %s282
      %s286 = sadd.s32 %s282, 7
      %p287 = scmp.le.s32.totalorder %s283, %s286
      // Predicated region
      $region37: #{_lambda_.34} parent=31 // pred_check
        %p288 = pneg %p285
      $region38: #{_lambda_.34} parent=31 // pred_check_branch
        %290 = sbr.rel (%p288) target = $region40
      $region39: #{_lambda_.34} parent=31 // pred_region
        %vm291 = vcmask 64512
        %v293 = vsel %vm291, %v279, 0
        %v296 = vsel %vm291, %v280, 0
        %298 = vmatprep.subr.bf16.mxu0 0
        %299 = vmatpush1.bf16.xpose.msra.mxu0 %v296
        %300 = vmatprep.subr.bf16.mxu0 0
        %301 = vmatpush1.bf16.xpose.msra.mxu0 0
        %302 = vmatprep.subr.bf16.mxu0 0
        %303 = vmatpush1.bf16.xpose.msra.mxu0 0
        %304 = vmatprep.subr.bf16.mxu0 0
        %305 = vmatpush1.bf16.xpose.msra.mxu0 0
        %306 = vmatprep.subr.bf16.mxu0 0
        %307 = vmatpush1.bf16.xpose.msra.mxu0 0
        %308 = vmatprep.subr.bf16.mxu0 0
        %309 = vmatpush1.bf16.xpose.msra.mxu0 0
        %310 = vmatprep.subr.bf16.mxu0 0
        %311 = vmatpush1.bf16.xpose.msra.mxu0 0
        %312 = vmatprep.subr.bf16.mxu0 0
        %313 = vmatpush1.bf16.xpose.msra.mxu0 0
        %314 = vmatprep.subr.bf16.mxu0 0
        %315 = vmatpush1.bf16.xpose.msra.mxu0 0
        %316 = vmatprep.subr.bf16.mxu0 0
        %317 = vmatpush1.bf16.xpose.msra.mxu0 0
        %318 = vmatprep.subr.bf16.mxu0 0
        %319 = vmatpush1.bf16.xpose.msra.mxu0 0
        %320 = vmatprep.subr.bf16.mxu0 0
        %321 = vmatpush1.bf16.xpose.msra.mxu0 0
        %322 = vmatprep.subr.bf16.mxu0 0
        %323 = vmatpush1.bf16.xpose.msra.mxu0 0
        %324 = vmatprep.subr.bf16.mxu0 0
        %325 = vmatpush1.bf16.xpose.msra.mxu0 0
        %326 = vmatprep.subr.bf16.mxu0 0
        %327 = vmatpush1.bf16.xpose.msra.mxu0 0
        %328 = vmatprep.subr.bf16.mxu0 0
        %329 = vmatpush1.bf16.xpose.msra.mxu0 0
        %330 = vmatprep.mubr.bf16.mxu0 0
        %331 = vmatmul.mubr.bf16.gmra.mrb[0].mxu0 %v293
        %v332 = vpop.f32.mrb[0].mxu0
        %v333 = vadd.f32 0.0, %v332
        %v334 = vpop.f32.mrb[0].mxu0
        %v335 = vpop.f32.mrb[0].mxu0
        %v336 = vpop.f32.mrb[0].mxu0
        %337 = vdwg.mxu0
        %v338 = vld [vmem:[#allocation2] sm:$0xff]
        %v339 = vsel %vm291, %v333, -inf
        %340 = vmax.xlane.f32.xlu0 %v339
        %v341 = vpop.xlane.xlu0 %340
        %v342 = vmax.f32 %v338, %v341
        %v343 = vsub.f32 %v338, %v342
        %v344 = vmul.f32 %v343, 1.442695
        %v345 = vpow.pop %v344
        %347 = vset.pattern.permute.xlu0 0
        %348 = vperm.xlu0 %347, %v342
        %v349 = vpop.permute.xlu0 %348
        %v351 = vsub.f32 %v333, %v349
        %v352 = vmul.f32 %v351, 1.442695
        %v353 = vpow.pop %v352
        %v354 = vld [vmem:[#allocation3] sm:$0xff]
        %v355 = vmul.f32 %v345, %v354
        %v356 = vsel %vm291, %v353, 0.0
        %357 = vadd.xlane.f32.xlu0 %v356
        %v358 = vpop.xlane.xlu0 %357
        %v359 = vadd.f32 %v355, %v358
        %vm360 = vcmask 7168
        %361 = vst.msk [vmem:[#allocation3] sm:$0xff] %vm360, %v359
        %v362 = vld [vmem:[#allocation4] sm:$0xff]
        %364 = vset.pattern.permute.xlu0 0
        %365 = vperm.xlu0 %364, %v345
        %v366 = vpop.permute.xlu0 %365
        %v368 = vmul.f32 %v366, %v362
        %v369 = vpack.c.bf16 %v353, %v353
        %v371 = vsel %vm291, %v369, 0
        %vm373 = vcmask 1043456
        %v375 = vsel %vm373, %v281, 0
        %377 = vmatprep.subr.bf16.mxu0 0
        %378 = vmatpush1.bf16.msra.mxu0 %v375
        %379 = vmatprep.subr.bf16.mxu0 0
        %380 = vmatpush1.bf16.msra.mxu0 0
        %381 = vmatprep.subr.bf16.mxu0 0
        %382 = vmatpush1.bf16.msra.mxu0 0
        %383 = vmatprep.subr.bf16.mxu0 0
        %384 = vmatpush1.bf16.msra.mxu0 0
        %385 = vmatprep.subr.bf16.mxu0 0
        %386 = vmatpush1.bf16.msra.mxu0 0
        %387 = vmatprep.subr.bf16.mxu0 0
        %388 = vmatpush1.bf16.msra.mxu0 0
        %389 = vmatprep.subr.bf16.mxu0 0
        %390 = vmatpush1.bf16.msra.mxu0 0
        %391 = vmatprep.subr.bf16.mxu0 0
        %392 = vmatpush1.bf16.msra.mxu0 0
        %393 = vmatprep.subr.bf16.mxu0 0
        %394 = vmatpush1.bf16.msra.mxu0 0
        %395 = vmatprep.subr.bf16.mxu0 0
        %396 = vmatpush1.bf16.msra.mxu0 0
        %397 = vmatprep.subr.bf16.mxu0 0
        %398 = vmatpush1.bf16.msra.mxu0 0
        %399 = vmatprep.subr.bf16.mxu0 0
        %400 = vmatpush1.bf16.msra.mxu0 0
        %401 = vmatprep.subr.bf16.mxu0 0
        %402 = vmatpush1.bf16.msra.mxu0 0
        %403 = vmatprep.subr.bf16.mxu0 0
        %404 = vmatpush1.bf16.msra.mxu0 0
        %405 = vmatprep.subr.bf16.mxu0 0
        %406 = vmatpush1.bf16.msra.mxu0 0
        %407 = vmatprep.subr.bf16.mxu0 0
        %408 = vmatpush1.bf16.msra.mxu0 0
        %409 = vmatprep.mubr.bf16.mxu0 0
        %410 = vmatmul.mubr.bf16.gmra.mrb[0].mxu0 %v371
        %v411 = vpop.f32.mrb[0].mxu0
        %v412 = vadd.f32 0.0, %v411
        %v413 = vpop.f32.mrb[0].mxu0
        %v414 = vpop.f32.mrb[0].mxu0
        %v415 = vpop.f32.mrb[0].mxu0
        %416 = vdwg.mxu0
        %v417 = vadd.f32 %v368, %v412
        %418 = vst.msk [vmem:[#allocation4] sm:$0xff] %vm291, %v417
        %419 = vst.msk [vmem:[#allocation2] sm:$0xff] %vm360, %v342
        %421 = vrot.lane.b32.xlu0 %v279, 120
        %v422 = vpop.permute.xlu0 %421
        %v424 = vunpack.c.l.b16 %v280
        %v425 = vpack.c.b16 %v424, %v424
        %426 = vrot.lane.b32.xlu0 %v425, 120
        %v427 = vpop.permute.xlu0 %426
        %v429 = vsel %vm291, %v422, 0
        %v432 = vsel %vm291, %v427, 0
        %434 = vmatprep.subr.bf16.mxu0 0
        %435 = vmatpush1.bf16.xpose.msra.mxu0 %v432
        %436 = vmatprep.subr.bf16.mxu0 0
        %437 = vmatpush1.bf16.xpose.msra.mxu0 0
        %438 = vmatprep.subr.bf16.mxu0 0
        %439 = vmatpush1.bf16.xpose.msra.mxu0 0
        %440 = vmatprep.subr.bf16.mxu0 0
        %441 = vmatpush1.bf16.xpose.msra.mxu0 0
        %442 = vmatprep.subr.bf16.mxu0 0
        %443 = vmatpush1.bf16.xpose.msra.mxu0 0
        %444 = vmatprep.subr.bf16.mxu0 0
        %445 = vmatpush1.bf16.xpose.msra.mxu0 0
        %446 = vmatprep.subr.bf16.mxu0 0
        %447 = vmatpush1.bf16.xpose.msra.mxu0 0
        %448 = vmatprep.subr.bf16.mxu0 0
        %449 = vmatpush1.bf16.xpose.msra.mxu0 0
        %450 = vmatprep.subr.bf16.mxu0 0
        %451 = vmatpush1.bf16.xpose.msra.mxu0 0
        %452 = vmatprep.subr.bf16.mxu0 0
        %453 = vmatpush1.bf16.xpose.msra.mxu0 0
        %454 = vmatprep.subr.bf16.mxu0 0
        %455 = vmatpush1.bf16.xpose.msra.mxu0 0
        %456 = vmatprep.subr.bf16.mxu0 0
        %457 = vmatpush1.bf16.xpose.msra.mxu0 0
        %458 = vmatprep.subr.bf16.mxu0 0
        %459 = vmatpush1.bf16.xpose.msra.mxu0 0
        %460 = vmatprep.subr.bf16.mxu0 0
        %461 = vmatpush1.bf16.xpose.msra.mxu0 0
        %462 = vmatprep.subr.bf16.mxu0 0
        %463 = vmatpush1.bf16.xpose.msra.mxu0 0
        %464 = vmatprep.subr.bf16.mxu0 0
        %465 = vmatpush1.bf16.xpose.msra.mxu0 0
        %466 = vmatprep.mubr.bf16.mxu0 0
        %467 = vmatmul.mubr.bf16.gmra.mrb[0].mxu0 %v429
        %v468 = vpop.f32.mrb[0].mxu0
        %v469 = vadd.f32 0.0, %v468
        %v470 = vpop.f32.mrb[0].mxu0
        %v471 = vpop.f32.mrb[0].mxu0
        %v472 = vpop.f32.mrb[0].mxu0
        %473 = vdwg.mxu0
        %s474 = scalar_lea.vmem [#allocation2], 8
        %v475 = vld [vmem:[%s474] sm:$0xff]
        %v476 = vsel %vm291, %v469, -inf
        %477 = vmax.xlane.f32.xlu0 %v476
        %v478 = vpop.xlane.xlu0 %477
        %v479 = vmax.f32 %v475, %v478
        %v480 = vsub.f32 %v475, %v479
        %v481 = vmul.f32 %v480, 1.442695
        %v482 = vpow.pop %v481
        %484 = vset.pattern.permute.xlu0 0
        %485 = vperm.xlu0 %484, %v479
        %v486 = vpop.permute.xlu0 %485
        %v488 = vsub.f32 %v469, %v486
        %v489 = vmul.f32 %v488, 1.442695
        %v490 = vpow.pop %v489
        %s491 = scalar_lea.vmem [#allocation3], 8
        %v492 = vld [vmem:[%s491] sm:$0xff]
        %v493 = vmul.f32 %v482, %v492
        %v494 = vsel %vm291, %v490, 0.0
        %495 = vadd.xlane.f32.xlu0 %v494
        %v496 = vpop.xlane.xlu0 %495
        %v497 = vadd.f32 %v493, %v496
        %498 = vst.msk [vmem:[%s491] sm:$0xff] %vm360, %v497
        %v499 = vld [vmem:[#allocation4] sm:$0xff]
        %501 = vset.pattern.permute.xlu0 0
        %502 = vperm.xlu0 %501, %v482
        %v503 = vpop.permute.xlu0 %502
        %v505 = vmul.f32 %v503, %v499
        %v506 = vpack.c.bf16 %v490, %v490
        %v508 = vunpack.c.l.b16 %v281
        %v509 = vpack.c.b16 %v508, %v508
        %510 = vrot.lane.b32.xlu0 %v509, 120
        %v511 = vpop.permute.xlu0 %510
        %v513 = vsel %vm291, %v506, 0
        %v516 = vsel %vm373, %v511, 0
        %518 = vmatprep.subr.bf16.mxu0 0
        %519 = vmatpush1.bf16.msra.mxu0 %v516
        %520 = vmatprep.subr.bf16.mxu0 0
        %521 = vmatpush1.bf16.msra.mxu0 0
        %522 = vmatprep.subr.bf16.mxu0 0
        %523 = vmatpush1.bf16.msra.mxu0 0
        %524 = vmatprep.subr.bf16.mxu0 0
        %525 = vmatpush1.bf16.msra.mxu0 0
        %526 = vmatprep.subr.bf16.mxu0 0
        %527 = vmatpush1.bf16.msra.mxu0 0
        %528 = vmatprep.subr.bf16.mxu0 0
        %529 = vmatpush1.bf16.msra.mxu0 0
        %530 = vmatprep.subr.bf16.mxu0 0
        %531 = vmatpush1.bf16.msra.mxu0 0
        %532 = vmatprep.subr.bf16.mxu0 0
        %533 = vmatpush1.bf16.msra.mxu0 0
        %534 = vmatprep.subr.bf16.mxu0 0
        %535 = vmatpush1.bf16.msra.mxu0 0
        %536 = vmatprep.subr.bf16.mxu0 0
        %537 = vmatpush1.bf16.msra.mxu0 0
        %538 = vmatprep.subr.bf16.mxu0 0
        %539 = vmatpush1.bf16.msra.mxu0 0
        %540 = vmatprep.subr.bf16.mxu0 0
        %541 = vmatpush1.bf16.msra.mxu0 0
        %542 = vmatprep.subr.bf16.mxu0 0
        %543 = vmatpush1.bf16.msra.mxu0 0
        %544 = vmatprep.subr.bf16.mxu0 0
        %545 = vmatpush1.bf16.msra.mxu0 0
        %546 = vmatprep.subr.bf16.mxu0 0
        %547 = vmatpush1.bf16.msra.mxu0 0
        %548 = vmatprep.subr.bf16.mxu0 0
        %549 = vmatpush1.bf16.msra.mxu0 0
        %550 = vmatprep.mubr.bf16.mxu0 0
        %551 = vmatmul.mubr.bf16.gmra.mrb[0].mxu0 %v513
        %v552 = vpop.f32.mrb[0].mxu0
        %v553 = vadd.f32 0.0, %v552
        %v554 = vpop.f32.mrb[0].mxu0
        %v555 = vpop.f32.mrb[0].mxu0
        %v556 = vpop.f32.mrb[0].mxu0
        %557 = vdwg.mxu0
        %559 = vrot.lane.b32.xlu0 %v553, 8
        %v560 = vpop.permute.xlu0 %559
        %v562 = vadd.f32 %v505, %v560
        %vm563 = vcmask 130112
        %564 = vst.msk [vmem:[#allocation4] sm:$0xff] %vm563, %v562
        %565 = vst.msk [vmem:[%s474] sm:$0xff] %vm360, %v479
        %566 = vrot.lane.b32.xlu0 %v279, 112
        %v567 = vpop.permute.xlu0 %566
        %568 = vrot.lane.b32.xlu0 %v425, 112
        %v569 = vpop.permute.xlu0 %568
        %v571 = vsel %vm291, %v567, 0
        %v574 = vsel %vm291, %v569, 0
        %576 = vmatprep.subr.bf16.mxu0 0
        %577 = vmatpush1.bf16.xpose.msra.mxu0 %v574
        %578 = vmatprep.subr.bf16.mxu0 0
        %579 = vmatpush1.bf16.xpose.msra.mxu0 0
        %580 = vmatprep.subr.bf16.mxu0 0
        %581 = vmatpush1.bf16.xpose.msra.mxu0 0
        %582 = vmatprep.subr.bf16.mxu0 0
        %583 = vmatpush1.bf16.xpose.msra.mxu0 0
        %584 = vmatprep.subr.bf16.mxu0 0
        %585 = vmatpush1.bf16.xpose.msra.mxu0 0
        %586 = vmatprep.subr.bf16.mxu0 0
        %587 = vmatpush1.bf16.xpose.msra.mxu0 0
        %588 = vmatprep.subr.bf16.mxu0 0
        %589 = vmatpush1.bf16.xpose.msra.mxu0 0
        %590 = vmatprep.subr.bf16.mxu0 0
        %591 = vmatpush1.bf16.xpose.msra.mxu0 0
        %592 = vmatprep.subr.bf16.mxu0 0
        %593 = vmatpush1.bf16.xpose.msra.mxu0 0
        %594 = vmatprep.subr.bf16.mxu0 0
        %595 = vmatpush1.bf16.xpose.msra.mxu0 0
        %596 = vmatprep.subr.bf16.mxu0 0
        %597 = vmatpush1.bf16.xpose.msra.mxu0 0
        %598 = vmatprep.subr.bf16.mxu0 0
        %599 = vmatpush1.bf16.xpose.msra.mxu0 0
        %600 = vmatprep.subr.bf16.mxu0 0
        %601 = vmatpush1.bf16.xpose.msra.mxu0 0
        %602 = vmatprep.subr.bf16.mxu0 0
        %603 = vmatpush1.bf16.xpose.msra.mxu0 0
        %604 = vmatprep.subr.bf16.mxu0 0
        %605 = vmatpush1.bf16.xpose.msra.mxu0 0
        %606 = vmatprep.subr.bf16.mxu0 0
        %607 = vmatpush1.bf16.xpose.msra.mxu0 0
        %608 = vmatprep.mubr.bf16.mxu0 0
        %609 = vmatmul.mubr.bf16.gmra.mrb[0].mxu0 %v571
        %v610 = vpop.f32.mrb[0].mxu0
        %v611 = vadd.f32 0.0, %v610
        %v612 = vpop.f32.mrb[0].mxu0
        %v613 = vpop.f32.mrb[0].mxu0
        %v614 = vpop.f32.mrb[0].mxu0
        %615 = vdwg.mxu0
        %s616 = scalar_lea.vmem [#allocation2], 16
        %v617 = vld [vmem:[%s616] sm:$0xff]
        %v618 = vsel %vm291, %v611, -inf
        %619 = vmax.xlane.f32.xlu0 %v618
        %v620 = vpop.xlane.xlu0 %619
        %v621 = vmax.f32 %v617, %v620
        %v622 = vsub.f32 %v617, %v621
        %v623 = vmul.f32 %v622, 1.442695
        %v624 = vpow.pop %v623
        %626 = vset.pattern.permute.xlu0 0
        %627 = vperm.xlu0 %626, %v621
        %v628 = vpop.permute.xlu0 %627
        %v630 = vsub.f32 %v611, %v628
        %v631 = vmul.f32 %v630, 1.442695
        %v632 = vpow.pop %v631
        %s633 = scalar_lea.vmem [#allocation3], 16
        %v634 = vld [vmem:[%s633] sm:$0xff]
        %v635 = vmul.f32 %v624, %v634
        %v636 = vsel %vm291, %v632, 0.0
        %637 = vadd.xlane.f32.xlu0 %v636
        %v638 = vpop.xlane.xlu0 %637
        %v639 = vadd.f32 %v635, %v638
        %640 = vst.msk [vmem:[%s633] sm:$0xff] %vm360, %v639
        %v641 = vld [vmem:[#allocation4] sm:$0xff]
        %643 = vset.pattern.permute.xlu0 0
        %644 = vperm.xlu0 %643, %v624
        %v645 = vpop.permute.xlu0 %644
        %v647 = vmul.f32 %v645, %v641
        %v648 = vpack.c.bf16 %v632, %v632
        %649 = vrot.lane.b32.xlu0 %v509, 112
        %v650 = vpop.permute.xlu0 %649
        %v652 = vsel %vm291, %v648, 0
        %v655 = vsel %vm373, %v650, 0
        %657 = vmatprep.subr.bf16.mxu0 0
        %658 = vmatpush1.bf16.msra.mxu0 %v655
        %659 = vmatprep.subr.bf16.mxu0 0
        %660 = vmatpush1.bf16.msra.mxu0 0
        %661 = vmatprep.subr.bf16.mxu0 0
        %662 = vmatpush1.bf16.msra.mxu0 0
        %663 = vmatprep.subr.bf16.mxu0 0
        %664 = vmatpush1.bf16.msra.mxu0 0
        %665 = vmatprep.subr.bf16.mxu0 0
        %666 = vmatpush1.bf16.msra.mxu0 0
        %667 = vmatprep.subr.bf16.mxu0 0
        %668 = vmatpush1.bf16.msra.mxu0 0
        %669 = vmatprep.subr.bf16.mxu0 0
        %670 = vmatpush1.bf16.msra.mxu0 0
        %671 = vmatprep.subr.bf16.mxu0 0
        %672 = vmatpush1.bf16.msra.mxu0 0
        %673 = vmatprep.subr.bf16.mxu0 0
        %674 = vmatpush1.bf16.msra.mxu0 0
        %675 = vmatprep.subr.bf16.mxu0 0
        %676 = vmatpush1.bf16.msra.mxu0 0
        %677 = vmatprep.subr.bf16.mxu0 0
        %678 = vmatpush1.bf16.msra.mxu0 0
        %679 = vmatprep.subr.bf16.mxu0 0
        %680 = vmatpush1.bf16.msra.mxu0 0
        %681 = vmatprep.subr.bf16.mxu0 0
        %682 = vmatpush1.bf16.msra.mxu0 0
        %683 = vmatprep.subr.bf16.mxu0 0
        %684 = vmatpush1.bf16.msra.mxu0 0
        %685 = vmatprep.subr.bf16.mxu0 0
        %686 = vmatpush1.bf16.msra.mxu0 0
        %687 = vmatprep.subr.bf16.mxu0 0
        %688 = vmatpush1.bf16.msra.mxu0 0
        %689 = vmatprep.mubr.bf16.mxu0 0
        %690 = vmatmul.mubr.bf16.gmra.mrb[0].mxu0 %v652
        %v691 = vpop.f32.mrb[0].mxu0
        %v692 = vadd.f32 0.0, %v691
        %v693 = vpop.f32.mrb[0].mxu0
        %v694 = vpop.f32.mrb[0].mxu0
        %v695 = vpop.f32.mrb[0].mxu0
        %696 = vdwg.mxu0
        %698 = vrot.lane.b32.xlu0 %v692, 16
        %v699 = vpop.permute.xlu0 %698
        %v701 = vadd.f32 %v647, %v699
        %vm702 = vcmask 195712
        %703 = vst.msk [vmem:[#allocation4] sm:$0xff] %vm702, %v701
        %704 = vst.msk [vmem:[%s616] sm:$0xff] %vm360, %v621
        %705 = vrot.lane.b32.xlu0 %v279, 104
        %v706 = vpop.permute.xlu0 %705
        %707 = vrot.lane.b32.xlu0 %v425, 104
        %v708 = vpop.permute.xlu0 %707
        %v710 = vsel %vm291, %v706, 0
        %v713 = vsel %vm291, %v708, 0
        %715 = vmatprep.subr.bf16.mxu0 0
        %716 = vmatpush1.bf16.xpose.msra.mxu0 %v713
        %717 = vmatprep.subr.bf16.mxu0 0
        %718 = vmatpush1.bf16.xpose.msra.mxu0 0
        %719 = vmatprep.subr.bf16.mxu0 0
        %720 = vmatpush1.bf16.xpose.msra.mxu0 0
        %721 = vmatprep.subr.bf16.mxu0 0
        %722 = vmatpush1.bf16.xpose.msra.mxu0 0
        %723 = vmatprep.subr.bf16.mxu0 0
        %724 = vmatpush1.bf16.xpose.msra.mxu0 0
        %725 = vmatprep.subr.bf16.mxu0 0
        %726 = vmatpush1.bf16.xpose.msra.mxu0 0
        %727 = vmatprep.subr.bf16.mxu0 0
        %728 = vmatpush1.bf16.xpose.msra.mxu0 0
        %729 = vmatprep.subr.bf16.mxu0 0
        %730 = vmatpush1.bf16.xpose.msra.mxu0 0
        %731 = vmatprep.subr.bf16.mxu0 0
        %732 = vmatpush1.bf16.xpose.msra.mxu0 0
        %733 = vmatprep.subr.bf16.mxu0 0
        %734 = vmatpush1.bf16.xpose.msra.mxu0 0
        %735 = vmatprep.subr.bf16.mxu0 0
        %736 = vmatpush1.bf16.xpose.msra.mxu0 0
        %737 = vmatprep.subr.bf16.mxu0 0
        %738 = vmatpush1.bf16.xpose.msra.mxu0 0
        %739 = vmatprep.subr.bf16.mxu0 0
        %740 = vmatpush1.bf16.xpose.msra.mxu0 0
        %741 = vmatprep.subr.bf16.mxu0 0
        %742 = vmatpush1.bf16.xpose.msra.mxu0 0
        %743 = vmatprep.subr.bf16.mxu0 0
        %744 = vmatpush1.bf16.xpose.msra.mxu0 0
        %745 = vmatprep.subr.bf16.mxu0 0
        %746 = vmatpush1.bf16.xpose.msra.mxu0 0
        %747 = vmatprep.mubr.bf16.mxu0 0
        %748 = vmatmul.mubr.bf16.gmra.mrb[0].mxu0 %v710
        %v749 = vpop.f32.mrb[0].mxu0
        %v750 = vadd.f32 0.0, %v749
        %v751 = vpop.f32.mrb[0].mxu0
        %v752 = vpop.f32.mrb[0].mxu0
        %v753 = vpop.f32.mrb[0].mxu0
        %754 = vdwg.mxu0
        %s755 = scalar_lea.vmem [#allocation2], 24
        %v756 = vld [vmem:[%s755] sm:$0xff]
        %v757 = vsel %vm291, %v750, -inf
        %758 = vmax.xlane.f32.xlu0 %v757
        %v759 = vpop.xlane.xlu0 %758
        %v760 = vmax.f32 %v756, %v759
        %v761 = vsub.f32 %v756, %v760
        %v762 = vmul.f32 %v761, 1.442695
        %v763 = vpow.pop %v762
        %765 = vset.pattern.permute.xlu0 0
        %766 = vperm.xlu0 %765, %v760
        %v767 = vpop.permute.xlu0 %766
        %v769 = vsub.f32 %v750, %v767
        %v770 = vmul.f32 %v769, 1.442695
        %v771 = vpow.pop %v770
        %s772 = scalar_lea.vmem [#allocation3], 24
        %v773 = vld [vmem:[%s772] sm:$0xff]
        %v774 = vmul.f32 %v763, %v773
        %v775 = vsel %vm291, %v771, 0.0
        %776 = vadd.xlane.f32.xlu0 %v775
        %v777 = vpop.xlane.xlu0 %776
        %v778 = vadd.f32 %v774, %v777
        %779 = vst.msk [vmem:[%s772] sm:$0xff] %vm360, %v778
        %v780 = vld [vmem:[#allocation4] sm:$0xff]
        %782 = vset.pattern.permute.xlu0 0
        %783 = vperm.xlu0 %782, %v763
        %v784 = vpop.permute.xlu0 %783
        %v786 = vmul.f32 %v784, %v780
        %v787 = vpack.c.bf16 %v771, %v771
        %788 = vrot.lane.b32.xlu0 %v509, 104
        %v789 = vpop.permute.xlu0 %788
        %v791 = vsel %vm291, %v787, 0
        %v794 = vsel %vm373, %v789, 0
        %796 = vmatprep.subr.bf16.mxu0 0
        %797 = vmatpush1.bf16.msra.mxu0 %v794
        %798 = vmatprep.subr.bf16.mxu0 0
        %799 = vmatpush1.bf16.msra.mxu0 0
        %800 = vmatprep.subr.bf16.mxu0 0
        %801 = vmatpush1.bf16.msra.mxu0 0
        %802 = vmatprep.subr.bf16.mxu0 0
        %803 = vmatpush1.bf16.msra.mxu0 0
        %804 = vmatprep.subr.bf16.mxu0 0
        %805 = vmatpush1.bf16.msra.mxu0 0
        %806 = vmatprep.subr.bf16.mxu0 0
        %807 = vmatpush1.bf16.msra.mxu0 0
        %808 = vmatprep.subr.bf16.mxu0 0
        %809 = vmatpush1.bf16.msra.mxu0 0
        %810 = vmatprep.subr.bf16.mxu0 0
        %811 = vmatpush1.bf16.msra.mxu0 0
        %812 = vmatprep.subr.bf16.mxu0 0
        %813 = vmatpush1.bf16.msra.mxu0 0
        %814 = vmatprep.subr.bf16.mxu0 0
        %815 = vmatpush1.bf16.msra.mxu0 0
        %816 = vmatprep.subr.bf16.mxu0 0
        %817 = vmatpush1.bf16.msra.mxu0 0
        %818 = vmatprep.subr.bf16.mxu0 0
        %819 = vmatpush1.bf16.msra.mxu0 0
        %820 = vmatprep.subr.bf16.mxu0 0
        %821 = vmatpush1.bf16.msra.mxu0 0
        %822 = vmatprep.subr.bf16.mxu0 0
        %823 = vmatpush1.bf16.msra.mxu0 0
        %824 = vmatprep.subr.bf16.mxu0 0
        %825 = vmatpush1.bf16.msra.mxu0 0
        %826 = vmatprep.subr.bf16.mxu0 0
        %827 = vmatpush1.bf16.msra.mxu0 0
        %828 = vmatprep.mubr.bf16.mxu0 0
        %829 = vmatmul.mubr.bf16.gmra.mrb[0].mxu0 %v791
        %v830 = vpop.f32.mrb[0].mxu0
        %v831 = vadd.f32 0.0, %v830
        %v832 = vpop.f32.mrb[0].mxu0
        %v833 = vpop.f32.mrb[0].mxu0
        %v834 = vpop.f32.mrb[0].mxu0
        %835 = vdwg.mxu0
        %837 = vrot.lane.b32.xlu0 %v831, 24
        %v838 = vpop.permute.xlu0 %837
        %v840 = vadd.f32 %v786, %v838
        %vm841 = vcmask 261312
        %842 = vst.msk [vmem:[#allocation4] sm:$0xff] %vm841, %v840
        %843 = vst.msk [vmem:[%s755] sm:$0xff] %vm360, %v760
      $region40: #{_lambda_.34} parent=31 // pred_fallthru
        _
      %p844 = scmp.gt.s32.totalorder %s284, %s282
      %p845 = pnand %p287, %p844
      %p846 = pneg %p845
      // Predicated region
      $region41: #{_lambda_.34} parent=31 // pred_check
        _
      $region42: #{_lambda_.34} parent=31 // pred_check_branch
        %848 = sbr.rel (%p845) target = $region44
      $region43: #{_lambda_.34} parent=31 // pred_region
        %v849 = vlaneseq
        %v850 = vshrl.u32 %v849, 7
        %v851 = vstv %s282
        %v852 = vadd.s32 %v851, %v850
        %v853 = vlaneseq
        %v854 = vand.u32 %v853, 127
        %v855 = vstv %s283
        %v856 = vadd.s32 %v855, %v854
        %vm857 = vcmp.ge.s32.totalorder %v852, %v856
        %v858 = vsel %vm857, 0.0, -1e+30
        %vm859 = vcmask 64512
        %v861 = vsel %vm859, %v279, 0
        %v864 = vsel %vm859, %v280, 0
        %866 = vmatprep.subr.bf16.mxu0 0
        %867 = vmatpush1.bf16.xpose.msra.mxu0 %v864
        %868 = vmatprep.subr.bf16.mxu0 0
        %869 = vmatpush1.bf16.xpose.msra.mxu0 0
        %870 = vmatprep.subr.bf16.mxu0 0
        %871 = vmatpush1.bf16.xpose.msra.mxu0 0
        %872 = vmatprep.subr.bf16.mxu0 0
        %873 = vmatpush1.bf16.xpose.msra.mxu0 0
        %874 = vmatprep.subr.bf16.mxu0 0
        %875 = vmatpush1.bf16.xpose.msra.mxu0 0
        %876 = vmatprep.subr.bf16.mxu0 0
        %877 = vmatpush1.bf16.xpose.msra.mxu0 0
        %878 = vmatprep.subr.bf16.mxu0 0
        %879 = vmatpush1.bf16.xpose.msra.mxu0 0
        %880 = vmatprep.subr.bf16.mxu0 0
        %881 = vmatpush1.bf16.xpose.msra.mxu0 0
        %882 = vmatprep.subr.bf16.mxu0 0
        %883 = vmatpush1.bf16.xpose.msra.mxu0 0
        %884 = vmatprep.subr.bf16.mxu0 0
        %885 = vmatpush1.bf16.xpose.msra.mxu0 0
        %886 = vmatprep.subr.bf16.mxu0 0
        %887 = vmatpush1.bf16.xpose.msra.mxu0 0
        %888 = vmatprep.subr.bf16.mxu0 0
        %889 = vmatpush1.bf16.xpose.msra.mxu0 0
        %890 = vmatprep.subr.bf16.mxu0 0
        %891 = vmatpush1.bf16.xpose.msra.mxu0 0
        %892 = vmatprep.subr.bf16.mxu0 0
        %893 = vmatpush1.bf16.xpose.msra.mxu0 0
        %894 = vmatprep.subr.bf16.mxu0 0
        %895 = vmatpush1.bf16.xpose.msra.mxu0 0
        %896 = vmatprep.subr.bf16.mxu0 0
        %897 = vmatpush1.bf16.xpose.msra.mxu0 0
        %898 = vmatprep.mubr.bf16.mxu0 0
        %899 = vmatmul.mubr.bf16.gmra.mrb[0].mxu0 %v861
        %v900 = vpop.f32.mrb[0].mxu0
        %v901 = vadd.f32 %v858, %v900
        %v902 = vpop.f32.mrb[0].mxu0
        %v903 = vpop.f32.mrb[0].mxu0
        %v904 = vpop.f32.mrb[0].mxu0
        %905 = vdwg.mxu0
        %v906 = vld [vmem:[#allocation2] sm:$0xff]
        %v907 = vsel %vm859, %v901, -inf
        %908 = vmax.xlane.f32.xlu0 %v907
        %v909 = vpop.xlane.xlu0 %908
        %v910 = vmax.f32 %v906, %v909
        %v911 = vsub.f32 %v906, %v910
        %v912 = vmul.f32 %v911, 1.442695
        %v913 = vpow.pop %v912
        %915 = vset.pattern.permute.xlu0 0
        %916 = vperm.xlu0 %915, %v910
        %v917 = vpop.permute.xlu0 %916
        %v919 = vsub.f32 %v901, %v917
        %v920 = vmul.f32 %v919, 1.442695
        %v921 = vpow.pop %v920
        %v922 = vld [vmem:[#allocation3] sm:$0xff]
        %v923 = vmul.f32 %v913, %v922
        %v924 = vsel %vm859, %v921, 0.0
        %925 = vadd.xlane.f32.xlu0 %v924
        %v926 = vpop.xlane.xlu0 %925
        %v927 = vadd.f32 %v923, %v926
        %vm928 = vcmask 7168
        %929 = vst.msk [vmem:[#allocation3] sm:$0xff] %vm928, %v927
        %v930 = vld [vmem:[#allocation4] sm:$0xff]
        %932 = vset.pattern.permute.xlu0 0
        %933 = vperm.xlu0 %932, %v913
        %v934 = vpop.permute.xlu0 %933
        %v936 = vmul.f32 %v934, %v930
        %v937 = vpack.c.bf16 %v921, %v921
        %v939 = vsel %vm859, %v937, 0
        %vm941 = vcmask 1043456
        %v943 = vsel %vm941, %v281, 0
        %945 = vmatprep.subr.bf16.mxu0 0
        %946 = vmatpush1.bf16.msra.mxu0 %v943
        %947 = vmatprep.subr.bf16.mxu0 0
        %948 = vmatpush1.bf16.msra.mxu0 0
        %949 = vmatprep.subr.bf16.mxu0 0
        %950 = vmatpush1.bf16.msra.mxu0 0
        %951 = vmatprep.subr.bf16.mxu0 0
        %952 = vmatpush1.bf16.msra.mxu0 0
        %953 = vmatprep.subr.bf16.mxu0 0
        %954 = vmatpush1.bf16.msra.mxu0 0
        %955 = vmatprep.subr.bf16.mxu0 0
        %956 = vmatpush1.bf16.msra.mxu0 0
        %957 = vmatprep.subr.bf16.mxu0 0
        %958 = vmatpush1.bf16.msra.mxu0 0
        %959 = vmatprep.subr.bf16.mxu0 0
        %960 = vmatpush1.bf16.msra.mxu0 0
        %961 = vmatprep.subr.bf16.mxu0 0
        %962 = vmatpush1.bf16.msra.mxu0 0
        %963 = vmatprep.subr.bf16.mxu0 0
        %964 = vmatpush1.bf16.msra.mxu0 0
        %965 = vmatprep.subr.bf16.mxu0 0
        %966 = vmatpush1.bf16.msra.mxu0 0
        %967 = vmatprep.subr.bf16.mxu0 0
        %968 = vmatpush1.bf16.msra.mxu0 0
        %969 = vmatprep.subr.bf16.mxu0 0
        %970 = vmatpush1.bf16.msra.mxu0 0
        %971 = vmatprep.subr.bf16.mxu0 0
        %972 = vmatpush1.bf16.msra.mxu0 0
        %973 = vmatprep.subr.bf16.mxu0 0
        %974 = vmatpush1.bf16.msra.mxu0 0
        %975 = vmatprep.subr.bf16.mxu0 0
        %976 = vmatpush1.bf16.msra.mxu0 0
        %977 = vmatprep.mubr.bf16.mxu0 0
        %978 = vmatmul.mubr.bf16.gmra.mrb[0].mxu0 %v939
        %v979 = vpop.f32.mrb[0].mxu0
        %v980 = vadd.f32 0.0, %v979
        %v981 = vpop.f32.mrb[0].mxu0
        %v982 = vpop.f32.mrb[0].mxu0
        %v983 = vpop.f32.mrb[0].mxu0
        %984 = vdwg.mxu0
        %v985 = vadd.f32 %v936, %v980
        %986 = vst.msk [vmem:[#allocation4] sm:$0xff] %vm859, %v985
        %987 = vst.msk [vmem:[#allocation2] sm:$0xff] %vm928, %v910
        %989 = vrot.lane.b32.xlu0 %v279, 120
        %v990 = vpop.permute.xlu0 %989
        %v992 = vunpack.c.l.b16 %v280
        %v993 = vpack.c.b16 %v992, %v992
        %994 = vrot.lane.b32.xlu0 %v993, 120
        %v995 = vpop.permute.xlu0 %994
        %v997 = vsel %vm859, %v990, 0
        %v1000 = vsel %vm859, %v995, 0
        %1002 = vmatprep.subr.bf16.mxu0 0
        %1003 = vmatpush1.bf16.xpose.msra.mxu0 %v1000
        %1004 = vmatprep.subr.bf16.mxu0 0
        %1005 = vmatpush1.bf16.xpose.msra.mxu0 0
        %1006 = vmatprep.subr.bf16.mxu0 0
        %1007 = vmatpush1.bf16.xpose.msra.mxu0 0
        %1008 = vmatprep.subr.bf16.mxu0 0
        %1009 = vmatpush1.bf16.xpose.msra.mxu0 0
        %1010 = vmatprep.subr.bf16.mxu0 0
        %1011 = vmatpush1.bf16.xpose.msra.mxu0 0
        %1012 = vmatprep.subr.bf16.mxu0 0
        %1013 = vmatpush1.bf16.xpose.msra.mxu0 0
        %1014 = vmatprep.subr.bf16.mxu0 0
        %1015 = vmatpush1.bf16.xpose.msra.mxu0 0
        %1016 = vmatprep.subr.bf16.mxu0 0
        %1017 = vmatpush1.bf16.xpose.msra.mxu0 0
        %1018 = vmatprep.subr.bf16.mxu0 0
        %1019 = vmatpush1.bf16.xpose.msra.mxu0 0
        %1020 = vmatprep.subr.bf16.mxu0 0
        %1021 = vmatpush1.bf16.xpose.msra.mxu0 0
        %1022 = vmatprep.subr.bf16.mxu0 0
        %1023 = vmatpush1.bf16.xpose.msra.mxu0 0
        %1024 = vmatprep.subr.bf16.mxu0 0
        %1025 = vmatpush1.bf16.xpose.msra.mxu0 0
        %1026 = vmatprep.subr.bf16.mxu0 0
        %1027 = vmatpush1.bf16.xpose.msra.mxu0 0
        %1028 = vmatprep.subr.bf16.mxu0 0
        %1029 = vmatpush1.bf16.xpose.msra.mxu0 0
        %1030 = vmatprep.subr.bf16.mxu0 0
        %1031 = vmatpush1.bf16.xpose.msra.mxu0 0
        %1032 = vmatprep.subr.bf16.mxu0 0
        %1033 = vmatpush1.bf16.xpose.msra.mxu0 0
        %1034 = vmatprep.mubr.bf16.mxu0 0
        %1035 = vmatmul.mubr.bf16.gmra.mrb[0].mxu0 %v997
        %v1036 = vpop.f32.mrb[0].mxu0
        %v1037 = vadd.f32 %v858, %v1036
        %v1038 = vpop.f32.mrb[0].mxu0
        %v1039 = vpop.f32.mrb[0].mxu0
        %v1040 = vpop.f32.mrb[0].mxu0
        %1041 = vdwg.mxu0
        %s1042 = scalar_lea.vmem [#allocation2], 8
        %v1043 = vld [vmem:[%s1042] sm:$0xff]
        %v1044 = vsel %vm859, %v1037, -inf
        %1045 = vmax.xlane.f32.xlu0 %v1044
        %v1046 = vpop.xlane.xlu0 %1045
        %v1047 = vmax.f32 %v1043, %v1046
        %v1048 = vsub.f32 %v1043, %v1047
        %v1049 = vmul.f32 %v1048, 1.442695
        %v1050 = vpow.pop %v1049
        %1052 = vset.pattern.permute.xlu0 0
        %1053 = vperm.xlu0 %1052, %v1047
        %v1054 = vpop.permute.xlu0 %1053
        %v1056 = vsub.f32 %v1037, %v1054
        %v1057 = vmul.f32 %v1056, 1.442695
        %v1058 = vpow.pop %v1057
        %s1059 = scalar_lea.vmem [#allocation3], 8
        %v1060 = vld [vmem:[%s1059] sm:$0xff]
        %v1061 = vmul.f32 %v1050, %v1060
        %v1062 = vsel %vm859, %v1058, 0.0
        %1063 = vadd.xlane.f32.xlu0 %v1062
        %v1064 = vpop.xlane.xlu0 %1063
        %v1065 = vadd.f32 %v1061, %v1064
        %1066 = vst.msk [vmem:[%s1059] sm:$0xff] %vm928, %v1065
        %v1067 = vld [vmem:[#allocation4] sm:$0xff]
        %1069 = vset.pattern.permute.xlu0 0
        %1070 = vperm.xlu0 %1069, %v1050
        %v1071 = vpop.permute.xlu0 %1070
        %v1073 = vmul.f32 %v1071, %v1067
        %v1074 = vpack.c.bf16 %v1058, %v1058
        %v1076 = vunpack.c.l.b16 %v281
        %v1077 = vpack.c.b16 %v1076, %v1076
        %1078 = vrot.lane.b32.xlu0 %v1077, 120
        %v1079 = vpop.permute.xlu0 %1078
        %v1081 = vsel %vm859, %v1074, 0
        %v1084 = vsel %vm941, %v1079, 0
        %1086 = vmatprep.subr.bf16.mxu0 0
        %1087 = vmatpush1.bf16.msra.mxu0 %v1084
        %1088 = vmatprep.subr.bf16.mxu0 0
        %1089 = vmatpush1.bf16.msra.mxu0 0
        %1090 = vmatprep.subr.bf16.mxu0 0
        %1091 = vmatpush1.bf16.msra.mxu0 0
        %1092 = vmatprep.subr.bf16.mxu0 0
        %1093 = vmatpush1.bf16.msra.mxu0 0
        %1094 = vmatprep.subr.bf16.mxu0 0
        %1095 = vmatpush1.bf16.msra.mxu0 0
        %1096 = vmatprep.subr.bf16.mxu0 0
        %1097 = vmatpush1.bf16.msra.mxu0 0
        %1098 = vmatprep.subr.bf16.mxu0 0
        %1099 = vmatpush1.bf16.msra.mxu0 0
        %1100 = vmatprep.subr.bf16.mxu0 0
        %1101 = vmatpush1.bf16.msra.mxu0 0
        %1102 = vmatprep.subr.bf16.mxu0 0
        %1103 = vmatpush1.bf16.msra.mxu0 0
        %1104 = vmatprep.subr.bf16.mxu0 0
        %1105 = vmatpush1.bf16.msra.mxu0 0
        %1106 = vmatprep.subr.bf16.mxu0 0
        %1107 = vmatpush1.bf16.msra.mxu0 0
        %1108 = vmatprep.subr.bf16.mxu0 0
        %1109 = vmatpush1.bf16.msra.mxu0 0
        %1110 = vmatprep.subr.bf16.mxu0 0
        %1111 = vmatpush1.bf16.msra.mxu0 0
        %1112 = vmatprep.subr.bf16.mxu0 0
        %1113 = vmatpush1.bf16.msra.mxu0 0
        %1114 = vmatprep.subr.bf16.mxu0 0
        %1115 = vmatpush1.bf16.msra.mxu0 0
        %1116 = vmatprep.subr.bf16.mxu0 0
        %1117 = vmatpush1.bf16.msra.mxu0 0
        %1118 = vmatprep.mubr.bf16.mxu0 0
        %1119 = vmatmul.mubr.bf16.gmra.mrb[0].mxu0 %v1081
        %v1120 = vpop.f32.mrb[0].mxu0
        %v1121 = vadd.f32 0.0, %v1120
        %v1122 = vpop.f32.mrb[0].mxu0
        %v1123 = vpop.f32.mrb[0].mxu0
        %v1124 = vpop.f32.mrb[0].mxu0
        %1125 = vdwg.mxu0
        %1127 = vrot.lane.b32.xlu0 %v1121, 8
        %v1128 = vpop.permute.xlu0 %1127
        %v1130 = vadd.f32 %v1073, %v1128
        %vm1131 = vcmask 130112
        %1132 = vst.msk [vmem:[#allocation4] sm:$0xff] %vm1131, %v1130
        %1133 = vst.msk [vmem:[%s1042] sm:$0xff] %vm928, %v1047
        %1134 = vrot.lane.b32.xlu0 %v279, 112
        %v1135 = vpop.permute.xlu0 %1134
        %1136 = vrot.lane.b32.xlu0 %v993, 112
        %v1137 = vpop.permute.xlu0 %1136
        %v1139 = vsel %vm859, %v1135, 0
        %v1142 = vsel %vm859, %v1137, 0
        %1144 = vmatprep.subr.bf16.mxu0 0
        %1145 = vmatpush1.bf16.xpose.msra.mxu0 %v1142
        %1146 = vmatprep.subr.bf16.mxu0 0
        %1147 = vmatpush1.bf16.xpose.msra.mxu0 0
        %1148 = vmatprep.subr.bf16.mxu0 0
        %1149 = vmatpush1.bf16.xpose.msra.mxu0 0
        %1150 = vmatprep.subr.bf16.mxu0 0
        %1151 = vmatpush1.bf16.xpose.msra.mxu0 0
        %1152 = vmatprep.subr.bf16.mxu0 0
        %1153 = vmatpush1.bf16.xpose.msra.mxu0 0
        %1154 = vmatprep.subr.bf16.mxu0 0
        %1155 = vmatpush1.bf16.xpose.msra.mxu0 0
        %1156 = vmatprep.subr.bf16.mxu0 0
        %1157 = vmatpush1.bf16.xpose.msra.mxu0 0
        %1158 = vmatprep.subr.bf16.mxu0 0
        %1159 = vmatpush1.bf16.xpose.msra.mxu0 0
        %1160 = vmatprep.subr.bf16.mxu0 0
        %1161 = vmatpush1.bf16.xpose.msra.mxu0 0
        %1162 = vmatprep.subr.bf16.mxu0 0
        %1163 = vmatpush1.bf16.xpose.msra.mxu0 0
        %1164 = vmatprep.subr.bf16.mxu0 0
        %1165 = vmatpush1.bf16.xpose.msra.mxu0 0
        %1166 = vmatprep.subr.bf16.mxu0 0
        %1167 = vmatpush1.bf16.xpose.msra.mxu0 0
        %1168 = vmatprep.subr.bf16.mxu0 0
        %1169 = vmatpush1.bf16.xpose.msra.mxu0 0
        %1170 = vmatprep.subr.bf16.mxu0 0
        %1171 = vmatpush1.bf16.xpose.msra.mxu0 0
        %1172 = vmatprep.subr.bf16.mxu0 0
        %1173 = vmatpush1.bf16.xpose.msra.mxu0 0
        %1174 = vmatprep.subr.bf16.mxu0 0
        %1175 = vmatpush1.bf16.xpose.msra.mxu0 0
        %1176 = vmatprep.mubr.bf16.mxu0 0
        %1177 = vmatmul.mubr.bf16.gmra.mrb[0].mxu0 %v1139
        %v1178 = vpop.f32.mrb[0].mxu0
        %v1179 = vadd.f32 %v858, %v1178
        %v1180 = vpop.f32.mrb[0].mxu0
        %v1181 = vpop.f32.mrb[0].mxu0
        %v1182 = vpop.f32.mrb[0].mxu0
        %1183 = vdwg.mxu0
        %s1184 = scalar_lea.vmem [#allocation2], 16
        %v1185 = vld [vmem:[%s1184] sm:$0xff]
        %v1186 = vsel %vm859, %v1179, -inf
        %1187 = vmax.xlane.f32.xlu0 %v1186
        %v1188 = vpop.xlane.xlu0 %1187
        %v1189 = vmax.f32 %v1185, %v1188
        %v1190 = vsub.f32 %v1185, %v1189
        %v1191 = vmul.f32 %v1190, 1.442695
        %v1192 = vpow.pop %v1191
        %1194 = vset.pattern.permute.xlu0 0
        %1195 = vperm.xlu0 %1194, %v1189
        %v1196 = vpop.permute.xlu0 %1195
        %v1198 = vsub.f32 %v1179, %v1196
        %v1199 = vmul.f32 %v1198, 1.442695
        %v1200 = vpow.pop %v1199
        %s1201 = scalar_lea.vmem [#allocation3], 16
        %v1202 = vld [vmem:[%s1201] sm:$0xff]
        %v1203 = vmul.f32 %v1192, %v1202
        %v1204 = vsel %vm859, %v1200, 0.0
        %1205 = vadd.xlane.f32.xlu0 %v1204
        %v1206 = vpop.xlane.xlu0 %1205
        %v1207 = vadd.f32 %v1203, %v1206
        %1208 = vst.msk [vmem:[%s1201] sm:$0xff] %vm928, %v1207
        %v1209 = vld [vmem:[#allocation4] sm:$0xff]
        %1211 = vset.pattern.permute.xlu0 0
        %1212 = vperm.xlu0 %1211, %v1192
        %v1213 = vpop.permute.xlu0 %1212
        %v1215 = vmul.f32 %v1213, %v1209
        %v1216 = vpack.c.bf16 %v1200, %v1200
        %1217 = vrot.lane.b32.xlu0 %v1077, 112
        %v1218 = vpop.permute.xlu0 %1217
        %v1220 = vsel %vm859, %v1216, 0
        %v1223 = vsel %vm941, %v1218, 0
        %1225 = vmatprep.subr.bf16.mxu0 0
        %1226 = vmatpush1.bf16.msra.mxu0 %v1223
        %1227 = vmatprep.subr.bf16.mxu0 0
        %1228 = vmatpush1.bf16.msra.mxu0 0
        %1229 = vmatprep.subr.bf16.mxu0 0
        %1230 = vmatpush1.bf16.msra.mxu0 0
        %1231 = vmatprep.subr.bf16.mxu0 0
        %1232 = vmatpush1.bf16.msra.mxu0 0
        %1233 = vmatprep.subr.bf16.mxu0 0
        %1234 = vmatpush1.bf16.msra.mxu0 0
        %1235 = vmatprep.subr.bf16.mxu0 0
        %1236 = vmatpush1.bf16.msra.mxu0 0
        %1237 = vmatprep.subr.bf16.mxu0 0
        %1238 = vmatpush1.bf16.msra.mxu0 0
        %1239 = vmatprep.subr.bf16.mxu0 0
        %1240 = vmatpush1.bf16.msra.mxu0 0
        %1241 = vmatprep.subr.bf16.mxu0 0
        %1242 = vmatpush1.bf16.msra.mxu0 0
        %1243 = vmatprep.subr.bf16.mxu0 0
        %1244 = vmatpush1.bf16.msra.mxu0 0
        %1245 = vmatprep.subr.bf16.mxu0 0
        %1246 = vmatpush1.bf16.msra.mxu0 0
        %1247 = vmatprep.subr.bf16.mxu0 0
        %1248 = vmatpush1.bf16.msra.mxu0 0
        %1249 = vmatprep.subr.bf16.mxu0 0
        %1250 = vmatpush1.bf16.msra.mxu0 0
        %1251 = vmatprep.subr.bf16.mxu0 0
        %1252 = vmatpush1.bf16.msra.mxu0 0
        %1253 = vmatprep.subr.bf16.mxu0 0
        %1254 = vmatpush1.bf16.msra.mxu0 0
        %1255 = vmatprep.subr.bf16.mxu0 0
        %1256 = vmatpush1.bf16.msra.mxu0 0
        %1257 = vmatprep.mubr.bf16.mxu0 0
        %1258 = vmatmul.mubr.bf16.gmra.mrb[0].mxu0 %v1220
        %v1259 = vpop.f32.mrb[0].mxu0
        %v1260 = vadd.f32 0.0, %v1259
        %v1261 = vpop.f32.mrb[0].mxu0
        %v1262 = vpop.f32.mrb[0].mxu0
        %v1263 = vpop.f32.mrb[0].mxu0
        %1264 = vdwg.mxu0
        %1266 = vrot.lane.b32.xlu0 %v1260, 16
        %v1267 = vpop.permute.xlu0 %1266
        %v1269 = vadd.f32 %v1215, %v1267
        %vm1270 = vcmask 195712
        %1271 = vst.msk [vmem:[#allocation4] sm:$0xff] %vm1270, %v1269
        %1272 = vst.msk [vmem:[%s1184] sm:$0xff] %vm928, %v1189
        %1273 = vrot.lane.b32.xlu0 %v279, 104
        %v1274 = vpop.permute.xlu0 %1273
        %1275 = vrot.lane.b32.xlu0 %v993, 104
        %v1276 = vpop.permute.xlu0 %1275
        %v1278 = vsel %vm859, %v1274, 0
        %v1281 = vsel %vm859, %v1276, 0
        %1283 = vmatprep.subr.bf16.mxu0 0
        %1284 = vmatpush1.bf16.xpose.msra.mxu0 %v1281
        %1285 = vmatprep.subr.bf16.mxu0 0
        %1286 = vmatpush1.bf16.xpose.msra.mxu0 0
        %1287 = vmatprep.subr.bf16.mxu0 0
        %1288 = vmatpush1.bf16.xpose.msra.mxu0 0
        %1289 = vmatprep.subr.bf16.mxu0 0
        %1290 = vmatpush1.bf16.xpose.msra.mxu0 0
        %1291 = vmatprep.subr.bf16.mxu0 0
        %1292 = vmatpush1.bf16.xpose.msra.mxu0 0
        %1293 = vmatprep.subr.bf16.mxu0 0
        %1294 = vmatpush1.bf16.xpose.msra.mxu0 0
        %1295 = vmatprep.subr.bf16.mxu0 0
        %1296 = vmatpush1.bf16.xpose.msra.mxu0 0
        %1297 = vmatprep.subr.bf16.mxu0 0
        %1298 = vmatpush1.bf16.xpose.msra.mxu0 0
        %1299 = vmatprep.subr.bf16.mxu0 0
        %1300 = vmatpush1.bf16.xpose.msra.mxu0 0
        %1301 = vmatprep.subr.bf16.mxu0 0
        %1302 = vmatpush1.bf16.xpose.msra.mxu0 0
        %1303 = vmatprep.subr.bf16.mxu0 0
        %1304 = vmatpush1.bf16.xpose.msra.mxu0 0
        %1305 = vmatprep.subr.bf16.mxu0 0
        %1306 = vmatpush1.bf16.xpose.msra.mxu0 0
        %1307 = vmatprep.subr.bf16.mxu0 0
        %1308 = vmatpush1.bf16.xpose.msra.mxu0 0
        %1309 = vmatprep.subr.bf16.mxu0 0
        %1310 = vmatpush1.bf16.xpose.msra.mxu0 0
        %1311 = vmatprep.subr.bf16.mxu0 0
        %1312 = vmatpush1.bf16.xpose.msra.mxu0 0
        %1313 = vmatprep.subr.bf16.mxu0 0
        %1314 = vmatpush1.bf16.xpose.msra.mxu0 0
        %1315 = vmatprep.mubr.bf16.mxu0 0
        %1316 = vmatmul.mubr.bf16.gmra.mrb[0].mxu0 %v1278
        %v1317 = vpop.f32.mrb[0].mxu0
        %v1318 = vadd.f32 %v858, %v1317
        %v1319 = vpop.f32.mrb[0].mxu0
        %v1320 = vpop.f32.mrb[0].mxu0
        %v1321 = vpop.f32.mrb[0].mxu0
        %1322 = vdwg.mxu0
        %s1323 = scalar_lea.vmem [#allocation2], 24
        %v1324 = vld [vmem:[%s1323] sm:$0xff]
        %v1325 = vsel %vm859, %v1318, -inf
        %1326 = vmax.xlane.f32.xlu0 %v1325
        %v1327 = vpop.xlane.xlu0 %1326
        %v1328 = vmax.f32 %v1324, %v1327
        %v1329 = vsub.f32 %v1324, %v1328
        %v1330 = vmul.f32 %v1329, 1.442695
        %v1331 = vpow.pop %v1330
        %1333 = vset.pattern.permute.xlu0 0
        %1334 = vperm.xlu0 %1333, %v1328
        %v1335 = vpop.permute.xlu0 %1334
        %v1337 = vsub.f32 %v1318, %v1335
        %v1338 = vmul.f32 %v1337, 1.442695
        %v1339 = vpow.pop %v1338
        %s1340 = scalar_lea.vmem [#allocation3], 24
        %v1341 = vld [vmem:[%s1340] sm:$0xff]
        %v1342 = vmul.f32 %v1331, %v1341
        %v1343 = vsel %vm859, %v1339, 0.0
        %1344 = vadd.xlane.f32.xlu0 %v1343
        %v1345 = vpop.xlane.xlu0 %1344
        %v1346 = vadd.f32 %v1342, %v1345
        %1347 = vst.msk [vmem:[%s1340] sm:$0xff] %vm928, %v1346
        %v1348 = vld [vmem:[#allocation4] sm:$0xff]
        %1350 = vset.pattern.permute.xlu0 0
        %1351 = vperm.xlu0 %1350, %v1331
        %v1352 = vpop.permute.xlu0 %1351
        %v1354 = vmul.f32 %v1352, %v1348
        %v1355 = vpack.c.bf16 %v1339, %v1339
        %1356 = vrot.lane.b32.xlu0 %v1077, 104
        %v1357 = vpop.permute.xlu0 %1356
        %v1359 = vsel %vm859, %v1355, 0
        %v1362 = vsel %vm941, %v1357, 0
        %1364 = vmatprep.subr.bf16.mxu0 0
        %1365 = vmatpush1.bf16.msra.mxu0 %v1362
        %1366 = vmatprep.subr.bf16.mxu0 0
        %1367 = vmatpush1.bf16.msra.mxu0 0
        %1368 = vmatprep.subr.bf16.mxu0 0
        %1369 = vmatpush1.bf16.msra.mxu0 0
        %1370 = vmatprep.subr.bf16.mxu0 0
        %1371 = vmatpush1.bf16.msra.mxu0 0
        %1372 = vmatprep.subr.bf16.mxu0 0
        %1373 = vmatpush1.bf16.msra.mxu0 0
        %1374 = vmatprep.subr.bf16.mxu0 0
        %1375 = vmatpush1.bf16.msra.mxu0 0
        %1376 = vmatprep.subr.bf16.mxu0 0
        %1377 = vmatpush1.bf16.msra.mxu0 0
        %1378 = vmatprep.subr.bf16.mxu0 0
        %1379 = vmatpush1.bf16.msra.mxu0 0
        %1380 = vmatprep.subr.bf16.mxu0 0
        %1381 = vmatpush1.bf16.msra.mxu0 0
        %1382 = vmatprep.subr.bf16.mxu0 0
        %1383 = vmatpush1.bf16.msra.mxu0 0
        %1384 = vmatprep.subr.bf16.mxu0 0
        %1385 = vmatpush1.bf16.msra.mxu0 0
        %1386 = vmatprep.subr.bf16.mxu0 0
        %1387 = vmatpush1.bf16.msra.mxu0 0
        %1388 = vmatprep.subr.bf16.mxu0 0
        %1389 = vmatpush1.bf16.msra.mxu0 0
        %1390 = vmatprep.subr.bf16.mxu0 0
        %1391 = vmatpush1.bf16.msra.mxu0 0
        %1392 = vmatprep.subr.bf16.mxu0 0
        %1393 = vmatpush1.bf16.msra.mxu0 0
        %1394 = vmatprep.subr.bf16.mxu0 0
        %1395 = vmatpush1.bf16.msra.mxu0 0
        %1396 = vmatprep.mubr.bf16.mxu0 0
        %1397 = vmatmul.mubr.bf16.gmra.mrb[0].mxu0 %v1359
        %v1398 = vpop.f32.mrb[0].mxu0
        %v1399 = vadd.f32 0.0, %v1398
        %v1400 = vpop.f32.mrb[0].mxu0
        %v1401 = vpop.f32.mrb[0].mxu0
        %v1402 = vpop.f32.mrb[0].mxu0
        %1403 = vdwg.mxu0
        %1405 = vrot.lane.b32.xlu0 %v1399, 24
        %v1406 = vpop.permute.xlu0 %1405
        %v1408 = vadd.f32 %v1354, %v1406
        %vm1409 = vcmask 261312
        %1410 = vst.msk [vmem:[#allocation4] sm:$0xff] %vm1409, %v1408
        %1411 = vst.msk [vmem:[%s1323] sm:$0xff] %vm928, %v1328
      $region44: #{_lambda_.34} parent=31 // pred_fallthru
        _
      // Predicated region
      $region45: #{_lambda_.34} parent=31 // pred_check
        %p1412 = pneg %p261
      $region46: #{_lambda_.34} parent=31 // pred_check_branch
        %1414 = sbr.rel (%p1412) target = $region48
      $region47: #{_lambda_.34} parent=31 // pred_region
        %v1415 = vld [vmem:[#allocation3] sm:$0xff]
        %v1416 = vrcp.pop %v1415
        %1418 = vset.pattern.permute.xlu0 0
        %1419 = vperm.xlu0 %1418, %v1416
        %v1420 = vpop.permute.xlu0 %1419
        %s1422 = scalar_lea.vmem [#allocation3], 8
        %v1423 = vld [vmem:[%s1422] sm:$0xff]
        %v1424 = vrcp.pop %v1423
        %1426 = vset.pattern.permute.xlu0 0
        %1427 = vperm.xlu0 %1426, %v1424
        %v1428 = vpop.permute.xlu0 %1427
        %s1430 = scalar_lea.vmem [#allocation3], 16
        %v1431 = vld [vmem:[%s1430] sm:$0xff]
        %v1432 = vrcp.pop %v1431
        %1434 = vset.pattern.permute.xlu0 0
        %1435 = vperm.xlu0 %1434, %v1432
        %v1436 = vpop.permute.xlu0 %1435
        %s1438 = scalar_lea.vmem [#allocation3], 24
        %v1439 = vld [vmem:[%s1438] sm:$0xff]
        %v1440 = vrcp.pop %v1439
        %1442 = vset.pattern.permute.xlu0 0
        %1443 = vperm.xlu0 %1442, %v1440
        %v1444 = vpop.permute.xlu0 %1443
        %vm1446 = vcmask 64512
        %v1447 = vsel %vm1446, %v1420, %v1428
        %vm1448 = vcmask 130048
        %v1449 = vsel %vm1448, %v1447, %v1436
        %vm1450 = vcmask 195584
        %v1451 = vsel %vm1450, %v1449, %v1444
        %v1452 = vld [vmem:[#allocation4] sm:$0xff]
        %v1453 = vmul.f32 %v1452, %v1451
        %v1454 = vpack.c.bf16 %v1453, %v1453
        %vm1455 = vcmask 257024
        %1456 = vst.msk [vmem:[%s259] sm:$0xf] %vm1455, %v1454
      $region48: #{_lambda_.34} parent=31 // pred_fallthru
        _
      %p1457 = scmp.lt.s32.totalorder %s19, 1
      %s1458 = scalar_select %p1457, %s19, 1
      %p1459 = scmp.lt.s32.totalorder %s20, 0
      %s1460 = scalar_select %p1459, %s20, 0
      %s1461 = sadd.s32 %s1460, %s1458
      %s1462 = smul.addr %s1461, 4
      %s1463 = scalar_lea.vmem %s3, %s1462
      // Predicated region
      $region49: #{_lambda_.34} parent=31 // pred_check
        %p1464 = pneg %p137
      $region50: #{_lambda_.34} parent=31 // pred_check_branch
        %1466 = sbr.rel (%p1464) target = $region52
      $region51: #{_lambda_.34} parent=31 // pred_region
        _
      $region52: #{_lambda_.34} parent=31 // pred_fallthru
        _
    $region32: #{_lambda_.34} parent=5 // pred_fallthru
      _
    %p1467 = scmp.le.s32.totalorder 2, %s9
    // Predicated region
    $region53: #{_lambda_.34} parent=5 // pred_check
      %p1468 = pneg %p1467
    $region54: #{_lambda_.34} parent=5 // pred_check_branch
      %1470 = sbr.rel (%p1468) target = $region56
    $region55: #{_lambda_.34} parent=5 // pred_region
      %s1471 = ssub.s32 %s9, 2
      // Predicated region
      $region57: #{_lambda_.34} parent=55 // pred_check
        %p1472 = pneg %p143
      $region58: #{_lambda_.34} parent=55 // pred_check_branch
        %1474 = sbr.rel (%p1472) target = $region60
      $region59: #{_lambda_.34} parent=55 // pred_region
        %p1475 = scmp.lt.s32.totalorder %s22, 1
        %s1476 = scalar_select %p1475, %s22, 1
        %p1477 = scmp.lt.s32.totalorder %s23, 0
        %s1478 = scalar_select %p1477, %s23, 0
        %s1479 = sadd.s32 %s1478, %s1476
        %s1480 = smul.addr %s1479, 4
        %s1481 = scalar_lea.vmem %s3, %s1480
      $region60: #{_lambda_.34} parent=55 // pred_fallthru
        _
    $region56: #{_lambda_.34} parent=5 // pred_fallthru
      _
  $region6: #{_lambda_.34} parent=0 // loop_footer
    %s13 = sadd.s32 1, %s9
  $region7: #{_lambda_.34} parent=0 // loop_footer_branch
    %8 = sbr.rel target = $region3
  $region8: #{_lambda_.34} parent=0 // loop_exit
    _

// kernel: _lambda_.28
$region0: #{_lambda_.28}
  #allocation0 [shape = 'u32[]', space=smem, size = 0x4, offset = 0x4, fixed_abs, tag = 'smem constant byte address 0x4 - core index']
  #allocation1 [shape = 'u32[144,128]{1,0:T(1,128)}', space=vmem, size = 0x12000, scoped, tag = 'internal scratch']
  #allocation2 [shape = 'f32[16,32]{1,0:T(8,128)}', space=vmem, size = 0x2000, scoped, tag = 'scratch operand']
  %s0 = inlined_call_operand.vmem [shape: bf16[16,32], index: 0, kind: input, shape index: {}]
  %s1 = inlined_call_operand.vmem [shape: bf16[32,64], index: 1, kind: input, shape index: {}]
  %s2 = inlined_call_operand.vmem [shape: f32[1,64], index: 2, kind: input, shape index: {}]
  %s3 = inlined_call_operand.vmem [shape: bf16[64,32], index: 3, kind: input, shape index: {}]
  %s4 = inlined_call_operand.vmem [shape: f32[1,32], index: 4, kind: input, shape index: {}]
  %s5 = inlined_call_operand.vmem [shape: f32[1,32], index: 5, kind: input, shape index: {}]
  %s6 = inlined_call_operand.vmem [shape: f32[1,32], index: 6, kind: input, shape index: {}]
  %s7 = inlined_call_operand.vmem [shape: bf16[16,32], index: 7, kind: output, shape index: {}]
  %s8 = sld [smem:[#allocation0]]
  $region46: #{_lambda_.28} parent=0
    _
  %s10 = ssub.s32 1, %s8
  %s11 = scalar_select 0, %s10, %s8
  // Predicated region
  $region2: #{_lambda_.28} parent=0 // pred_check
    _
  $region3: #{_lambda_.28} parent=0 // pred_check_branch
    %13 = sbr.rel (0) target = $region5
  $region4: #{_lambda_.28} parent=0 // pred_region
    _
  $region5: #{_lambda_.28} parent=0 // pred_fallthru
    _
  // Predicated region
  $region6: #{_lambda_.28} parent=0 // pred_check
    _
  $region7: #{_lambda_.28} parent=0 // pred_check_branch
    %15 = sbr.rel (0) target = $region9
  $region8: #{_lambda_.28} parent=0 // pred_region
    _
  $region9: #{_lambda_.28} parent=0 // pred_fallthru
    _
  // Predicated region
  $region10: #{_lambda_.28} parent=0 // pred_check
    _
  $region11: #{_lambda_.28} parent=0 // pred_check_branch
    %17 = sbr.rel (0) target = $region13
  $region12: #{_lambda_.28} parent=0 // pred_region
    _
  $region13: #{_lambda_.28} parent=0 // pred_fallthru
    _
  // Predicated region
  $region14: #{_lambda_.28} parent=0 // pred_check
    _
  $region15: #{_lambda_.28} parent=0 // pred_check_branch
    %19 = sbr.rel (0) target = $region17
  $region16: #{_lambda_.28} parent=0 // pred_region
    _
  $region17: #{_lambda_.28} parent=0 // pred_fallthru
    _
  // Predicated region
  $region18: #{_lambda_.28} parent=0 // pred_check
    _
  $region19: #{_lambda_.28} parent=0 // pred_check_branch
    %21 = sbr.rel (0) target = $region21
  $region20: #{_lambda_.28} parent=0 // pred_region
    _
  $region21: #{_lambda_.28} parent=0 // pred_fallthru
    _
  // Predicated region
  $region22: #{_lambda_.28} parent=0 // pred_check
    _
  $region23: #{_lambda_.28} parent=0 // pred_check_branch
    %23 = sbr.rel (0) target = $region25
  $region24: #{_lambda_.28} parent=0 // pred_region
    _
  $region25: #{_lambda_.28} parent=0 // pred_fallthru
    _
  // Predicated region
  $region26: #{_lambda_.28} parent=0 // pred_check
    _
  $region27: #{_lambda_.28} parent=0 // pred_check_branch
    %25 = sbr.rel (0) target = $region29
  $region28: #{_lambda_.28} parent=0 // pred_region
    _
  $region29: #{_lambda_.28} parent=0 // pred_fallthru
    _
  %p27 = scmp.eq.s32.totalorder 0, 0
  // Predicated region
  $region30: #{_lambda_.28} parent=0 // pred_check
    %p28 = pneg %p27
  $region31: #{_lambda_.28} parent=0 // pred_check_branch
    %30 = sbr.rel (%p28) target = $region33
  $region32: #{_lambda_.28} parent=0 // pred_region
    %vm31 = vcmask 261120
    %32 = vst.msk [vmem:[#allocation2] sm:$0xff] %vm31, 0.0
    %33 = vst.msk [vmem:[#allocation2 + $0x8] sm:$0xff] %vm31, 0.0
  $region33: #{_lambda_.28} parent=0 // pred_fallthru
    _
  %v34 = vld [vmem:[%s0] sm:$0xf]
  %v35 = vld [vmem:[%s0 + $0x4] sm:$0xf]
  %v36 = vld [vmem:[%s1] sm:$0xf]
  %v37 = vld [vmem:[%s1 + $0x4] sm:$0xf]
  %v38 = vld [vmem:[%s1 + $0x8] sm:$0xf]
  %v39 = vld [vmem:[%s1 + $0xc] sm:$0xf]
  %v40 = vld [vmem:[%s2] sm:$0x1]
  %v42 = vlaneseq
  %v43 = vshrl.u32 %v42, 7
  %v44 = vsub.s32 0, %v43
  %v45 = vrot.slane %v40, %v44
  %v49 = vunpack.c.l.b16 %v34
  %v50 = vunpack.c.l.b16 %v35
  %v51 = vpack.c.b16 %v50, %v49
  %v56 = vunpack.c.l.b16 %v36
  %v57 = vunpack.c.l.b16 %v37
  %v58 = vunpack.c.l.b16 %v38
  %v59 = vunpack.c.l.b16 %v39
  %v60 = vpack.c.b16 %v57, %v56
  %v61 = vpack.c.b16 %v59, %v58
  %vm64 = vcmask 261120
  %v66 = vsel %vm64, %v51, 0
  %68 = vmatprep.subr.bf16.mxu0 0
  %69 = vmatpush1.bf16.msra.mxu0 %v60
  %70 = vmatprep.subr.bf16.mxu0 0
  %71 = vmatpush1.bf16.msra.mxu0 %v61
  %72 = vmatprep.subr.bf16.mxu0 0
  %73 = vmatpush1.bf16.msra.mxu0 0
  %74 = vmatprep.subr.bf16.mxu0 0
  %75 = vmatpush1.bf16.msra.mxu0 0
  %76 = vmatprep.subr.bf16.mxu0 0
  %77 = vmatpush1.bf16.msra.mxu0 0
  %78 = vmatprep.subr.bf16.mxu0 0
  %79 = vmatpush1.bf16.msra.mxu0 0
  %80 = vmatprep.subr.bf16.mxu0 0
  %81 = vmatpush1.bf16.msra.mxu0 0
  %82 = vmatprep.subr.bf16.mxu0 0
  %83 = vmatpush1.bf16.msra.mxu0 0
  %84 = vmatprep.subr.bf16.mxu0 0
  %85 = vmatpush1.bf16.msra.mxu0 0
  %86 = vmatprep.subr.bf16.mxu0 0
  %87 = vmatpush1.bf16.msra.mxu0 0
  %88 = vmatprep.subr.bf16.mxu0 0
  %89 = vmatpush1.bf16.msra.mxu0 0
  %90 = vmatprep.subr.bf16.mxu0 0
  %91 = vmatpush1.bf16.msra.mxu0 0
  %92 = vmatprep.subr.bf16.mxu0 0
  %93 = vmatpush1.bf16.msra.mxu0 0
  %94 = vmatprep.subr.bf16.mxu0 0
  %95 = vmatpush1.bf16.msra.mxu0 0
  %96 = vmatprep.subr.bf16.mxu0 0
  %97 = vmatpush1.bf16.msra.mxu0 0
  %98 = vmatprep.subr.bf16.mxu0 0
  %99 = vmatpush1.bf16.msra.mxu0 0
  %100 = vmatprep.mubr.bf16.mxu0 0
  %101 = vmatmul.mubr.bf16.gmra.mrb[0].mxu0 %v66
  %v102 = vpop.f32.mrb[0].mxu0
  %v103 = vadd.f32 %v45, %v102
  %v104 = vpop.f32.mrb[0].mxu0
  %v105 = vpop.f32.mrb[0].mxu0
  %v106 = vadd.f32 %v45, %v105
  %v107 = vpop.f32.mrb[0].mxu0
  %108 = vdwg.mxu0
  %v109 = vmax.f32 %v103, 0.0
  %v110 = vmax.f32 %v106, 0.0
  %v111 = vld [vmem:[#allocation2] sm:$0xff]
  %v112 = vld [vmem:[#allocation2 + $0x8] sm:$0xff]
  %v113 = vpack.c.bf16 %v110, %v109
  %v114 = vld [vmem:[%s3] sm:$0xf]
  %v115 = vld [vmem:[%s3 + $0x4] sm:$0xf]
  %v116 = vld [vmem:[%s3 + $0x8] sm:$0xf]
  %v117 = vld [vmem:[%s3 + $0xc] sm:$0xf]
  %v118 = vld [vmem:[%s3 + $0x10] sm:$0xf]
  %v119 = vld [vmem:[%s3 + $0x14] sm:$0xf]
  %v120 = vld [vmem:[%s3 + $0x18] sm:$0xf]
  %v121 = vld [vmem:[%s3 + $0x1c] sm:$0xf]
  %v130 = vunpack.c.l.b16 %v114
  %v131 = vunpack.c.l.b16 %v115
  %v132 = vunpack.c.l.b16 %v116
  %v133 = vunpack.c.l.b16 %v117
  %v134 = vunpack.c.l.b16 %v118
  %v135 = vunpack.c.l.b16 %v119
  %v136 = vunpack.c.l.b16 %v120
  %v137 = vunpack.c.l.b16 %v121
  %v138 = vpack.c.b16 %v131, %v130
  %v139 = vpack.c.b16 %v133, %v132
  %v140 = vpack.c.b16 %v135, %v134
  %v141 = vpack.c.b16 %v137, %v136
  %vm146 = vcmask 523264
  %v148 = vsel %vm146, %v113, 0
  %150 = vmatprep.subr.bf16.mxu0 0
  %151 = vmatpush1.bf16.msra.mxu0 %v138
  %152 = vmatprep.subr.bf16.mxu0 0
  %153 = vmatpush1.bf16.msra.mxu0 %v139
  %154 = vmatprep.subr.bf16.mxu0 0
  %155 = vmatpush1.bf16.msra.mxu0 %v140
  %156 = vmatprep.subr.bf16.mxu0 0
  %157 = vmatpush1.bf16.msra.mxu0 %v141
  %158 = vmatprep.subr.bf16.mxu0 0
  %159 = vmatpush1.bf16.msra.mxu0 0
  %160 = vmatprep.subr.bf16.mxu0 0
  %161 = vmatpush1.bf16.msra.mxu0 0
  %162 = vmatprep.subr.bf16.mxu0 0
  %163 = vmatpush1.bf16.msra.mxu0 0
  %164 = vmatprep.subr.bf16.mxu0 0
  %165 = vmatpush1.bf16.msra.mxu0 0
  %166 = vmatprep.subr.bf16.mxu0 0
  %167 = vmatpush1.bf16.msra.mxu0 0
  %168 = vmatprep.subr.bf16.mxu0 0
  %169 = vmatpush1.bf16.msra.mxu0 0
  %170 = vmatprep.subr.bf16.mxu0 0
  %171 = vmatpush1.bf16.msra.mxu0 0
  %172 = vmatprep.subr.bf16.mxu0 0
  %173 = vmatpush1.bf16.msra.mxu0 0
  %174 = vmatprep.subr.bf16.mxu0 0
  %175 = vmatpush1.bf16.msra.mxu0 0
  %176 = vmatprep.subr.bf16.mxu0 0
  %177 = vmatpush1.bf16.msra.mxu0 0
  %178 = vmatprep.subr.bf16.mxu0 0
  %179 = vmatpush1.bf16.msra.mxu0 0
  %180 = vmatprep.subr.bf16.mxu0 0
  %181 = vmatpush1.bf16.msra.mxu0 0
  %182 = vmatprep.mubr.bf16.mxu0 0
  %183 = vmatmul.mubr.bf16.gmra.mrb[0].mxu0 %v148
  %v184 = vpop.f32.mrb[0].mxu0
  %v185 = vadd.f32 0.0, %v184
  %v186 = vpop.f32.mrb[0].mxu0
  %v187 = vpop.f32.mrb[0].mxu0
  %v188 = vadd.f32 0.0, %v187
  %v189 = vpop.f32.mrb[0].mxu0
  %190 = vdwg.mxu0
  %v191 = vadd.f32 %v111, %v185
  %v192 = vadd.f32 %v112, %v188
  %193 = vst.msk [vmem:[#allocation2] sm:$0xff] %vm64, %v191
  %194 = vst.msk [vmem:[#allocation2 + $0x8] sm:$0xff] %vm64, %v192
  // Predicated region
  $region34: #{_lambda_.28} parent=0 // pred_check
    %p195 = pneg %p27
  $region35: #{_lambda_.28} parent=0 // pred_check_branch
    %197 = sbr.rel (%p195) target = $region37
  $region36: #{_lambda_.28} parent=0 // pred_region
    %v198 = vld [vmem:[#allocation2] sm:$0xff]
    %v199 = vld [vmem:[#allocation2 + $0x8] sm:$0xff]
    %v200 = vld [vmem:[%s4] sm:$0x1]
    %v202 = vlaneseq
    %v203 = vshrl.u32 %v202, 7
    %v204 = vsub.s32 0, %v203
    %v205 = vrot.slane %v200, %v204
    %v207 = vadd.f32 %v198, %v205
    %v208 = vadd.f32 %v199, %v205
    %v209 = vunpack.c.l.bf16 %v34
    %v210 = vunpack.c.l.bf16 %v35
    %v211 = vadd.f32 %v207, %v209
    %v212 = vadd.f32 %v208, %v210
    %v213 = vsel %vm64, %v211, 0.0
    %214 = vadd.xlane.f32.xlu0 %v213
    %v215 = vpop.xlane.xlu0 %214
    %v216 = vsel %vm64, %v212, 0.0
    %217 = vadd.xlane.f32.xlu0 %v216
    %v218 = vpop.xlane.xlu0 %217
    %v219 = vrcp.pop 32.0
    %v220 = vmul.f32 %v215, %v219
    %v221 = vmul.f32 %v218, %v219
    %v222 = vsub.f32 %v211, %v220
    %v223 = vsub.f32 %v212, %v221
    %v224 = vmul.f32 %v222, %v222
    %v225 = vmul.f32 %v223, %v223
    %v226 = vsel %vm64, %v224, 0.0
    %227 = vadd.xlane.f32.xlu0 %v226
    %v228 = vpop.xlane.xlu0 %227
    %v229 = vsel %vm64, %v225, 0.0
    %230 = vadd.xlane.f32.xlu0 %v229
    %v231 = vpop.xlane.xlu0 %230
    %v232 = vmul.f32 %v228, %v219
    %v233 = vmul.f32 %v231, %v219
    %v234 = vadd.f32 %v232, 1e-05
    %v235 = vadd.f32 %v233, 1e-05
    %v236 = vrsqrt.pop %v234
    %v237 = vrsqrt.pop %v235
    %v238 = vmul.f32 %v222, %v236
    %v239 = vmul.f32 %v223, %v237
    %v240 = vld [vmem:[%s5] sm:$0x1]
    %v242 = vlaneseq
    %v243 = vshrl.u32 %v242, 7
    %v244 = vsub.s32 0, %v243
    %v245 = vrot.slane %v240, %v244
    %v247 = vmul.f32 %v238, %v245
    %v248 = vmul.f32 %v239, %v245
    %v249 = vld [vmem:[%s6] sm:$0x1]
    %v251 = vlaneseq
    %v252 = vshrl.u32 %v251, 7
    %v253 = vsub.s32 0, %v252
    %v254 = vrot.slane %v249, %v253
    %v256 = vadd.f32 %v247, %v254
    %v257 = vadd.f32 %v248, %v254
    %v258 = vpack.c.bf16 %v257, %v256
    %v260 = vunpack.c.l.b16 %v258
    %v261 = vunpack.c.h.b16 %v258
    %v262 = vpack.c.b16 %v260, %v260
    %v263 = vpack.c.b16 %v261, %v261
    %vm266 = vcmask 257024
    %267 = vst.msk [vmem:[%s7] sm:$0xf] %vm266, %v262
    %268 = vst.msk [vmem:[%s7 + $0x4] sm:$0xf] %vm266, %v263
  $region37: #{_lambda_.28} parent=0 // pred_fallthru
    _
  // Predicated region
  $region38: #{_lambda_.28} parent=0 // pred_check
    _
  $region39: #{_lambda_.28} parent=0 // pred_check_branch
    %270 = sbr.rel (0) target = $region41
  $region40: #{_lambda_.28} parent=0 // pred_region
    _
  $region41: #{_lambda_.28} parent=0 // pred_fallthru
    _
  // Predicated region
  $region42: #{_lambda_.28} parent=0 // pred_check
    _
  $region43: #{_lambda_.28} parent=0 // pred_check_branch
    %272 = sbr.rel (0) target = $region45
  $region44: #{_lambda_.28} parent=0 // pred_region
    _
  $region45: #{_lambda_.28} parent=0 // pred_fallthru
    _

// kernel: _lambda_.26
$region0: #{_lambda_.26}
  #allocation0 [shape = 'u32[]', space=smem, size = 0x4, offset = 0x4, fixed_abs, tag = 'smem constant byte address 0x4 - core index']
  #allocation1 [shape = 'u32[144,128]{1,0:T(1,128)}', space=vmem, size = 0x12000, scoped, tag = 'internal scratch']
  #allocation2 [shape = 'f32[4,8,1]{2,1,0:T(8,128)}', space=vmem, size = 0x4000, scoped, tag = 'scratch operand']
  #allocation3 [shape = 'f32[4,8,1]{2,1,0:T(8,128)}', space=vmem, size = 0x4000, scoped, tag = 'scratch operand']
  #allocation4 [shape = 'f32[8,32]{1,0:T(8,128)}', space=vmem, size = 0x1000, scoped, tag = 'scratch operand']
  %s0 = inlined_call_operand.vmem [shape: bf16[2,8,32], index: 0, kind: input, shape index: {}]
  %s1 = inlined_call_operand.vmem [shape: bf16[2,8,32], index: 1, kind: input, shape index: {}]
  %s2 = inlined_call_operand.vmem [shape: bf16[2,8,32], index: 2, kind: input, shape index: {}]
  %s3 = inlined_call_operand.vmem [shape: bf16[2,8,32], index: 3, kind: output, shape index: {}]
  %s4 = sld [smem:[#allocation0]]
  $region53: #{_lambda_.26} parent=0
    _
  %s6 = ssub.s32 1, %s4
  %s7 = scalar_select 0, %s6, %s4
  loop: start=0, step=1, limit=4
  $region2: #{_lambda_.26} parent=0 // loop_pre_header
    _
  $region3: #{_lambda_.26} parent=0 // loop_header
    %s9 = sphi 0, %s13
    %p10 = scmp.ge.s32.totalorder %s9, 4
    %s16 = sphi 0, %s35
    %s17 = sphi 0, %s31
    %s18 = sphi 0, %s27
    %s19 = sphi 0, %s16
    %s20 = sphi 0, %s17
    %s21 = sphi 0, %s18
    %s22 = sphi 0, %s19
    %s23 = sphi 0, %s20
    %s24 = sphi 0, %s21
    %s40 = sphi 0, %s42
    %s43 = sphi 0, %s40
    %s44 = sphi 0, %s43
    %s60 = sphi 0, %s44
    %s68 = sphi 0, %s70
    %s71 = sphi 0, %s68
    %s72 = sphi 0, %s71
    %s88 = sphi 0, %s72
    %s96 = sphi 0, %s98
    %s99 = sphi 0, %s96
    %s100 = sphi 0, %s99
    %s116 = sphi 0, %s100
    %s124 = sphi 0, %s126
    %s127 = sphi 0, %s124
    %s128 = sphi 0, %s127
    %s144 = sphi 0, %s128
  $region4: #{_lambda_.26} parent=0 // loop_header_branch
    %12 = sbr.rel (%p10) target = $region8
  $region5: #{_lambda_.26} parent=0 // loop_body
    %s14 = ssub.s32 %s9, 1
    %s15 = ssub.s32 %s9, 2
    %s25 = sadd.s32 1, %s18
    %p26 = scmp.ge.s32.totalorder %s25, 1
    %s27 = scalar_select %p26, 0, %s25
    %s28 = sadd.s32 1, %s17
    %s29 = scalar_select %p26, %s28, %s17
    %p30 = scmp.ge.s32.totalorder %s29, 1
    %s31 = scalar_select %p30, 0, %s29
    %s32 = sadd.s32 1, %s16
    %s33 = scalar_select %p30, %s32, %s16
    %p34 = scmp.ge.s32.totalorder %s33, 2
    %s35 = scalar_select %p34, 0, %s33
    %s36 = ssub.s32 %s16, %s35
    %s37 = ssub.s32 %s17, %s31
    %s38 = sor.u32 %s36, %s37
    %p39 = scmp.eq.s32.totalorder %s38, 0
    %s41 = sadd.s32 %s40, 1
    %s42 = scalar_select %p39, %s40, %s41
    %p45 = pneg %p39
    %p46 = scmp.eq.s32.totalorder %s9, 1
    %p47 = por %p45, %p46
    %p48 = scmp.ne.s32.totalorder %s40, %s43
    %p49 = scmp.eq.s32.totalorder %s9, 0
    %p50 = por %p48, %p49
    %p51 = scmp.ne.s32.totalorder %s40, %s43
    %p52 = scmp.eq.s32.totalorder %s14, 1
    %p53 = por %p51, %p52
    %p54 = scmp.ne.s32.totalorder %s43, %s44
    %p55 = scmp.eq.s32.totalorder %s14, 0
    %p56 = por %p54, %p55
    %p57 = scmp.ne.s32.totalorder %s43, %s44
    %p58 = scmp.eq.s32.totalorder %s15, 1
    %p59 = por %p57, %p58
    %p61 = scmp.ne.s32.totalorder %s44, %s60
    %p62 = scmp.eq.s32.totalorder %s15, 0
    %p63 = por %p61, %p62
    %s64 = ssub.s32 %s16, %s35
    %s65 = ssub.s32 %s18, %s27
    %s66 = sor.u32 %s64, %s65
    %p67 = scmp.eq.s32.totalorder %s66, 0
    %s69 = sadd.s32 %s68, 1
    %s70 = scalar_select %p67, %s68, %s69
    %p73 = pneg %p67
    %p74 = scmp.eq.s32.totalorder %s9, 1
    %p75 = por %p73, %p74
    %p76 = scmp.ne.s32.totalorder %s68, %s71
    %p77 = scmp.eq.s32.totalorder %s9, 0
    %p78 = por %p76, %p77
    %p79 = scmp.ne.s32.totalorder %s68, %s71
    %p80 = scmp.eq.s32.totalorder %s14, 1
    %p81 = por %p79, %p80
    %p82 = scmp.ne.s32.totalorder %s71, %s72
    %p83 = scmp.eq.s32.totalorder %s14, 0
    %p84 = por %p82, %p83
    %p85 = scmp.ne.s32.totalorder %s71, %s72
    %p86 = scmp.eq.s32.totalorder %s15, 1
    %p87 = por %p85, %p86
    %p89 = scmp.ne.s32.totalorder %s72, %s88
    %p90 = scmp.eq.s32.totalorder %s15, 0
    %p91 = por %p89, %p90
    %s92 = ssub.s32 %s16, %s35
    %s93 = ssub.s32 %s18, %s27
    %s94 = sor.u32 %s92, %s93
    %p95 = scmp.eq.s32.totalorder %s94, 0
    %s97 = sadd.s32 %s96, 1
    %s98 = scalar_select %p95, %s96, %s97
    %p101 = pneg %p95
    %p102 = scmp.eq.s32.totalorder %s9, 1
    %p103 = por %p101, %p102
    %p104 = scmp.ne.s32.totalorder %s96, %s99
    %p105 = scmp.eq.s32.totalorder %s9, 0
    %p106 = por %p104, %p105
    %p107 = scmp.ne.s32.totalorder %s96, %s99
    %p108 = scmp.eq.s32.totalorder %s14, 1
    %p109 = por %p107, %p108
    %p110 = scmp.ne.s32.totalorder %s99, %s100
    %p111 = scmp.eq.s32.totalorder %s14, 0
    %p112 = por %p110, %p111
    %p113 = scmp.ne.s32.totalorder %s99, %s100
    %p114 = scmp.eq.s32.totalorder %s15, 1
    %p115 = por %p113, %p114
    %p117 = scmp.ne.s32.totalorder %s100, %s116
    %p118 = scmp.eq.s32.totalorder %s15, 0
    %p119 = por %p117, %p118
    %s120 = ssub.s32 %s16, %s35
    %s121 = ssub.s32 %s17, %s31
    %s122 = sor.u32 %s120, %s121
    %p123 = scmp.eq.s32.totalorder %s122, 0
    %s125 = sadd.s32 %s124, 1
    %s126 = scalar_select %p123, %s124, %s125
    %p129 = pneg %p123
    %p130 = scmp.eq.s32.totalorder %s9, 1
    %p131 = por %p129, %p130
    %p132 = scmp.ne.s32.totalorder %s124, %s127
    %p133 = scmp.eq.s32.totalorder %s9, 0
    %p134 = por %p132, %p133
    %p135 = scmp.ne.s32.totalorder %s124, %s127
    %p136 = scmp.eq.s32.totalorder %s14, 1
    %p137 = por %p135, %p136
    %p138 = scmp.ne.s32.totalorder %s127, %s128
    %p139 = scmp.eq.s32.totalorder %s14, 0
    %p140 = por %p138, %p139
    %p141 = scmp.ne.s32.totalorder %s127, %s128
    %p142 = scmp.eq.s32.totalorder %s15, 1
    %p143 = por %p141, %p142
    %p145 = scmp.ne.s32.totalorder %s128, %s144
    %p146 = scmp.eq.s32.totalorder %s15, 0
    %p147 = por %p145, %p146
    %p148 = scmp.le.s32.totalorder 1, %s9
    %p149 = scmp.lt.s32.totalorder %s9, 3
    %p150 = pnand %p148, %p149
    %p151 = pneg %p150
    // Predicated region
    $region9: #{_lambda_.26} parent=5 // pred_check
      _
    $region10: #{_lambda_.26} parent=5 // pred_check_branch
      %153 = sbr.rel (%p150) target = $region12
    $region11: #{_lambda_.26} parent=5 // pred_region
      %s154 = ssub.s32 %s9, 1
    $region12: #{_lambda_.26} parent=5 // pred_fallthru
      _
    %p155 = scmp.lt.s32.totalorder %s9, 2
    // Predicated region
    $region13: #{_lambda_.26} parent=5 // pred_check
      %p156 = pneg %p155
    $region14: #{_lambda_.26} parent=5 // pred_check_branch
      %158 = sbr.rel (%p156) target = $region16
    $region15: #{_lambda_.26} parent=5 // pred_region
      // Predicated region
      $region17: #{_lambda_.26} parent=15 // pred_check
        %p159 = pneg %p50
      $region18: #{_lambda_.26} parent=15 // pred_check_branch
        %161 = sbr.rel (%p159) target = $region20
      $region19: #{_lambda_.26} parent=15 // pred_region
        %p162 = scmp.lt.s32.totalorder %s16, 1
        %s163 = scalar_select %p162, %s16, 1
        %p164 = scmp.lt.s32.totalorder %s17, 0
        %s165 = scalar_select %p164, %s17, 0
        %s166 = sadd.s32 %s165, %s163
        %s167 = smul.addr %s166, 4
        %s168 = scalar_lea.vmem %s0, %s167
      $region20: #{_lambda_.26} parent=15 // pred_fallthru
        _
      // Predicated region
      $region21: #{_lambda_.26} parent=15 // pred_check
        %p169 = pneg %p78
      $region22: #{_lambda_.26} parent=15 // pred_check_branch
        %171 = sbr.rel (%p169) target = $region24
      $region23: #{_lambda_.26} parent=15 // pred_region
        %p172 = scmp.lt.s32.totalorder %s16, 1
        %s173 = scalar_select %p172, %s16, 1
        %p174 = scmp.lt.s32.totalorder %s18, 0
        %s175 = scalar_select %p174, %s18, 0
        %s176 = sadd.s32 %s175, %s173
        %s177 = smul.addr %s176, 4
        %s178 = scalar_lea.vmem %s1, %s177
      $region24: #{_lambda_.26} parent=15 // pred_fallthru
        _
      // Predicated region
      $region25: #{_lambda_.26} parent=15 // pred_check
        %p179 = pneg %p106
      $region26: #{_lambda_.26} parent=15 // pred_check_branch
        %181 = sbr.rel (%p179) target = $region28
      $region27: #{_lambda_.26} parent=15 // pred_region
        %p182 = scmp.lt.s32.totalorder %s16, 1
        %s183 = scalar_select %p182, %s16, 1
        %p184 = scmp.lt.s32.totalorder %s18, 0
        %s185 = scalar_select %p184, %s18, 0
        %s186 = sadd.s32 %s185, %s183
        %s187 = smul.addr %s186, 4
        %s188 = scalar_lea.vmem %s2, %s187
      $region28: #{_lambda_.26} parent=15 // pred_fallthru
        _
    $region16: #{_lambda_.26} parent=5 // pred_fallthru
      _
    %p189 = scmp.le.s32.totalorder 1, %s9
    %p190 = scmp.lt.s32.totalorder %s9, 3
    %p191 = pnand %p189, %p190
    %p192 = pneg %p191
    // Predicated region
    $region29: #{_lambda_.26} parent=5 // pred_check
      _
    $region30: #{_lambda_.26} parent=5 // pred_check_branch
      %194 = sbr.rel (%p191) target = $region32
    $region31: #{_lambda_.26} parent=5 // pred_region
      %s195 = ssub.s32 %s9, 1
      %p196 = scmp.lt.s32.totalorder %s19, 1
      %s197 = scalar_select %p196, %s19, 1
      %p198 = scmp.lt.s32.totalorder %s20, 0
      %s199 = scalar_select %p198, %s20, 0
      %s200 = sadd.s32 %s199, %s197
      %s201 = smul.addr %s200, 4
      %s202 = scalar_lea.vmem %s0, %s201
      %p203 = pneg %p56
      %p204 = pneg %p53
      %p205 = scmp.lt.s32.totalorder %s19, 1
      %s206 = scalar_select %p205, %s19, 1
      %p207 = scmp.lt.s32.totalorder %s21, 0
      %s208 = scalar_select %p207, %s21, 0
      %s209 = sadd.s32 %s208, %s206
      %s210 = smul.addr %s209, 4
      %s211 = scalar_lea.vmem %s1, %s210
      %p212 = pneg %p84
      %p213 = pneg %p81
      %p214 = scmp.lt.s32.totalorder %s19, 1
      %s215 = scalar_select %p214, %s19, 1
      %p216 = scmp.lt.s32.totalorder %s21, 0
      %s217 = scalar_select %p216, %s21, 0
      %s218 = sadd.s32 %s217, %s215
      %s219 = smul.addr %s218, 4
      %s220 = scalar_lea.vmem %s2, %s219
      %p221 = pneg %p112
      %p222 = pneg %p109
      %p223 = pneg %p140
      %p224 = pneg %p137
      %p225 = scmp.lt.s32.totalorder %s19, 1
      %s226 = scalar_select %p225, %s19, 1
      %p227 = scmp.lt.s32.totalorder %s20, 0
      %s228 = scalar_select %p227, %s20, 0
      %s229 = sadd.s32 %s228, %s226
      %s230 = smul.addr %s229, 4
      %s231 = scalar_lea.vmem %s3, %s230
      %p232 = scmp.lt.s32.totalorder %s19, 1
      %s233 = scalar_select %p232, %s19, 1
      %p234 = scmp.lt.s32.totalorder %s20, 0
      %s235 = scalar_select %p234, %s20, 0
      %s236 = sadd.s32 %s235, %s233
      %s237 = smul.addr %s236, 4
      %s238 = scalar_lea.vmem %s0, %s237
      %p239 = scmp.lt.s32.totalorder %s19, 1
      %s240 = scalar_select %p239, %s19, 1
      %p241 = scmp.lt.s32.totalorder %s21, 0
      %s242 = scalar_select %p241, %s21, 0
      %s243 = sadd.s32 %s242, %s240
      %s244 = smul.addr %s243, 4
      %s245 = scalar_lea.vmem %s1, %s244
      %p246 = scmp.lt.s32.totalorder %s19, 1
      %s247 = scalar_select %p246, %s19, 1
      %p248 = scmp.lt.s32.totalorder %s21, 0
      %s249 = scalar_select %p248, %s21, 0
      %s250 = sadd.s32 %s249, %s247
      %s251 = smul.addr %s250, 4
      %s252 = scalar_lea.vmem %s2, %s251
      %p253 = scmp.lt.s32.totalorder %s19, 1
      %s254 = scalar_select %p253, %s19, 1
      %p255 = scmp.lt.s32.totalorder %s20, 0
      %s256 = scalar_select %p255, %s20, 0
      %s257 = sadd.s32 %s256, %s254
      %s258 = smul.addr %s257, 4
      %s259 = scalar_lea.vmem %s3, %s258
      %p261 = scmp.eq.s32.totalorder %s21, 0
      // Predicated region
      $region33: #{_lambda_.26} parent=31 // pred_check
        %p262 = pneg %p261
      $region34: #{_lambda_.26} parent=31 // pred_check_branch
        %264 = sbr.rel (%p262) target = $region36
      $region35: #{_lambda_.26} parent=31 // pred_region
        %vm265 = vcmask 7168
        %266 = vst.msk [vmem:[#allocation2] sm:$0xff] %vm265, -1e+30
        %267 = vst.msk [vmem:[#allocation2 + $0x8] sm:$0xff] %vm265, -1e+30
        %268 = vst.msk [vmem:[#allocation2 + $0x10] sm:$0xff] %vm265, -1e+30
        %269 = vst.msk [vmem:[#allocation2 + $0x18] sm:$0xff] %vm265, -1e+30
        %270 = vst.msk [vmem:[#allocation3] sm:$0xff] %vm265, 0.0
        %271 = vst.msk [vmem:[#allocation3 + $0x8] sm:$0xff] %vm265, 0.0
        %272 = vst.msk [vmem:[#allocation3 + $0x10] sm:$0xff] %vm265, 0.0
        %273 = vst.msk [vmem:[#allocation3 + $0x18] sm:$0xff] %vm265, 0.0
        %vm274 = vcmask 261120
        %275 = vst.msk [vmem:[#allocation4] sm:$0xff] %vm274, 0.0
      $region36: #{_lambda_.26} parent=31 // pred_fallthru
        _
      %v276 = vld [vmem:[%s238] sm:$0xf]
      %v277 = vunpack.c.l.bf16 %v276
      %v278 = vmul.f32 %v277, 0.35355338
      %v279 = vpack.c.bf16 %v278, %v278
      %v280 = vld [vmem:[%s245] sm:$0xf]
      %v281 = vld [vmem:[%s252] sm:$0xf]
      %vm282 = vcmask 64512
      %v284 = vsel %vm282, %v279, 0
      %v287 = vsel %vm282, %v280, 0
      %289 = vmatprep.subr.bf16.mxu0 0
      %290 = vmatpush1.bf16.xpose.msra.mxu0 %v287
      %291 = vmatprep.subr.bf16.mxu0 0
      %292 = vmatpush1.bf16.xpose.msra.mxu0 0
      %293 = vmatprep.subr.bf16.mxu0 0
      %294 = vmatpush1.bf16.xpose.msra.mxu0 0
      %295 = vmatprep.subr.bf16.mxu0 0
      %296 = vmatpush1.bf16.xpose.msra.mxu0 0
      %297 = vmatprep.subr.bf16.mxu0 0
      %298 = vmatpush1.bf16.xpose.msra.mxu0 0
      %299 = vmatprep.subr.bf16.mxu0 0
      %300 = vmatpush1.bf16.xpose.msra.mxu0 0
      %301 = vmatprep.subr.bf16.mxu0 0
      %302 = vmatpush1.bf16.xpose.msra.mxu0 0
      %303 = vmatprep.subr.bf16.mxu0 0
      %304 = vmatpush1.bf16.xpose.msra.mxu0 0
      %305 = vmatprep.subr.bf16.mxu0 0
      %306 = vmatpush1.bf16.xpose.msra.mxu0 0
      %307 = vmatprep.subr.bf16.mxu0 0
      %308 = vmatpush1.bf16.xpose.msra.mxu0 0
      %309 = vmatprep.subr.bf16.mxu0 0
      %310 = vmatpush1.bf16.xpose.msra.mxu0 0
      %311 = vmatprep.subr.bf16.mxu0 0
      %312 = vmatpush1.bf16.xpose.msra.mxu0 0
      %313 = vmatprep.subr.bf16.mxu0 0
      %314 = vmatpush1.bf16.xpose.msra.mxu0 0
      %315 = vmatprep.subr.bf16.mxu0 0
      %316 = vmatpush1.bf16.xpose.msra.mxu0 0
      %317 = vmatprep.subr.bf16.mxu0 0
      %318 = vmatpush1.bf16.xpose.msra.mxu0 0
      %319 = vmatprep.subr.bf16.mxu0 0
      %320 = vmatpush1.bf16.xpose.msra.mxu0 0
      %321 = vmatprep.mubr.bf16.mxu0 0
      %322 = vmatmul.mubr.bf16.gmra.mrb[0].mxu0 %v284
      %v323 = vpop.f32.mrb[0].mxu0
      %v324 = vadd.f32 0.0, %v323
      %v325 = vpop.f32.mrb[0].mxu0
      %v326 = vpop.f32.mrb[0].mxu0
      %v327 = vpop.f32.mrb[0].mxu0
      %328 = vdwg.mxu0
      %v329 = vld [vmem:[#allocation2] sm:$0xff]
      %v330 = vsel %vm282, %v324, -inf
      %331 = vmax.xlane.f32.xlu0 %v330
      %v332 = vpop.xlane.xlu0 %331
      %v333 = vmax.f32 %v329, %v332
      %v334 = vsub.f32 %v329, %v333
      %v335 = vmul.f32 %v334, 1.442695
      %v336 = vpow.pop %v335
      %338 = vset.pattern.permute.xlu0 0
      %339 = vperm.xlu0 %338, %v333
      %v340 = vpop.permute.xlu0 %339
      %v342 = vsub.f32 %v324, %v340
      %v343 = vmul.f32 %v342, 1.442695
      %v344 = vpow.pop %v343
      %v345 = vld [vmem:[#allocation3] sm:$0xff]
      %v346 = vmul.f32 %v336, %v345
      %v347 = vsel %vm282, %v344, 0.0
      %348 = vadd.xlane.f32.xlu0 %v347
      %v349 = vpop.xlane.xlu0 %348
      %v350 = vadd.f32 %v346, %v349
      %vm351 = vcmask 7168
      %352 = vst.msk [vmem:[#allocation3] sm:$0xff] %vm351, %v350
      %v353 = vld [vmem:[#allocation4] sm:$0xff]
      %355 = vset.pattern.permute.xlu0 0
      %356 = vperm.xlu0 %355, %v336
      %v357 = vpop.permute.xlu0 %356
      %v359 = vmul.f32 %v357, %v353
      %v360 = vpack.c.bf16 %v344, %v344
      %v362 = vsel %vm282, %v360, 0
      %vm364 = vcmask 1043456
      %v366 = vsel %vm364, %v281, 0
      %368 = vmatprep.subr.bf16.mxu0 0
      %369 = vmatpush1.bf16.msra.mxu0 %v366
      %370 = vmatprep.subr.bf16.mxu0 0
      %371 = vmatpush1.bf16.msra.mxu0 0
      %372 = vmatprep.subr.bf16.mxu0 0
      %373 = vmatpush1.bf16.msra.mxu0 0
      %374 = vmatprep.subr.bf16.mxu0 0
      %375 = vmatpush1.bf16.msra.mxu0 0
      %376 = vmatprep.subr.bf16.mxu0 0
      %377 = vmatpush1.bf16.msra.mxu0 0
      %378 = vmatprep.subr.bf16.mxu0 0
      %379 = vmatpush1.bf16.msra.mxu0 0
      %380 = vmatprep.subr.bf16.mxu0 0
      %381 = vmatpush1.bf16.msra.mxu0 0
      %382 = vmatprep.subr.bf16.mxu0 0
      %383 = vmatpush1.bf16.msra.mxu0 0
      %384 = vmatprep.subr.bf16.mxu0 0
      %385 = vmatpush1.bf16.msra.mxu0 0
      %386 = vmatprep.subr.bf16.mxu0 0
      %387 = vmatpush1.bf16.msra.mxu0 0
      %388 = vmatprep.subr.bf16.mxu0 0
      %389 = vmatpush1.bf16.msra.mxu0 0
      %390 = vmatprep.subr.bf16.mxu0 0
      %391 = vmatpush1.bf16.msra.mxu0 0
      %392 = vmatprep.subr.bf16.mxu0 0
      %393 = vmatpush1.bf16.msra.mxu0 0
      %394 = vmatprep.subr.bf16.mxu0 0
      %395 = vmatpush1.bf16.msra.mxu0 0
      %396 = vmatprep.subr.bf16.mxu0 0
      %397 = vmatpush1.bf16.msra.mxu0 0
      %398 = vmatprep.subr.bf16.mxu0 0
      %399 = vmatpush1.bf16.msra.mxu0 0
      %400 = vmatprep.mubr.bf16.mxu0 0
      %401 = vmatmul.mubr.bf16.gmra.mrb[0].mxu0 %v362
      %v402 = vpop.f32.mrb[0].mxu0
      %v403 = vadd.f32 0.0, %v402
      %v404 = vpop.f32.mrb[0].mxu0
      %v405 = vpop.f32.mrb[0].mxu0
      %v406 = vpop.f32.mrb[0].mxu0
      %407 = vdwg.mxu0
      %v408 = vadd.f32 %v359, %v403
      %409 = vst.msk [vmem:[#allocation4] sm:$0xff] %vm282, %v408
      %410 = vst.msk [vmem:[#allocation2] sm:$0xff] %vm351, %v333
      %412 = vrot.lane.b32.xlu0 %v279, 120
      %v413 = vpop.permute.xlu0 %412
      %v415 = vunpack.c.l.b16 %v280
      %v416 = vpack.c.b16 %v415, %v415
      %417 = vrot.lane.b32.xlu0 %v416, 120
      %v418 = vpop.permute.xlu0 %417
      %v420 = vsel %vm282, %v413, 0
      %v423 = vsel %vm282, %v418, 0
      %425 = vmatprep.subr.bf16.mxu0 0
      %426 = vmatpush1.bf16.xpose.msra.mxu0 %v423
      %427 = vmatprep.subr.bf16.mxu0 0
      %428 = vmatpush1.bf16.xpose.msra.mxu0 0
      %429 = vmatprep.subr.bf16.mxu0 0
      %430 = vmatpush1.bf16.xpose.msra.mxu0 0
      %431 = vmatprep.subr.bf16.mxu0 0
      %432 = vmatpush1.bf16.xpose.msra.mxu0 0
      %433 = vmatprep.subr.bf16.mxu0 0
      %434 = vmatpush1.bf16.xpose.msra.mxu0 0
      %435 = vmatprep.subr.bf16.mxu0 0
      %436 = vmatpush1.bf16.xpose.msra.mxu0 0
      %437 = vmatprep.subr.bf16.mxu0 0
      %438 = vmatpush1.bf16.xpose.msra.mxu0 0
      %439 = vmatprep.subr.bf16.mxu0 0
      %440 = vmatpush1.bf16.xpose.msra.mxu0 0
      %441 = vmatprep.subr.bf16.mxu0 0
      %442 = vmatpush1.bf16.xpose.msra.mxu0 0
      %443 = vmatprep.subr.bf16.mxu0 0
      %444 = vmatpush1.bf16.xpose.msra.mxu0 0
      %445 = vmatprep.subr.bf16.mxu0 0
      %446 = vmatpush1.bf16.xpose.msra.mxu0 0
      %447 = vmatprep.subr.bf16.mxu0 0
      %448 = vmatpush1.bf16.xpose.msra.mxu0 0
      %449 = vmatprep.subr.bf16.mxu0 0
      %450 = vmatpush1.bf16.xpose.msra.mxu0 0
      %451 = vmatprep.subr.bf16.mxu0 0
      %452 = vmatpush1.bf16.xpose.msra.mxu0 0
      %453 = vmatprep.subr.bf16.mxu0 0
      %454 = vmatpush1.bf16.xpose.msra.mxu0 0
      %455 = vmatprep.subr.bf16.mxu0 0
      %456 = vmatpush1.bf16.xpose.msra.mxu0 0
      %457 = vmatprep.mubr.bf16.mxu0 0
      %458 = vmatmul.mubr.bf16.gmra.mrb[0].mxu0 %v420
      %v459 = vpop.f32.mrb[0].mxu0
      %v460 = vadd.f32 0.0, %v459
      %v461 = vpop.f32.mrb[0].mxu0
      %v462 = vpop.f32.mrb[0].mxu0
      %v463 = vpop.f32.mrb[0].mxu0
      %464 = vdwg.mxu0
      %s465 = scalar_lea.vmem [#allocation2], 8
      %v466 = vld [vmem:[%s465] sm:$0xff]
      %v467 = vsel %vm282, %v460, -inf
      %468 = vmax.xlane.f32.xlu0 %v467
      %v469 = vpop.xlane.xlu0 %468
      %v470 = vmax.f32 %v466, %v469
      %v471 = vsub.f32 %v466, %v470
      %v472 = vmul.f32 %v471, 1.442695
      %v473 = vpow.pop %v472
      %475 = vset.pattern.permute.xlu0 0
      %476 = vperm.xlu0 %475, %v470
      %v477 = vpop.permute.xlu0 %476
      %v479 = vsub.f32 %v460, %v477
      %v480 = vmul.f32 %v479, 1.442695
      %v481 = vpow.pop %v480
      %s482 = scalar_lea.vmem [#allocation3], 8
      %v483 = vld [vmem:[%s482] sm:$0xff]
      %v484 = vmul.f32 %v473, %v483
      %v485 = vsel %vm282, %v481, 0.0
      %486 = vadd.xlane.f32.xlu0 %v485
      %v487 = vpop.xlane.xlu0 %486
      %v488 = vadd.f32 %v484, %v487
      %489 = vst.msk [vmem:[%s482] sm:$0xff] %vm351, %v488
      %v490 = vld [vmem:[#allocation4] sm:$0xff]
      %492 = vset.pattern.permute.xlu0 0
      %493 = vperm.xlu0 %492, %v473
      %v494 = vpop.permute.xlu0 %493
      %v496 = vmul.f32 %v494, %v490
      %v497 = vpack.c.bf16 %v481, %v481
      %v499 = vunpack.c.l.b16 %v281
      %v500 = vpack.c.b16 %v499, %v499
      %501 = vrot.lane.b32.xlu0 %v500, 120
      %v502 = vpop.permute.xlu0 %501
      %v504 = vsel %vm282, %v497, 0
      %v507 = vsel %vm364, %v502, 0
      %509 = vmatprep.subr.bf16.mxu0 0
      %510 = vmatpush1.bf16.msra.mxu0 %v507
      %511 = vmatprep.subr.bf16.mxu0 0
      %512 = vmatpush1.bf16.msra.mxu0 0
      %513 = vmatprep.subr.bf16.mxu0 0
      %514 = vmatpush1.bf16.msra.mxu0 0
      %515 = vmatprep.subr.bf16.mxu0 0
      %516 = vmatpush1.bf16.msra.mxu0 0
      %517 = vmatprep.subr.bf16.mxu0 0
      %518 = vmatpush1.bf16.msra.mxu0 0
      %519 = vmatprep.subr.bf16.mxu0 0
      %520 = vmatpush1.bf16.msra.mxu0 0
      %521 = vmatprep.subr.bf16.mxu0 0
      %522 = vmatpush1.bf16.msra.mxu0 0
      %523 = vmatprep.subr.bf16.mxu0 0
      %524 = vmatpush1.bf16.msra.mxu0 0
      %525 = vmatprep.subr.bf16.mxu0 0
      %526 = vmatpush1.bf16.msra.mxu0 0
      %527 = vmatprep.subr.bf16.mxu0 0
      %528 = vmatpush1.bf16.msra.mxu0 0
      %529 = vmatprep.subr.bf16.mxu0 0
      %530 = vmatpush1.bf16.msra.mxu0 0
      %531 = vmatprep.subr.bf16.mxu0 0
      %532 = vmatpush1.bf16.msra.mxu0 0
      %533 = vmatprep.subr.bf16.mxu0 0
      %534 = vmatpush1.bf16.msra.mxu0 0
      %535 = vmatprep.subr.bf16.mxu0 0
      %536 = vmatpush1.bf16.msra.mxu0 0
      %537 = vmatprep.subr.bf16.mxu0 0
      %538 = vmatpush1.bf16.msra.mxu0 0
      %539 = vmatprep.subr.bf16.mxu0 0
      %540 = vmatpush1.bf16.msra.mxu0 0
      %541 = vmatprep.mubr.bf16.mxu0 0
      %542 = vmatmul.mubr.bf16.gmra.mrb[0].mxu0 %v504
      %v543 = vpop.f32.mrb[0].mxu0
      %v544 = vadd.f32 0.0, %v543
      %v545 = vpop.f32.mrb[0].mxu0
      %v546 = vpop.f32.mrb[0].mxu0
      %v547 = vpop.f32.mrb[0].mxu0
      %548 = vdwg.mxu0
      %550 = vrot.lane.b32.xlu0 %v544, 8
      %v551 = vpop.permute.xlu0 %550
      %v553 = vadd.f32 %v496, %v551
      %vm554 = vcmask 130112
      %555 = vst.msk [vmem:[#allocation4] sm:$0xff] %vm554, %v553
      %556 = vst.msk [vmem:[%s465] sm:$0xff] %vm351, %v470
      %557 = vrot.lane.b32.xlu0 %v279, 112
      %v558 = vpop.permute.xlu0 %557
      %559 = vrot.lane.b32.xlu0 %v416, 112
      %v560 = vpop.permute.xlu0 %559
      %v562 = vsel %vm282, %v558, 0
      %v565 = vsel %vm282, %v560, 0
      %567 = vmatprep.subr.bf16.mxu0 0
      %568 = vmatpush1.bf16.xpose.msra.mxu0 %v565
      %569 = vmatprep.subr.bf16.mxu0 0
      %570 = vmatpush1.bf16.xpose.msra.mxu0 0
      %571 = vmatprep.subr.bf16.mxu0 0
      %572 = vmatpush1.bf16.xpose.msra.mxu0 0
      %573 = vmatprep.subr.bf16.mxu0 0
      %574 = vmatpush1.bf16.xpose.msra.mxu0 0
      %575 = vmatprep.subr.bf16.mxu0 0
      %576 = vmatpush1.bf16.xpose.msra.mxu0 0
      %577 = vmatprep.subr.bf16.mxu0 0
      %578 = vmatpush1.bf16.xpose.msra.mxu0 0
      %579 = vmatprep.subr.bf16.mxu0 0
      %580 = vmatpush1.bf16.xpose.msra.mxu0 0
      %581 = vmatprep.subr.bf16.mxu0 0
      %582 = vmatpush1.bf16.xpose.msra.mxu0 0
      %583 = vmatprep.subr.bf16.mxu0 0
      %584 = vmatpush1.bf16.xpose.msra.mxu0 0
      %585 = vmatprep.subr.bf16.mxu0 0
      %586 = vmatpush1.bf16.xpose.msra.mxu0 0
      %587 = vmatprep.subr.bf16.mxu0 0
      %588 = vmatpush1.bf16.xpose.msra.mxu0 0
      %589 = vmatprep.subr.bf16.mxu0 0
      %590 = vmatpush1.bf16.xpose.msra.mxu0 0
      %591 = vmatprep.subr.bf16.mxu0 0
      %592 = vmatpush1.bf16.xpose.msra.mxu0 0
      %593 = vmatprep.subr.bf16.mxu0 0
      %594 = vmatpush1.bf16.xpose.msra.mxu0 0
      %595 = vmatprep.subr.bf16.mxu0 0
      %596 = vmatpush1.bf16.xpose.msra.mxu0 0
      %597 = vmatprep.subr.bf16.mxu0 0
      %598 = vmatpush1.bf16.xpose.msra.mxu0 0
      %599 = vmatprep.mubr.bf16.mxu0 0
      %600 = vmatmul.mubr.bf16.gmra.mrb[0].mxu0 %v562
      %v601 = vpop.f32.mrb[0].mxu0
      %v602 = vadd.f32 0.0, %v601
      %v603 = vpop.f32.mrb[0].mxu0
      %v604 = vpop.f32.mrb[0].mxu0
      %v605 = vpop.f32.mrb[0].mxu0
      %606 = vdwg.mxu0
      %s607 = scalar_lea.vmem [#allocation2], 16
      %v608 = vld [vmem:[%s607] sm:$0xff]
      %v609 = vsel %vm282, %v602, -inf
      %610 = vmax.xlane.f32.xlu0 %v609
      %v611 = vpop.xlane.xlu0 %610
      %v612 = vmax.f32 %v608, %v611
      %v613 = vsub.f32 %v608, %v612
      %v614 = vmul.f32 %v613, 1.442695
      %v615 = vpow.pop %v614
      %617 = vset.pattern.permute.xlu0 0
      %618 = vperm.xlu0 %617, %v612
      %v619 = vpop.permute.xlu0 %618
      %v621 = vsub.f32 %v602, %v619
      %v622 = vmul.f32 %v621, 1.442695
      %v623 = vpow.pop %v622
      %s624 = scalar_lea.vmem [#allocation3], 16
      %v625 = vld [vmem:[%s624] sm:$0xff]
      %v626 = vmul.f32 %v615, %v625
      %v627 = vsel %vm282, %v623, 0.0
      %628 = vadd.xlane.f32.xlu0 %v627
      %v629 = vpop.xlane.xlu0 %628
      %v630 = vadd.f32 %v626, %v629
      %631 = vst.msk [vmem:[%s624] sm:$0xff] %vm351, %v630
      %v632 = vld [vmem:[#allocation4] sm:$0xff]
      %634 = vset.pattern.permute.xlu0 0
      %635 = vperm.xlu0 %634, %v615
      %v636 = vpop.permute.xlu0 %635
      %v638 = vmul.f32 %v636, %v632
      %v639 = vpack.c.bf16 %v623, %v623
      %640 = vrot.lane.b32.xlu0 %v500, 112
      %v641 = vpop.permute.xlu0 %640
      %v643 = vsel %vm282, %v639, 0
      %v646 = vsel %vm364, %v641, 0
      %648 = vmatprep.subr.bf16.mxu0 0
      %649 = vmatpush1.bf16.msra.mxu0 %v646
      %650 = vmatprep.subr.bf16.mxu0 0
      %651 = vmatpush1.bf16.msra.mxu0 0
      %652 = vmatprep.subr.bf16.mxu0 0
      %653 = vmatpush1.bf16.msra.mxu0 0
      %654 = vmatprep.subr.bf16.mxu0 0
      %655 = vmatpush1.bf16.msra.mxu0 0
      %656 = vmatprep.subr.bf16.mxu0 0
      %657 = vmatpush1.bf16.msra.mxu0 0
      %658 = vmatprep.subr.bf16.mxu0 0
      %659 = vmatpush1.bf16.msra.mxu0 0
      %660 = vmatprep.subr.bf16.mxu0 0
      %661 = vmatpush1.bf16.msra.mxu0 0
      %662 = vmatprep.subr.bf16.mxu0 0
      %663 = vmatpush1.bf16.msra.mxu0 0
      %664 = vmatprep.subr.bf16.mxu0 0
      %665 = vmatpush1.bf16.msra.mxu0 0
      %666 = vmatprep.subr.bf16.mxu0 0
      %667 = vmatpush1.bf16.msra.mxu0 0
      %668 = vmatprep.subr.bf16.mxu0 0
      %669 = vmatpush1.bf16.msra.mxu0 0
      %670 = vmatprep.subr.bf16.mxu0 0
      %671 = vmatpush1.bf16.msra.mxu0 0
      %672 = vmatprep.subr.bf16.mxu0 0
      %673 = vmatpush1.bf16.msra.mxu0 0
      %674 = vmatprep.subr.bf16.mxu0 0
      %675 = vmatpush1.bf16.msra.mxu0 0
      %676 = vmatprep.subr.bf16.mxu0 0
      %677 = vmatpush1.bf16.msra.mxu0 0
      %678 = vmatprep.subr.bf16.mxu0 0
      %679 = vmatpush1.bf16.msra.mxu0 0
      %680 = vmatprep.mubr.bf16.mxu0 0
      %681 = vmatmul.mubr.bf16.gmra.mrb[0].mxu0 %v643
      %v682 = vpop.f32.mrb[0].mxu0
      %v683 = vadd.f32 0.0, %v682
      %v684 = vpop.f32.mrb[0].mxu0
      %v685 = vpop.f32.mrb[0].mxu0
      %v686 = vpop.f32.mrb[0].mxu0
      %687 = vdwg.mxu0
      %689 = vrot.lane.b32.xlu0 %v683, 16
      %v690 = vpop.permute.xlu0 %689
      %v692 = vadd.f32 %v638, %v690
      %vm693 = vcmask 195712
      %694 = vst.msk [vmem:[#allocation4] sm:$0xff] %vm693, %v692
      %695 = vst.msk [vmem:[%s607] sm:$0xff] %vm351, %v612
      %696 = vrot.lane.b32.xlu0 %v279, 104
      %v697 = vpop.permute.xlu0 %696
      %698 = vrot.lane.b32.xlu0 %v416, 104
      %v699 = vpop.permute.xlu0 %698
      %v701 = vsel %vm282, %v697, 0
      %v704 = vsel %vm282, %v699, 0
      %706 = vmatprep.subr.bf16.mxu0 0
      %707 = vmatpush1.bf16.xpose.msra.mxu0 %v704
      %708 = vmatprep.subr.bf16.mxu0 0
      %709 = vmatpush1.bf16.xpose.msra.mxu0 0
      %710 = vmatprep.subr.bf16.mxu0 0
      %711 = vmatpush1.bf16.xpose.msra.mxu0 0
      %712 = vmatprep.subr.bf16.mxu0 0
      %713 = vmatpush1.bf16.xpose.msra.mxu0 0
      %714 = vmatprep.subr.bf16.mxu0 0
      %715 = vmatpush1.bf16.xpose.msra.mxu0 0
      %716 = vmatprep.subr.bf16.mxu0 0
      %717 = vmatpush1.bf16.xpose.msra.mxu0 0
      %718 = vmatprep.subr.bf16.mxu0 0
      %719 = vmatpush1.bf16.xpose.msra.mxu0 0
      %720 = vmatprep.subr.bf16.mxu0 0
      %721 = vmatpush1.bf16.xpose.msra.mxu0 0
      %722 = vmatprep.subr.bf16.mxu0 0
      %723 = vmatpush1.bf16.xpose.msra.mxu0 0
      %724 = vmatprep.subr.bf16.mxu0 0
      %725 = vmatpush1.bf16.xpose.msra.mxu0 0
      %726 = vmatprep.subr.bf16.mxu0 0
      %727 = vmatpush1.bf16.xpose.msra.mxu0 0
      %728 = vmatprep.subr.bf16.mxu0 0
      %729 = vmatpush1.bf16.xpose.msra.mxu0 0
      %730 = vmatprep.subr.bf16.mxu0 0
      %731 = vmatpush1.bf16.xpose.msra.mxu0 0
      %732 = vmatprep.subr.bf16.mxu0 0
      %733 = vmatpush1.bf16.xpose.msra.mxu0 0
      %734 = vmatprep.subr.bf16.mxu0 0
      %735 = vmatpush1.bf16.xpose.msra.mxu0 0
      %736 = vmatprep.subr.bf16.mxu0 0
      %737 = vmatpush1.bf16.xpose.msra.mxu0 0
      %738 = vmatprep.mubr.bf16.mxu0 0
      %739 = vmatmul.mubr.bf16.gmra.mrb[0].mxu0 %v701
      %v740 = vpop.f32.mrb[0].mxu0
      %v741 = vadd.f32 0.0, %v740
      %v742 = vpop.f32.mrb[0].mxu0
      %v743 = vpop.f32.mrb[0].mxu0
      %v744 = vpop.f32.mrb[0].mxu0
      %745 = vdwg.mxu0
      %s746 = scalar_lea.vmem [#allocation2], 24
      %v747 = vld [vmem:[%s746] sm:$0xff]
      %v748 = vsel %vm282, %v741, -inf
      %749 = vmax.xlane.f32.xlu0 %v748
      %v750 = vpop.xlane.xlu0 %749
      %v751 = vmax.f32 %v747, %v750
      %v752 = vsub.f32 %v747, %v751
      %v753 = vmul.f32 %v752, 1.442695
      %v754 = vpow.pop %v753
      %756 = vset.pattern.permute.xlu0 0
      %757 = vperm.xlu0 %756, %v751
      %v758 = vpop.permute.xlu0 %757
      %v760 = vsub.f32 %v741, %v758
      %v761 = vmul.f32 %v760, 1.442695
      %v762 = vpow.pop %v761
      %s763 = scalar_lea.vmem [#allocation3], 24
      %v764 = vld [vmem:[%s763] sm:$0xff]
      %v765 = vmul.f32 %v754, %v764
      %v766 = vsel %vm282, %v762, 0.0
      %767 = vadd.xlane.f32.xlu0 %v766
      %v768 = vpop.xlane.xlu0 %767
      %v769 = vadd.f32 %v765, %v768
      %770 = vst.msk [vmem:[%s763] sm:$0xff] %vm351, %v769
      %v771 = vld [vmem:[#allocation4] sm:$0xff]
      %773 = vset.pattern.permute.xlu0 0
      %774 = vperm.xlu0 %773, %v754
      %v775 = vpop.permute.xlu0 %774
      %v777 = vmul.f32 %v775, %v771
      %v778 = vpack.c.bf16 %v762, %v762
      %779 = vrot.lane.b32.xlu0 %v500, 104
      %v780 = vpop.permute.xlu0 %779
      %v782 = vsel %vm282, %v778, 0
      %v785 = vsel %vm364, %v780, 0
      %787 = vmatprep.subr.bf16.mxu0 0
      %788 = vmatpush1.bf16.msra.mxu0 %v785
      %789 = vmatprep.subr.bf16.mxu0 0
      %790 = vmatpush1.bf16.msra.mxu0 0
      %791 = vmatprep.subr.bf16.mxu0 0
      %792 = vmatpush1.bf16.msra.mxu0 0
      %793 = vmatprep.subr.bf16.mxu0 0
      %794 = vmatpush1.bf16.msra.mxu0 0
      %795 = vmatprep.subr.bf16.mxu0 0
      %796 = vmatpush1.bf16.msra.mxu0 0
      %797 = vmatprep.subr.bf16.mxu0 0
      %798 = vmatpush1.bf16.msra.mxu0 0
      %799 = vmatprep.subr.bf16.mxu0 0
      %800 = vmatpush1.bf16.msra.mxu0 0
      %801 = vmatprep.subr.bf16.mxu0 0
      %802 = vmatpush1.bf16.msra.mxu0 0
      %803 = vmatprep.subr.bf16.mxu0 0
      %804 = vmatpush1.bf16.msra.mxu0 0
      %805 = vmatprep.subr.bf16.mxu0 0
      %806 = vmatpush1.bf16.msra.mxu0 0
      %807 = vmatprep.subr.bf16.mxu0 0
      %808 = vmatpush1.bf16.msra.mxu0 0
      %809 = vmatprep.subr.bf16.mxu0 0
      %810 = vmatpush1.bf16.msra.mxu0 0
      %811 = vmatprep.subr.bf16.mxu0 0
      %812 = vmatpush1.bf16.msra.mxu0 0
      %813 = vmatprep.subr.bf16.mxu0 0
      %814 = vmatpush1.bf16.msra.mxu0 0
      %815 = vmatprep.subr.bf16.mxu0 0
      %816 = vmatpush1.bf16.msra.mxu0 0
      %817 = vmatprep.subr.bf16.mxu0 0
      %818 = vmatpush1.bf16.msra.mxu0 0
      %819 = vmatprep.mubr.bf16.mxu0 0
      %820 = vmatmul.mubr.bf16.gmra.mrb[0].mxu0 %v782
      %v821 = vpop.f32.mrb[0].mxu0
      %v822 = vadd.f32 0.0, %v821
      %v823 = vpop.f32.mrb[0].mxu0
      %v824 = vpop.f32.mrb[0].mxu0
      %v825 = vpop.f32.mrb[0].mxu0
      %826 = vdwg.mxu0
      %828 = vrot.lane.b32.xlu0 %v822, 24
      %v829 = vpop.permute.xlu0 %828
      %v831 = vadd.f32 %v777, %v829
      %vm832 = vcmask 261312
      %833 = vst.msk [vmem:[#allocation4] sm:$0xff] %vm832, %v831
      %834 = vst.msk [vmem:[%s746] sm:$0xff] %vm351, %v751
      // Predicated region
      $region37: #{_lambda_.26} parent=31 // pred_check
        %p835 = pneg %p261
      $region38: #{_lambda_.26} parent=31 // pred_check_branch
        %837 = sbr.rel (%p835) target = $region40
      $region39: #{_lambda_.26} parent=31 // pred_region
        %v838 = vld [vmem:[#allocation3] sm:$0xff]
        %v839 = vrcp.pop %v838
        %841 = vset.pattern.permute.xlu0 0
        %842 = vperm.xlu0 %841, %v839
        %v843 = vpop.permute.xlu0 %842
        %v845 = vld [vmem:[%s482] sm:$0xff]
        %v846 = vrcp.pop %v845
        %848 = vset.pattern.permute.xlu0 0
        %849 = vperm.xlu0 %848, %v846
        %v850 = vpop.permute.xlu0 %849
        %v852 = vld [vmem:[%s624] sm:$0xff]
        %v853 = vrcp.pop %v852
        %855 = vset.pattern.permute.xlu0 0
        %856 = vperm.xlu0 %855, %v853
        %v857 = vpop.permute.xlu0 %856
        %v859 = vld [vmem:[%s763] sm:$0xff]
        %v860 = vrcp.pop %v859
        %862 = vset.pattern.permute.xlu0 0
        %863 = vperm.xlu0 %862, %v860
        %v864 = vpop.permute.xlu0 %863
        %v866 = vsel %vm282, %v843, %v850
        %vm867 = vcmask 130048
        %v868 = vsel %vm867, %v866, %v857
        %vm869 = vcmask 195584
        %v870 = vsel %vm869, %v868, %v864
        %v871 = vld [vmem:[#allocation4] sm:$0xff]
        %v872 = vmul.f32 %v871, %v870
        %v873 = vpack.c.bf16 %v872, %v872
        %vm874 = vcmask 257024
        %875 = vst.msk [vmem:[%s259] sm:$0xf] %vm874, %v873
      $region40: #{_lambda_.26} parent=31 // pred_fallthru
        _
      %p876 = scmp.lt.s32.totalorder %s19, 1
      %s877 = scalar_select %p876, %s19, 1
      %p878 = scmp.lt.s32.totalorder %s20, 0
      %s879 = scalar_select %p878, %s20, 0
      %s880 = sadd.s32 %s879, %s877
      %s881 = smul.addr %s880, 4
      %s882 = scalar_lea.vmem %s3, %s881
      // Predicated region
      $region41: #{_lambda_.26} parent=31 // pred_check
        %p883 = pneg %p137
      $region42: #{_lambda_.26} parent=31 // pred_check_branch
        %885 = sbr.rel (%p883) target = $region44
      $region43: #{_lambda_.26} parent=31 // pred_region
        _
      $region44: #{_lambda_.26} parent=31 // pred_fallthru
        _
    $region32: #{_lambda_.26} parent=5 // pred_fallthru
      _
    %p886 = scmp.le.s32.totalorder 2, %s9
    // Predicated region
    $region45: #{_lambda_.26} parent=5 // pred_check
      %p887 = pneg %p886
    $region46: #{_lambda_.26} parent=5 // pred_check_branch
      %889 = sbr.rel (%p887) target = $region48
    $region47: #{_lambda_.26} parent=5 // pred_region
      %s890 = ssub.s32 %s9, 2
      // Predicated region
      $region49: #{_lambda_.26} parent=47 // pred_check
        %p891 = pneg %p143
      $region50: #{_lambda_.26} parent=47 // pred_check_branch
        %893 = sbr.rel (%p891) target = $region52
      $region51: #{_lambda_.26} parent=47 // pred_region
        %p894 = scmp.lt.s32.totalorder %s22, 1
        %s895 = scalar_select %p894, %s22, 1
        %p896 = scmp.lt.s32.totalorder %s23, 0
        %s897 = scalar_select %p896, %s23, 0
        %s898 = sadd.s32 %s897, %s895
        %s899 = smul.addr %s898, 4
        %s900 = scalar_lea.vmem %s3, %s899
      $region52: #{_lambda_.26} parent=47 // pred_fallthru
        _
    $region48: #{_lambda_.26} parent=5 // pred_fallthru
      _
  $region6: #{_lambda_.26} parent=0 // loop_footer
    %s13 = sadd.s32 1, %s9
  $region7: #{_lambda_.26} parent=0 // loop_footer_branch
    %8 = sbr.rel target = $region3
  $region8: #{_lambda_.26} parent=0 // loop_exit
    _

// kernel: _lambda_.37
$region0: #{_lambda_.37}
  #allocation0 [shape = 'u32[]', space=smem, size = 0x4, offset = 0x4, fixed_abs, tag = 'smem constant byte address 0x4 - core index']
  #allocation1 [shape = 'u32[144,128]{1,0:T(1,128)}', space=vmem, size = 0x12000, scoped, tag = 'internal scratch']
  #allocation2 [shape = 'f32[16,64]{1,0:T(8,128)}', space=vmem, size = 0x2000, scoped, tag = 'scratch operand']
  %s0 = inlined_call_operand.vmem [shape: bf16[16,32], index: 0, kind: input, shape index: {}]
  %s1 = inlined_call_operand.vmem [shape: bf16[32,64], index: 1, kind: input, shape index: {}]
  %s2 = inlined_call_operand.vmem [shape: f32[1,64], index: 2, kind: input, shape index: {}]
  %s3 = inlined_call_operand.vmem [shape: bf16[16,64], index: 3, kind: output, shape index: {}]
  %s4 = sld [smem:[#allocation0]]
  $region30: #{_lambda_.37} parent=0
    _
  %s6 = ssub.s32 1, %s4
  %s7 = scalar_select 0, %s6, %s4
  // Predicated region
  $region2: #{_lambda_.37} parent=0 // pred_check
    _
  $region3: #{_lambda_.37} parent=0 // pred_check_branch
    %9 = sbr.rel (0) target = $region5
  $region4: #{_lambda_.37} parent=0 // pred_region
    _
  $region5: #{_lambda_.37} parent=0 // pred_fallthru
    _
  // Predicated region
  $region6: #{_lambda_.37} parent=0 // pred_check
    _
  $region7: #{_lambda_.37} parent=0 // pred_check_branch
    %11 = sbr.rel (0) target = $region9
  $region8: #{_lambda_.37} parent=0 // pred_region
    _
  $region9: #{_lambda_.37} parent=0 // pred_fallthru
    _
  // Predicated region
  $region10: #{_lambda_.37} parent=0 // pred_check
    _
  $region11: #{_lambda_.37} parent=0 // pred_check_branch
    %13 = sbr.rel (0) target = $region13
  $region12: #{_lambda_.37} parent=0 // pred_region
    _
  $region13: #{_lambda_.37} parent=0 // pred_fallthru
    _
  %p15 = scmp.eq.s32.totalorder 0, 0
  // Predicated region
  $region14: #{_lambda_.37} parent=0 // pred_check
    %p16 = pneg %p15
  $region15: #{_lambda_.37} parent=0 // pred_check_branch
    %18 = sbr.rel (%p16) target = $region17
  $region16: #{_lambda_.37} parent=0 // pred_region
    %vm19 = vcmask 523264
    %20 = vst.msk [vmem:[#allocation2] sm:$0xff] %vm19, 0.0
    %21 = vst.msk [vmem:[#allocation2 + $0x8] sm:$0xff] %vm19, 0.0
  $region17: #{_lambda_.37} parent=0 // pred_fallthru
    _
  %v22 = vld [vmem:[#allocation2] sm:$0xff]
  %v23 = vld [vmem:[#allocation2 + $0x8] sm:$0xff]
  %v24 = vld [vmem:[%s0] sm:$0xf]
  %v25 = vld [vmem:[%s0 + $0x4] sm:$0xf]
  %v26 = vld [vmem:[%s1] sm:$0xf]
  %v27 = vld [vmem:[%s1 + $0x4] sm:$0xf]
  %v28 = vld [vmem:[%s1 + $0x8] sm:$0xf]
  %v29 = vld [vmem:[%s1 + $0xc] sm:$0xf]
  %v32 = vunpack.c.l.b16 %v24
  %v33 = vunpack.c.l.b16 %v25
  %v34 = vpack.c.b16 %v33, %v32
  %v39 = vunpack.c.l.b16 %v26
  %v40 = vunpack.c.l.b16 %v27
  %v41 = vunpack.c.l.b16 %v28
  %v42 = vunpack.c.l.b16 %v29
  %v43 = vpack.c.b16 %v40, %v39
  %v44 = vpack.c.b16 %v42, %v41
  %vm47 = vcmask 261120
  %v49 = vsel %vm47, %v34, 0
  %51 = vmatprep.subr.bf16.mxu0 0
  %52 = vmatpush1.bf16.msra.mxu0 %v43
  %53 = vmatprep.subr.bf16.mxu0 0
  %54 = vmatpush1.bf16.msra.mxu0 %v44
  %55 = vmatprep.subr.bf16.mxu0 0
  %56 = vmatpush1.bf16.msra.mxu0 0
  %57 = vmatprep.subr.bf16.mxu0 0
  %58 = vmatpush1.bf16.msra.mxu0 0
  %59 = vmatprep.subr.bf16.mxu0 0
  %60 = vmatpush1.bf16.msra.mxu0 0
  %61 = vmatprep.subr.bf16.mxu0 0
  %62 = vmatpush1.bf16.msra.mxu0 0
  %63 = vmatprep.subr.bf16.mxu0 0
  %64 = vmatpush1.bf16.msra.mxu0 0
  %65 = vmatprep.subr.bf16.mxu0 0
  %66 = vmatpush1.bf16.msra.mxu0 0
  %67 = vmatprep.subr.bf16.mxu0 0
  %68 = vmatpush1.bf16.msra.mxu0 0
  %69 = vmatprep.subr.bf16.mxu0 0
  %70 = vmatpush1.bf16.msra.mxu0 0
  %71 = vmatprep.subr.bf16.mxu0 0
  %72 = vmatpush1.bf16.msra.mxu0 0
  %73 = vmatprep.subr.bf16.mxu0 0
  %74 = vmatpush1.bf16.msra.mxu0 0
  %75 = vmatprep.subr.bf16.mxu0 0
  %76 = vmatpush1.bf16.msra.mxu0 0
  %77 = vmatprep.subr.bf16.mxu0 0
  %78 = vmatpush1.bf16.msra.mxu0 0
  %79 = vmatprep.subr.bf16.mxu0 0
  %80 = vmatpush1.bf16.msra.mxu0 0
  %81 = vmatprep.subr.bf16.mxu0 0
  %82 = vmatpush1.bf16.msra.mxu0 0
  %83 = vmatprep.mubr.bf16.mxu0 0
  %84 = vmatmul.mubr.bf16.gmra.mrb[0].mxu0 %v49
  %v85 = vpop.f32.mrb[0].mxu0
  %v86 = vadd.f32 0.0, %v85
  %v87 = vpop.f32.mrb[0].mxu0
  %v88 = vpop.f32.mrb[0].mxu0
  %v89 = vadd.f32 0.0, %v88
  %v90 = vpop.f32.mrb[0].mxu0
  %91 = vdwg.mxu0
  %v92 = vadd.f32 %v22, %v86
  %v93 = vadd.f32 %v23, %v89
  %vm94 = vcmask 523264
  %95 = vst.msk [vmem:[#allocation2] sm:$0xff] %vm94, %v92
  %96 = vst.msk [vmem:[#allocation2 + $0x8] sm:$0xff] %vm94, %v93
  // Predicated region
  $region18: #{_lambda_.37} parent=0 // pred_check
    %p97 = pneg %p15
  $region19: #{_lambda_.37} parent=0 // pred_check_branch
    %99 = sbr.rel (%p97) target = $region21
  $region20: #{_lambda_.37} parent=0 // pred_region
    %v100 = vld [vmem:[#allocation2] sm:$0xff]
    %v101 = vld [vmem:[#allocation2 + $0x8] sm:$0xff]
    %v102 = vld [vmem:[%s2] sm:$0x1]
    %v104 = vlaneseq
    %v105 = vshrl.u32 %v104, 7
    %v106 = vsub.s32 0, %v105
    %v107 = vrot.slane %v102, %v106
    %v109 = vadd.f32 %v100, %v107
    %v110 = vadd.f32 %v101, %v107
    %v111 = vpack.c.bf16 %v110, %v109
    %v113 = vunpack.c.l.b16 %v111
    %v114 = vunpack.c.h.b16 %v111
    %v115 = vpack.c.b16 %v113, %v113
    %v116 = vpack.c.b16 %v114, %v114
    %vm119 = vcmask 519168
    %120 = vst.msk [vmem:[%s3] sm:$0xf] %vm119, %v115
    %121 = vst.msk [vmem:[%s3 + $0x4] sm:$0xf] %vm119, %v116
  $region21: #{_lambda_.37} parent=0 // pred_fallthru
    _
  // Predicated region
  $region22: #{_lambda_.37} parent=0 // pred_check
    _
  $region23: #{_lambda_.37} parent=0 // pred_check_branch
    %123 = sbr.rel (0) target = $region25
  $region24: #{_lambda_.37} parent=0 // pred_region
    _
  $region25: #{_lambda_.37} parent=0 // pred_fallthru
    _
  // Predicated region
  $region26: #{_lambda_.37} parent=0 // pred_check
    _
  $region27: #{_lambda_.37} parent=0 // pred_check_branch
    %125 = sbr.rel (0) target = $region29
  $region28: #{_lambda_.37} parent=0 // pred_region
    _
  $region29: #{_lambda_.37} parent=0 // pred_fallthru
    _

// kernel: _lambda_.49
$region0: #{_lambda_.49}
  #allocation0 [shape = 'u32[]', space=smem, size = 0x4, offset = 0x4, fixed_abs, tag = 'smem constant byte address 0x4 - core index']
  #allocation1 [shape = 'u32[144,128]{1,0:T(1,128)}', space=vmem, size = 0x12000, scoped, tag = 'internal scratch']
  #allocation2 [shape = 'f32[16,256]{1,0:T(8,128)}', space=vmem, size = 0x4000, scoped, tag = 'scratch operand']
  %s0 = inlined_call_operand.vmem [shape: bf16[16,32], index: 0, kind: input, shape index: {}]
  %s1 = inlined_call_operand.vmem [shape: bf16[32,256], index: 1, kind: input, shape index: {}]
  %s2 = inlined_call_operand.vmem [shape: f32[1,256], index: 2, kind: input, shape index: {}]
  %s3 = inlined_call_operand.vmem [shape: f32[16,256], index: 3, kind: output, shape index: {}]
  %s4 = sld [smem:[#allocation0]]
  $region30: #{_lambda_.49} parent=0
    _
  %s6 = ssub.s32 1, %s4
  %s7 = scalar_select 0, %s6, %s4
  // Predicated region
  $region2: #{_lambda_.49} parent=0 // pred_check
    _
  $region3: #{_lambda_.49} parent=0 // pred_check_branch
    %9 = sbr.rel (0) target = $region5
  $region4: #{_lambda_.49} parent=0 // pred_region
    _
  $region5: #{_lambda_.49} parent=0 // pred_fallthru
    _
  // Predicated region
  $region6: #{_lambda_.49} parent=0 // pred_check
    _
  $region7: #{_lambda_.49} parent=0 // pred_check_branch
    %11 = sbr.rel (0) target = $region9
  $region8: #{_lambda_.49} parent=0 // pred_region
    _
  $region9: #{_lambda_.49} parent=0 // pred_fallthru
    _
  // Predicated region
  $region10: #{_lambda_.49} parent=0 // pred_check
    _
  $region11: #{_lambda_.49} parent=0 // pred_check_branch
    %13 = sbr.rel (0) target = $region13
  $region12: #{_lambda_.49} parent=0 // pred_region
    _
  $region13: #{_lambda_.49} parent=0 // pred_fallthru
    _
  %p15 = scmp.eq.s32.totalorder 0, 0
  // Predicated region
  $region14: #{_lambda_.49} parent=0 // pred_check
    %p16 = pneg %p15
  $region15: #{_lambda_.49} parent=0 // pred_check_branch
    %18 = sbr.rel (%p16) target = $region17
  $region16: #{_lambda_.49} parent=0 // pred_region
    %19 = vst [vmem:[#allocation2] sm:$0xff] 0.0
    %20 = vst [vmem:[#allocation2 + $0x8] sm:$0xff] 0.0
    %21 = vst [vmem:[#allocation2 + $0x10] sm:$0xff] 0.0
    %22 = vst [vmem:[#allocation2 + $0x18] sm:$0xff] 0.0
  $region17: #{_lambda_.49} parent=0 // pred_fallthru
    _
  %v23 = vld [vmem:[#allocation2] sm:$0xff]
  %v24 = vld [vmem:[#allocation2 + $0x8] sm:$0xff]
  %v25 = vld [vmem:[#allocation2 + $0x10] sm:$0xff]
  %v26 = vld [vmem:[#allocation2 + $0x18] sm:$0xff]
  %v27 = vld [vmem:[%s0] sm:$0xf]
  %v28 = vld [vmem:[%s0 + $0x4] sm:$0xf]
  %v29 = vld [vmem:[%s1] sm:$0xff]
  %v30 = vld [vmem:[%s1 + $0x8] sm:$0xff]
  %v31 = vld [vmem:[%s1 + $0x10] sm:$0xff]
  %v32 = vld [vmem:[%s1 + $0x18] sm:$0xff]
  %v35 = vunpack.c.l.b16 %v27
  %v36 = vunpack.c.l.b16 %v28
  %v37 = vpack.c.b16 %v36, %v35
  %v42 = vunpack.c.l.b16 %v29
  %v43 = vunpack.c.h.b16 %v29
  %v44 = vunpack.c.l.b16 %v30
  %v45 = vunpack.c.h.b16 %v30
  %v46 = vunpack.c.l.b16 %v31
  %v47 = vunpack.c.h.b16 %v31
  %v48 = vunpack.c.l.b16 %v32
  %v49 = vunpack.c.h.b16 %v32
  %v50 = vpack.c.b16 %v44, %v42
  %v51 = vpack.c.b16 %v45, %v43
  %v52 = vpack.c.b16 %v48, %v46
  %v53 = vpack.c.b16 %v49, %v47
  %vm58 = vcmask 261120
  %v60 = vsel %vm58, %v37, 0
  %62 = vmatprep.subr.bf16.mxu0 %v51
  %63 = vmatpush1.bf16.msra.mxu0 %v50
  %64 = vmatprep.subr.bf16.mxu0 %v53
  %65 = vmatpush1.bf16.msra.mxu0 %v52
  %66 = vmatprep.subr.bf16.mxu0 0
  %67 = vmatpush1.bf16.msra.mxu0 0
  %68 = vmatprep.subr.bf16.mxu0 0
  %69 = vmatpush1.bf16.msra.mxu0 0
  %70 = vmatprep.subr.bf16.mxu0 0
  %71 = vmatpush1.bf16.msra.mxu0 0
  %72 = vmatprep.subr.bf16.mxu0 0
  %73 = vmatpush1.bf16.msra.mxu0 0
  %74 = vmatprep.subr.bf16.mxu0 0
  %75 = vmatpush1.bf16.msra.mxu0 0
  %76 = vmatprep.subr.bf16.mxu0 0
  %77 = vmatpush1.bf16.msra.mxu0 0
  %78 = vmatprep.subr.bf16.mxu0 0
  %79 = vmatpush1.bf16.msra.mxu0 0
  %80 = vmatprep.subr.bf16.mxu0 0
  %81 = vmatpush1.bf16.msra.mxu0 0
  %82 = vmatprep.subr.bf16.mxu0 0
  %83 = vmatpush1.bf16.msra.mxu0 0
  %84 = vmatprep.subr.bf16.mxu0 0
  %85 = vmatpush1.bf16.msra.mxu0 0
  %86 = vmatprep.subr.bf16.mxu0 0
  %87 = vmatpush1.bf16.msra.mxu0 0
  %88 = vmatprep.subr.bf16.mxu0 0
  %89 = vmatpush1.bf16.msra.mxu0 0
  %90 = vmatprep.subr.bf16.mxu0 0
  %91 = vmatpush1.bf16.msra.mxu0 0
  %92 = vmatprep.subr.bf16.mxu0 0
  %93 = vmatpush1.bf16.msra.mxu0 0
  %94 = vmatprep.mubr.bf16.mxu0 0
  %95 = vmatmul.mubr.bf16.gmra.mrb[0].mxu0 %v60
  %v96 = vpop.f32.mrb[0].mxu0
  %v97 = vadd.f32 0.0, %v96
  %v98 = vpop.f32.mrb[0].mxu0
  %v99 = vadd.f32 0.0, %v98
  %v100 = vpop.f32.mrb[0].mxu0
  %v101 = vadd.f32 0.0, %v100
  %v102 = vpop.f32.mrb[0].mxu0
  %v103 = vadd.f32 0.0, %v102
  %104 = vdwg.mxu0
  %v105 = vadd.f32 %v23, %v97
  %v106 = vadd.f32 %v24, %v99
  %v107 = vadd.f32 %v25, %v101
  %v108 = vadd.f32 %v26, %v103
  %109 = vst [vmem:[#allocation2] sm:$0xff] %v105
  %110 = vst [vmem:[#allocation2 + $0x8] sm:$0xff] %v106
  %111 = vst [vmem:[#allocation2 + $0x10] sm:$0xff] %v107
  %112 = vst [vmem:[#allocation2 + $0x18] sm:$0xff] %v108
  // Predicated region
  $region18: #{_lambda_.49} parent=0 // pred_check
    %p113 = pneg %p15
  $region19: #{_lambda_.49} parent=0 // pred_check_branch
    %115 = sbr.rel (%p113) target = $region21
  $region20: #{_lambda_.49} parent=0 // pred_region
    %v116 = vld [vmem:[#allocation2] sm:$0xff]
    %v117 = vld [vmem:[#allocation2 + $0x8] sm:$0xff]
    %v118 = vld [vmem:[#allocation2 + $0x10] sm:$0xff]
    %v119 = vld [vmem:[#allocation2 + $0x18] sm:$0xff]
    %v120 = vld [vmem:[%s2] sm:$0x3]
    %v122 = vlaneseq
    %v123 = vshrl.u32 %v122, 7
    %v124 = vsub.s32 0, %v123
    %v125 = vrot.slane %v120, %v124
    %v126 = vlaneseq
    %v127 = vshrl.u32 %v126, 7
    %v128 = vsub.s32 1, %v127
    %v129 = vrot.slane %v120, %v128
    %v132 = vadd.f32 %v116, %v125
    %v133 = vadd.f32 %v117, %v129
    %v134 = vadd.f32 %v118, %v125
    %v135 = vadd.f32 %v119, %v129
    %136 = vst [vmem:[%s3] sm:$0xff] %v132
    %137 = vst [vmem:[%s3 + $0x8] sm:$0xff] %v133
    %138 = vst [vmem:[%s3 + $0x10] sm:$0xff] %v134
    %139 = vst [vmem:[%s3 + $0x18] sm:$0xff] %v135
  $region21: #{_lambda_.49} parent=0 // pred_fallthru
    _
  // Predicated region
  $region22: #{_lambda_.49} parent=0 // pred_check
    _
  $region23: #{_lambda_.49} parent=0 // pred_check_branch
    %141 = sbr.rel (0) target = $region25
  $region24: #{_lambda_.49} parent=0 // pred_region
    _
  $region25: #{_lambda_.49} parent=0 // pred_fallthru
    _
  // Predicated region
  $region26: #{_lambda_.49} parent=0 // pred_check
    _
  $region27: #{_lambda_.49} parent=0 // pred_check_branch
    %143 = sbr.rel (0) target = $region29
  $region28: #{_lambda_.49} parent=0 // pred_region
    _
  $region29: #{_lambda_.49} parent=0 // pred_fallthru
    _

</llo_original>
